<compile_context>
chip_gen: v6e
topology: v6e:2x2x1
jax: 0.10.0
libtpu: 0.0.40
codegen_flags: <defaults>
</compile_context>

<pallas_src>
import math

import jax
import jax.numpy as jnp
import numpy as np
from jax.experimental import pallas as pl
from jax.experimental.pallas import tpu as pltpu

# ----------------------------- model config ---------------------------------
B = 2          # batch size
L = 16         # q_len (sequence length)
D_MODEL = 32   # d_model
N_HEADS = 4
DK = D_MODEL // N_HEADS
DV = D_MODEL // N_HEADS
D_FF = 64
N_LAYERS = 2
SCALE = float(DK) ** -0.5
BN_EPS = 1e-5


def _gelu_tanh(x):
    # tanh-approximate GELU; tanh lowers to the EUP slot (free vs VALU).
    # Max abs deviation from exact erf GELU is ~3e-3, inside the 2e-2 test tol.
    c = math.sqrt(2.0 / math.pi)
    return 0.5 * x * (1.0 + jnp.tanh(c * (x + 0.044715 * x * x * x)))


def _batchnorm(x2d, gamma, beta):
    # x2d: (B*L, D) f32.  BatchNorm1d(d_model) over the flattened (batch, seq)
    # axis, biased variance, train-mode statistics.
    # mean and E[x^2] are produced by a SINGLE MXU reduce (ones-row matmul over
    # [x | x*x]) instead of two XLU sublane reductions; var = E[x^2] - mean^2
    # (mild cancellation, fine in f32 at these activation scales).
    n = x2d.shape[0]
    xx = jnp.concatenate([x2d, x2d * x2d], axis=-1)                  # (N, 2D)
    sums = jnp.dot(jnp.ones((1, n), jnp.float32), xx,
                   preferred_element_type=jnp.float32)               # (1, 2D)
    inv_n = 1.0 / n
    mean = sums[:, :D_MODEL] * inv_n
    ex2 = sums[:, D_MODEL:] * inv_n
    var = ex2 - mean * mean
    return (x2d - mean) * jax.lax.rsqrt(var + BN_EPS) * gamma + beta


# ------------------------------ Pallas kernel --------------------------------
def tst_encoder_kernel(x_ref,
                       wqkv_ref, bqkv_ref,        # (NL, D, 3D) bf16, (NL, 1, 3D) f32
                       wo_ref, bo_ref,            # (NL, D, D) bf16,  (NL, 1, D) f32
                       g1_ref, be1_ref,           # (NL, 1, D) f32
                       w1_ref, bf1_ref,           # (NL, D, D_FF) bf16, (NL, 1, D_FF) f32
                       w2_ref, bf2_ref,           # (NL, D_FF, D) bf16, (NL, 1, D) f32
                       g2_ref, be2_ref,           # (NL, 1, D) f32
                       out_ref):
    x = x_ref[...].astype(jnp.float32)             # (B*L, D)

    # TODO(synk): key_padding_mask / attn_mask (both None by default) not implemented.
    for l in range(N_LAYERS):                      # static unroll over layers
        # ---- fused QKV projection (scale pre-folded into the Q columns) ----
        qkv = jnp.dot(x.astype(jnp.bfloat16), wqkv_ref[l],
                      preferred_element_type=jnp.float32) + bqkv_ref[l]   # (B*L, 3D) f32

        # ---- one relayout to head-batched (H*B, L, DK); batch index = h*B + b ----
        def heads(c0):
            cols = [qkv[:, c0 + h * DK: c0 + (h + 1) * DK] for h in range(N_HEADS)]
            return jnp.concatenate(cols, axis=0).reshape(N_HEADS * B, L, DK)

        q = heads(0)                               # (H*B, L, DK) f32 (scale folded)
        k = heads(D_MODEL)
        v = heads(2 * D_MODEL)

        # ---- all-heads scaled dot-product attention: 2 batched dot_generals ----
        s = jnp.einsum('nqd,nkd->nqk', q, k,
                       preferred_element_type=jnp.float32)                # (H*B, L, L)
        s = s - jnp.max(s, axis=-1, keepdims=True)
        p = jnp.exp(s)
        p = p * pl.reciprocal(jnp.sum(p, axis=-1, keepdims=True), approx=True)
        o = jnp.einsum('nqk,nkd->nqd', p, v,
                       preferred_element_type=jnp.float32)                # (H*B, L, DV)

        # back to (B*L, H*DV): merge (B,L) rows, concat heads along lanes
        o2 = o.reshape(N_HEADS, B * L, DV)
        attn = jnp.concatenate([o2[h] for h in range(N_HEADS)], axis=-1)  # (B*L, D)

        # ---- output projection + residual + BatchNorm ----
        proj = jnp.dot(attn.astype(jnp.bfloat16), wo_ref[l],
                       preferred_element_type=jnp.float32) + bo_ref[l]
        y1 = _batchnorm(x + proj, g1_ref[l], be1_ref[l])

        # ---- feed-forward (Linear -> GELU -> Linear) + residual + BatchNorm ----
        h1 = jnp.dot(y1.astype(jnp.bfloat16), w1_ref[l],
                     preferred_element_type=jnp.float32) + bf1_ref[l]
        h1 = _gelu_tanh(h1)
        ff = jnp.dot(h1.astype(jnp.bfloat16), w2_ref[l],
                     preferred_element_type=jnp.float32) + bf2_ref[l]
        x = _batchnorm(y1 + ff, g2_ref[l], be2_ref[l])

    out_ref[...] = x


# -------------------- one-time weight preparation (hoisted) ------------------
def stack_layer_params(layer_params):
    """Stack per-layer weights along a leading (N_LAYERS, ...) axis, fuse Q/K/V,
    fold the attention scale into the Q columns, and cast matmul weights to bf16.
    Called ONCE at init — not in the per-call hot path."""
    def stack(fn, dtype=None):
        a = jnp.stack([fn(p) for p in layer_params], axis=0)
        return a.astype(dtype) if dtype is not None else a

    wqkv = stack(lambda p: jnp.concatenate([p['wq'] * SCALE, p['wk'], p['wv']], axis=1),
                 jnp.bfloat16)
    bqkv = stack(lambda p: jnp.concatenate([p['bq'] * SCALE, p['bk'], p['bv']], axis=1))
    wo = stack(lambda p: p['wo'], jnp.bfloat16);   bo = stack(lambda p: p['bo'])
    g1 = stack(lambda p: p['g1']);                 be1 = stack(lambda p: p['be1'])
    w1 = stack(lambda p: p['w1'], jnp.bfloat16);   bf1 = stack(lambda p: p['bf1'])
    w2 = stack(lambda p: p['w2'], jnp.bfloat16);   bf2 = stack(lambda p: p['bf2'])
    g2 = stack(lambda p: p['g2']);                 be2 = stack(lambda p: p['be2'])
    return (wqkv, bqkv, wo, bo, g1, be1, w1, bf1, w2, bf2, g2, be2)


@jax.jit
def tst_encoder_pallas(src, stacked_params):
    args = (src.reshape(B * L, D_MODEL),) + tuple(stacked_params)
    out2d = pl.pallas_call(
        tst_encoder_kernel,
        out_shape=jax.ShapeDtypeStruct((B * L, D_MODEL), jnp.float32),
        in_specs=[pl.BlockSpec(memory_space=pltpu.MemorySpace.VMEM)] * len(args),
        out_specs=pl.BlockSpec(memory_space=pltpu.MemorySpace.VMEM),
    )(*args)
    return out2d.reshape(B, L, D_MODEL)


# --------------------------- pure-JAX reference ------------------------------
def _ref_layer(x, p):
    hp = jax.lax.Precision.HIGHEST

    def lin(z, w, b):
        return jnp.einsum('bld,de->ble', z, w, precision=hp) + b

    q = lin(x, p['wq'], p['bq']).reshape(B, L, N_HEADS, DK).transpose(0, 2, 1, 3)
    k = lin(x, p['wk'], p['bk']).reshape(B, L, N_HEADS, DK).transpose(0, 2, 3, 1)
    v = lin(x, p['wv'], p['bv']).reshape(B, L, N_HEADS, DV).transpose(0, 2, 1, 3)
    s = jnp.einsum('bhqd,bhdk->bhqk', q, k, precision=hp) * SCALE
    a = jax.nn.softmax(s, axis=-1)
    o = jnp.einsum('bhqk,bhkd->bhqd', a, v, precision=hp)
    o = o.transpose(0, 2, 1, 3).reshape(B, L, N_HEADS * DV)
    o = jnp.einsum('blf,fd->bld', o, p['wo'], precision=hp) + p['bo']

    def bn(z, g, b):
        z2 = z.reshape(B * L, D_MODEL)
        m = jnp.mean(z2, axis=0, keepdims=True)
        var = jnp.mean((z2 - m) ** 2, axis=0, keepdims=True)
        return ((z2 - m) / jnp.sqrt(var + BN_EPS) * g + b).reshape(B, L, D_MODEL)

    r1 = bn(x + o, p['g1'], p['be1'])
    h1 = jnp.einsum('bld,df->blf', r1, p['w1'], precision=hp) + p['bf1']
    h1 = jax.nn.gelu(h1, approximate=False)
    ff = jnp.einsum('blf,fd->bld', h1, p['w2'], precision=hp) + p['bf2']
    return bn(r1 + ff, p['g2'], p['be2'])


def _ref_encoder(x, layer_params):
    out = x
    for p in layer_params:
        out = _ref_layer(out, p)
    return out


# ------------------------------ parameter init -------------------------------
def init_layer_params(key):
    ks = jax.random.split(key, 12)

    def linear(kw, kb, fan_in, fan_out):
        bound = 1.0 / math.sqrt(fan_in)
        w = jax.random.uniform(kw, (fan_in, fan_out), jnp.float32, -bound, bound)
        b = jax.random.uniform(kb, (1, fan_out), jnp.float32, -bound, bound)
        return w, b

    wq, bq = linear(ks[0], ks[1], D_MODEL, N_HEADS * DK)
    wk, bk = linear(ks[2], ks[3], D_MODEL, N_HEADS * DK)
    wv, bv = linear(ks[4], ks[5], D_MODEL, N_HEADS * DV)
    wo, bo = linear(ks[6], ks[7], N_HEADS * DV, D_MODEL)
    w1, bf1 = linear(ks[8], ks[9], D_MODEL, D_FF)
    w2, bf2 = linear(ks[10], ks[11], D_FF, D_MODEL)
    return dict(
        wq=wq, bq=bq, wk=wk, bk=bk, wv=wv, bv=bv, wo=wo, bo=bo,
        g1=jnp.ones((1, D_MODEL), jnp.float32), be1=jnp.zeros((1, D_MODEL), jnp.float32),
        w1=w1, bf1=bf1, w2=w2, bf2=bf2,
        g2=jnp.ones((1, D_MODEL), jnp.float32), be2=jnp.zeros((1, D_MODEL), jnp.float32),
    )


if __name__ == "__main__":
    root = jax.random.PRNGKey(0)
    k_src, *k_layers = jax.random.split(root, 1 + N_LAYERS)

    src = jax.random.normal(k_src, (B, L, D_MODEL), jnp.float32)
    layer_params = [init_layer_params(k) for k in k_layers]

    stacked = stack_layer_params(layer_params)      # one-time weight prep
    out = tst_encoder_pallas(src, stacked)
    out = jax.block_until_ready(out)

    ref = jax.block_until_ready(_ref_encoder(src, layer_params))
    np.testing.assert_allclose(np.asarray(out), np.asarray(ref), rtol=2e-2, atol=2e-2)

    assert out.shape == (B, L, D_MODEL)
    print("KERNEL_OK")
</pallas_src>

<mosaic_0001>
module attributes {stable_mosaic.version = 11 : i64} {
  func.func @tst_encoder_kernel(%arg0: memref<32x32xf32, #tpu.memory_space<vmem>>, %arg1: memref<2x32x96xbf16, #tpu.memory_space<vmem>>, %arg2: memref<2x1x96xf32, #tpu.memory_space<vmem>>, %arg3: memref<2x32x32xbf16, #tpu.memory_space<vmem>>, %arg4: memref<2x1x32xf32, #tpu.memory_space<vmem>>, %arg5: memref<2x1x32xf32, #tpu.memory_space<vmem>>, %arg6: memref<2x1x32xf32, #tpu.memory_space<vmem>>, %arg7: memref<2x32x64xbf16, #tpu.memory_space<vmem>>, %arg8: memref<2x1x64xf32, #tpu.memory_space<vmem>>, %arg9: memref<2x64x32xbf16, #tpu.memory_space<vmem>>, %arg10: memref<2x1x32xf32, #tpu.memory_space<vmem>>, %arg11: memref<2x1x32xf32, #tpu.memory_space<vmem>>, %arg12: memref<2x1x32xf32, #tpu.memory_space<vmem>>, %arg13: memref<32x32xf32, #tpu.memory_space<vmem>>) attributes {dimension_semantics = [], scalar_prefetch = 0 : i64, scratch_operands = 0 : i64, tpu.core_type = #tpu.core_type<tc>} {
    %c0 = arith.constant 0 : index
    %c0_0 = arith.constant 0 : index
    %0 = vector.load %arg0[%c0, %c0_0] : memref<32x32xf32, #tpu.memory_space<vmem>>, vector<32x32xf32>
    %1 = arith.truncf %0 : vector<32x32xf32> to vector<32x32xbf16>
    %c0_1 = arith.constant 0 : index
    %c0_2 = arith.constant 0 : index
    %c0_3 = arith.constant 0 : index
    %2 = vector.load %arg1[%c0_1, %c0_2, %c0_3] : memref<2x32x96xbf16, #tpu.memory_space<vmem>>, vector<1x32x96xbf16>
    %3 = vector.shape_cast %2 : vector<1x32x96xbf16> to vector<32x96xbf16>
    %cst = arith.constant dense<0.000000e+00> : vector<32x96xf32>
    %4 = tpu.matmul %1, %3, %cst {dimension_numbers = #tpu.dot_dimension_numbers<[1], [0], [0], [1], [0, 0, 1, 1], [], []>} : vector<32x32xbf16>, vector<32x96xbf16>, vector<32x96xf32> -> vector<32x96xf32>
    %c0_4 = arith.constant 0 : index
    %c0_5 = arith.constant 0 : index
    %c0_6 = arith.constant 0 : index
    %5 = vector.load %arg2[%c0_4, %c0_5, %c0_6] : memref<2x1x96xf32, #tpu.memory_space<vmem>>, vector<1x1x96xf32>
    %6 = vector.shape_cast %5 : vector<1x1x96xf32> to vector<1x96xf32>
    %7 = vector.broadcast %6 : vector<1x96xf32> to vector<32x96xf32>
    %8 = arith.addf %4, %7 : vector<32x96xf32>
    %9 = vector.extract_strided_slice %8 {offsets = [0, 0], sizes = [32, 8], strides = [1, 1]} : vector<32x96xf32> to vector<32x8xf32>
    %10 = vector.extract_strided_slice %8 {offsets = [0, 8], sizes = [32, 8], strides = [1, 1]} : vector<32x96xf32> to vector<32x8xf32>
    %11 = vector.extract_strided_slice %8 {offsets = [0, 16], sizes = [32, 8], strides = [1, 1]} : vector<32x96xf32> to vector<32x8xf32>
    %12 = vector.extract_strided_slice %8 {offsets = [0, 24], sizes = [32, 8], strides = [1, 1]} : vector<32x96xf32> to vector<32x8xf32>
    %13 = tpu.concatenate %9, %10, %11, %12 in 0 : vector<32x8xf32>, vector<32x8xf32>, vector<32x8xf32>, vector<32x8xf32> -> vector<128x8xf32>
    %14 = vector.shape_cast %13 : vector<128x8xf32> to vector<8x16x8xf32>
    %15 = vector.extract_strided_slice %8 {offsets = [0, 32], sizes = [32, 8], strides = [1, 1]} : vector<32x96xf32> to vector<32x8xf32>
    %16 = vector.extract_strided_slice %8 {offsets = [0, 40], sizes = [32, 8], strides = [1, 1]} : vector<32x96xf32> to vector<32x8xf32>
    %17 = vector.extract_strided_slice %8 {offsets = [0, 48], sizes = [32, 8], strides = [1, 1]} : vector<32x96xf32> to vector<32x8xf32>
    %18 = vector.extract_strided_slice %8 {offsets = [0, 56], sizes = [32, 8], strides = [1, 1]} : vector<32x96xf32> to vector<32x8xf32>
    %19 = tpu.concatenate %15, %16, %17, %18 in 0 : vector<32x8xf32>, vector<32x8xf32>, vector<32x8xf32>, vector<32x8xf32> -> vector<128x8xf32>
    %20 = vector.shape_cast %19 : vector<128x8xf32> to vector<8x16x8xf32>
    %21 = vector.extract_strided_slice %8 {offsets = [0, 64], sizes = [32, 8], strides = [1, 1]} : vector<32x96xf32> to vector<32x8xf32>
    %22 = vector.extract_strided_slice %8 {offsets = [0, 72], sizes = [32, 8], strides = [1, 1]} : vector<32x96xf32> to vector<32x8xf32>
    %23 = vector.extract_strided_slice %8 {offsets = [0, 80], sizes = [32, 8], strides = [1, 1]} : vector<32x96xf32> to vector<32x8xf32>
    %24 = vector.extract_strided_slice %8 {offsets = [0, 88], sizes = [32, 8], strides = [1, 1]} : vector<32x96xf32> to vector<32x8xf32>
    %25 = tpu.concatenate %21, %22, %23, %24 in 0 : vector<32x8xf32>, vector<32x8xf32>, vector<32x8xf32>, vector<32x8xf32> -> vector<128x8xf32>
    %26 = vector.shape_cast %25 : vector<128x8xf32> to vector<8x16x8xf32>
    "tpu.trace_start"() <{level = 10 : i32, message = "nqd,nkd->nqk"}> : () -> ()
    %cst_7 = arith.constant dense<0.000000e+00> : vector<8x16x16xf32>
    %27 = tpu.matmul %14, %20, %cst_7 {dimension_numbers = #tpu.dot_dimension_numbers<[2], [2], [1], [1], [0, 0, 0, 1, 1, 1], [0], [0]>} : vector<8x16x8xf32>, vector<8x16x8xf32>, vector<8x16x16xf32> -> vector<8x16x16xf32>
    "tpu.trace_stop"() : () -> ()
    %cst_8 = arith.constant dense<0xFF800000> : vector<8x16xf32>
    %28 = vector.multi_reduction <maximumf>, %27, %cst_8 [2] : vector<8x16x16xf32> to vector<8x16xf32>
    %29 = vector.shape_cast %28 : vector<8x16xf32> to vector<8x16x1xf32>
    %30 = vector.broadcast %29 : vector<8x16x1xf32> to vector<8x16x16xf32>
    %31 = arith.subf %27, %30 : vector<8x16x16xf32>
    %32 = math.exp %31 : vector<8x16x16xf32>
    %cst_9 = arith.constant dense<0.000000e+00> : vector<8x16xf32>
    %33 = vector.multi_reduction <add>, %32, %cst_9 [2] : vector<8x16x16xf32> to vector<8x16xf32>
    %34 = vector.shape_cast %33 : vector<8x16xf32> to vector<8x16x1xf32>
    %35 = tpu.reciprocal %34 {approx = true} : vector<8x16x1xf32> -> vector<8x16x1xf32>
    %36 = vector.broadcast %35 : vector<8x16x1xf32> to vector<8x16x16xf32>
    %37 = arith.mulf %32, %36 : vector<8x16x16xf32>
    "tpu.trace_start"() <{level = 10 : i32, message = "nqk,nkd->nqd"}> : () -> ()
    %cst_10 = arith.constant dense<0.000000e+00> : vector<8x16x8xf32>
    %38 = tpu.matmul %37, %26, %cst_10 {dimension_numbers = #tpu.dot_dimension_numbers<[2], [1], [1], [2], [0, 0, 0, 1, 1, 2], [0], [0]>} : vector<8x16x16xf32>, vector<8x16x8xf32>, vector<8x16x8xf32> -> vector<8x16x8xf32>
    "tpu.trace_stop"() : () -> ()
    %39 = vector.shape_cast %38 : vector<8x16x8xf32> to vector<4x32x8xf32>
    %40 = vector.extract_strided_slice %39 {offsets = [0, 0, 0], sizes = [1, 32, 8], strides = [1, 1, 1]} : vector<4x32x8xf32> to vector<1x32x8xf32>
    %41 = vector.shape_cast %40 : vector<1x32x8xf32> to vector<32x8xf32>
    %42 = vector.extract_strided_slice %39 {offsets = [1, 0, 0], sizes = [1, 32, 8], strides = [1, 1, 1]} : vector<4x32x8xf32> to vector<1x32x8xf32>
    %43 = vector.shape_cast %42 : vector<1x32x8xf32> to vector<32x8xf32>
    %44 = vector.extract_strided_slice %39 {offsets = [2, 0, 0], sizes = [1, 32, 8], strides = [1, 1, 1]} : vector<4x32x8xf32> to vector<1x32x8xf32>
    %45 = vector.shape_cast %44 : vector<1x32x8xf32> to vector<32x8xf32>
    %46 = vector.extract_strided_slice %39 {offsets = [3, 0, 0], sizes = [1, 32, 8], strides = [1, 1, 1]} : vector<4x32x8xf32> to vector<1x32x8xf32>
    %47 = vector.shape_cast %46 : vector<1x32x8xf32> to vector<32x8xf32>
    %48 = tpu.concatenate %41, %43, %45, %47 in 1 : vector<32x8xf32>, vector<32x8xf32>, vector<32x8xf32>, vector<32x8xf32> -> vector<32x32xf32>
    %49 = arith.truncf %48 : vector<32x32xf32> to vector<32x32xbf16>
    %c0_11 = arith.constant 0 : index
    %c0_12 = arith.constant 0 : index
    %c0_13 = arith.constant 0 : index
    %50 = vector.load %arg3[%c0_11, %c0_12, %c0_13] : memref<2x32x32xbf16, #tpu.memory_space<vmem>>, vector<1x32x32xbf16>
    %51 = vector.shape_cast %50 : vector<1x32x32xbf16> to vector<32x32xbf16>
    %cst_14 = arith.constant dense<0.000000e+00> : vector<32x32xf32>
    %52 = tpu.matmul %49, %51, %cst_14 {dimension_numbers = #tpu.dot_dimension_numbers<[1], [0], [0], [1], [0, 0, 1, 1], [], []>} : vector<32x32xbf16>, vector<32x32xbf16>, vector<32x32xf32> -> vector<32x32xf32>
    %c0_15 = arith.constant 0 : index
    %c0_16 = arith.constant 0 : index
    %c0_17 = arith.constant 0 : index
    %53 = vector.load %arg4[%c0_15, %c0_16, %c0_17] : memref<2x1x32xf32, #tpu.memory_space<vmem>>, vector<1x1x32xf32>
    %54 = vector.shape_cast %53 : vector<1x1x32xf32> to vector<1x32xf32>
    %55 = vector.broadcast %54 : vector<1x32xf32> to vector<32x32xf32>
    %56 = arith.addf %52, %55 : vector<32x32xf32>
    %57 = arith.addf %0, %56 : vector<32x32xf32>
    %c0_18 = arith.constant 0 : index
    %c0_19 = arith.constant 0 : index
    %c0_20 = arith.constant 0 : index
    %58 = vector.load %arg5[%c0_18, %c0_19, %c0_20] : memref<2x1x32xf32, #tpu.memory_space<vmem>>, vector<1x1x32xf32>
    %59 = vector.shape_cast %58 : vector<1x1x32xf32> to vector<1x32xf32>
    %c0_21 = arith.constant 0 : index
    %c0_22 = arith.constant 0 : index
    %c0_23 = arith.constant 0 : index
    %60 = vector.load %arg6[%c0_21, %c0_22, %c0_23] : memref<2x1x32xf32, #tpu.memory_space<vmem>>, vector<1x1x32xf32>
    %61 = vector.shape_cast %60 : vector<1x1x32xf32> to vector<1x32xf32>
    %62 = arith.mulf %57, %57 : vector<32x32xf32>
    %63 = tpu.concatenate %57, %62 in 1 : vector<32x32xf32>, vector<32x32xf32> -> vector<32x64xf32>
    %cst_24 = arith.constant 1.000000e+00 : f32
    %64 = vector.broadcast %cst_24 : f32 to vector<1x32xf32>
    %cst_25 = arith.constant dense<0.000000e+00> : vector<1x64xf32>
    %65 = tpu.matmul %64, %63, %cst_25 {dimension_numbers = #tpu.dot_dimension_numbers<[1], [0], [0], [1], [0, 0, 1, 1], [], []>} : vector<1x32xf32>, vector<32x64xf32>, vector<1x64xf32> -> vector<1x64xf32>
    %66 = vector.extract_strided_slice %65 {offsets = [0, 0], sizes = [1, 32], strides = [1, 1]} : vector<1x64xf32> to vector<1x32xf32>
    %cst_26 = arith.constant 3.125000e-02 : f32
    %67 = vector.broadcast %cst_26 : f32 to vector<1x32xf32>
    %68 = arith.mulf %66, %67 : vector<1x32xf32>
    %69 = vector.extract_strided_slice %65 {offsets = [0, 32], sizes = [1, 32], strides = [1, 1]} : vector<1x64xf32> to vector<1x32xf32>
    %cst_27 = arith.constant 3.125000e-02 : f32
    %70 = vector.broadcast %cst_27 : f32 to vector<1x32xf32>
    %71 = arith.mulf %69, %70 : vector<1x32xf32>
    %72 = arith.mulf %68, %68 : vector<1x32xf32>
    %73 = arith.subf %71, %72 : vector<1x32xf32>
    %74 = vector.broadcast %68 : vector<1x32xf32> to vector<32x32xf32>
    %75 = arith.subf %57, %74 : vector<32x32xf32>
    %cst_28 = arith.constant 9.99999974E-6 : f32
    %76 = vector.broadcast %cst_28 : f32 to vector<1x32xf32>
    %77 = arith.addf %73, %76 : vector<1x32xf32>
    %78 = math.rsqrt %77 : vector<1x32xf32>
    %79 = vector.broadcast %78 : vector<1x32xf32> to vector<32x32xf32>
    %80 = arith.mulf %75, %79 : vector<32x32xf32>
    %81 = vector.broadcast %59 : vector<1x32xf32> to vector<32x32xf32>
    %82 = arith.mulf %80, %81 : vector<32x32xf32>
    %83 = vector.broadcast %61 : vector<1x32xf32> to vector<32x32xf32>
    %84 = arith.addf %82, %83 : vector<32x32xf32>
    %85 = arith.truncf %84 : vector<32x32xf32> to vector<32x32xbf16>
    %c0_29 = arith.constant 0 : index
    %c0_30 = arith.constant 0 : index
    %c0_31 = arith.constant 0 : index
    %86 = vector.load %arg7[%c0_29, %c0_30, %c0_31] : memref<2x32x64xbf16, #tpu.memory_space<vmem>>, vector<1x32x64xbf16>
    %87 = vector.shape_cast %86 : vector<1x32x64xbf16> to vector<32x64xbf16>
    %cst_32 = arith.constant dense<0.000000e+00> : vector<32x64xf32>
    %88 = tpu.matmul %85, %87, %cst_32 {dimension_numbers = #tpu.dot_dimension_numbers<[1], [0], [0], [1], [0, 0, 1, 1], [], []>} : vector<32x32xbf16>, vector<32x64xbf16>, vector<32x64xf32> -> vector<32x64xf32>
    %c0_33 = arith.constant 0 : index
    %c0_34 = arith.constant 0 : index
    %c0_35 = arith.constant 0 : index
    %89 = vector.load %arg8[%c0_33, %c0_34, %c0_35] : memref<2x1x64xf32, #tpu.memory_space<vmem>>, vector<1x1x64xf32>
    %90 = vector.shape_cast %89 : vector<1x1x64xf32> to vector<1x64xf32>
    %91 = vector.broadcast %90 : vector<1x64xf32> to vector<32x64xf32>
    %92 = arith.addf %88, %91 : vector<32x64xf32>
    %cst_36 = arith.constant 5.000000e-01 : f32
    %93 = vector.broadcast %cst_36 : f32 to vector<32x64xf32>
    %94 = arith.mulf %93, %92 : vector<32x64xf32>
    %cst_37 = arith.constant 4.471500e-02 : f32
    %95 = vector.broadcast %cst_37 : f32 to vector<32x64xf32>
    %96 = arith.mulf %95, %92 : vector<32x64xf32>
    %97 = arith.mulf %96, %92 : vector<32x64xf32>
    %98 = arith.mulf %97, %92 : vector<32x64xf32>
    %99 = arith.addf %92, %98 : vector<32x64xf32>
    %cst_38 = arith.constant 0.797884583 : f32
    %100 = vector.broadcast %cst_38 : f32 to vector<32x64xf32>
    %101 = arith.mulf %100, %99 : vector<32x64xf32>
    %102 = math.tanh %101 : vector<32x64xf32>
    %cst_39 = arith.constant 1.000000e+00 : f32
    %103 = vector.broadcast %cst_39 : f32 to vector<32x64xf32>
    %104 = arith.addf %103, %102 : vector<32x64xf32>
    %105 = arith.mulf %94, %104 : vector<32x64xf32>
    %106 = arith.truncf %105 : vector<32x64xf32> to vector<32x64xbf16>
    %c0_40 = arith.constant 0 : index
    %c0_41 = arith.constant 0 : index
    %c0_42 = arith.constant 0 : index
    %107 = vector.load %arg9[%c0_40, %c0_41, %c0_42] : memref<2x64x32xbf16, #tpu.memory_space<vmem>>, vector<1x64x32xbf16>
    %108 = vector.shape_cast %107 : vector<1x64x32xbf16> to vector<64x32xbf16>
    %cst_43 = arith.constant dense<0.000000e+00> : vector<32x32xf32>
    %109 = tpu.matmul %106, %108, %cst_43 {dimension_numbers = #tpu.dot_dimension_numbers<[1], [0], [0], [1], [0, 0, 1, 1], [], []>} : vector<32x64xbf16>, vector<64x32xbf16>, vector<32x32xf32> -> vector<32x32xf32>
    %c0_44 = arith.constant 0 : index
    %c0_45 = arith.constant 0 : index
    %c0_46 = arith.constant 0 : index
    %110 = vector.load %arg10[%c0_44, %c0_45, %c0_46] : memref<2x1x32xf32, #tpu.memory_space<vmem>>, vector<1x1x32xf32>
    %111 = vector.shape_cast %110 : vector<1x1x32xf32> to vector<1x32xf32>
    %112 = vector.broadcast %111 : vector<1x32xf32> to vector<32x32xf32>
    %113 = arith.addf %109, %112 : vector<32x32xf32>
    %114 = arith.addf %84, %113 : vector<32x32xf32>
    %c0_47 = arith.constant 0 : index
    %c0_48 = arith.constant 0 : index
    %c0_49 = arith.constant 0 : index
    %115 = vector.load %arg11[%c0_47, %c0_48, %c0_49] : memref<2x1x32xf32, #tpu.memory_space<vmem>>, vector<1x1x32xf32>
    %116 = vector.shape_cast %115 : vector<1x1x32xf32> to vector<1x32xf32>
    %c0_50 = arith.constant 0 : index
    %c0_51 = arith.constant 0 : index
    %c0_52 = arith.constant 0 : index
    %117 = vector.load %arg12[%c0_50, %c0_51, %c0_52] : memref<2x1x32xf32, #tpu.memory_space<vmem>>, vector<1x1x32xf32>
    %118 = vector.shape_cast %117 : vector<1x1x32xf32> to vector<1x32xf32>
    %119 = arith.mulf %114, %114 : vector<32x32xf32>
    %120 = tpu.concatenate %114, %119 in 1 : vector<32x32xf32>, vector<32x32xf32> -> vector<32x64xf32>
    %cst_53 = arith.constant 1.000000e+00 : f32
    %121 = vector.broadcast %cst_53 : f32 to vector<1x32xf32>
    %cst_54 = arith.constant dense<0.000000e+00> : vector<1x64xf32>
    %122 = tpu.matmul %121, %120, %cst_54 {dimension_numbers = #tpu.dot_dimension_numbers<[1], [0], [0], [1], [0, 0, 1, 1], [], []>} : vector<1x32xf32>, vector<32x64xf32>, vector<1x64xf32> -> vector<1x64xf32>
    %123 = vector.extract_strided_slice %122 {offsets = [0, 0], sizes = [1, 32], strides = [1, 1]} : vector<1x64xf32> to vector<1x32xf32>
    %cst_55 = arith.constant 3.125000e-02 : f32
    %124 = vector.broadcast %cst_55 : f32 to vector<1x32xf32>
    %125 = arith.mulf %123, %124 : vector<1x32xf32>
    %126 = vector.extract_strided_slice %122 {offsets = [0, 32], sizes = [1, 32], strides = [1, 1]} : vector<1x64xf32> to vector<1x32xf32>
    %cst_56 = arith.constant 3.125000e-02 : f32
    %127 = vector.broadcast %cst_56 : f32 to vector<1x32xf32>
    %128 = arith.mulf %126, %127 : vector<1x32xf32>
    %129 = arith.mulf %125, %125 : vector<1x32xf32>
    %130 = arith.subf %128, %129 : vector<1x32xf32>
    %131 = vector.broadcast %125 : vector<1x32xf32> to vector<32x32xf32>
    %132 = arith.subf %114, %131 : vector<32x32xf32>
    %cst_57 = arith.constant 9.99999974E-6 : f32
    %133 = vector.broadcast %cst_57 : f32 to vector<1x32xf32>
    %134 = arith.addf %130, %133 : vector<1x32xf32>
    %135 = math.rsqrt %134 : vector<1x32xf32>
    %136 = vector.broadcast %135 : vector<1x32xf32> to vector<32x32xf32>
    %137 = arith.mulf %132, %136 : vector<32x32xf32>
    %138 = vector.broadcast %116 : vector<1x32xf32> to vector<32x32xf32>
    %139 = arith.mulf %137, %138 : vector<32x32xf32>
    %140 = vector.broadcast %118 : vector<1x32xf32> to vector<32x32xf32>
    %141 = arith.addf %139, %140 : vector<32x32xf32>
    %142 = arith.truncf %141 : vector<32x32xf32> to vector<32x32xbf16>
    %c1 = arith.constant 1 : index
    %c0_58 = arith.constant 0 : index
    %c0_59 = arith.constant 0 : index
    %143 = vector.load %arg1[%c1, %c0_58, %c0_59] : memref<2x32x96xbf16, #tpu.memory_space<vmem>>, vector<1x32x96xbf16>
    %144 = vector.shape_cast %143 : vector<1x32x96xbf16> to vector<32x96xbf16>
    %cst_60 = arith.constant dense<0.000000e+00> : vector<32x96xf32>
    %145 = tpu.matmul %142, %144, %cst_60 {dimension_numbers = #tpu.dot_dimension_numbers<[1], [0], [0], [1], [0, 0, 1, 1], [], []>} : vector<32x32xbf16>, vector<32x96xbf16>, vector<32x96xf32> -> vector<32x96xf32>
    %c1_61 = arith.constant 1 : index
    %c0_62 = arith.constant 0 : index
    %c0_63 = arith.constant 0 : index
    %146 = vector.load %arg2[%c1_61, %c0_62, %c0_63] : memref<2x1x96xf32, #tpu.memory_space<vmem>>, vector<1x1x96xf32>
    %147 = vector.shape_cast %146 : vector<1x1x96xf32> to vector<1x96xf32>
    %148 = vector.broadcast %147 : vector<1x96xf32> to vector<32x96xf32>
    %149 = arith.addf %145, %148 : vector<32x96xf32>
    %150 = vector.extract_strided_slice %149 {offsets = [0, 0], sizes = [32, 8], strides = [1, 1]} : vector<32x96xf32> to vector<32x8xf32>
    %151 = vector.extract_strided_slice %149 {offsets = [0, 8], sizes = [32, 8], strides = [1, 1]} : vector<32x96xf32> to vector<32x8xf32>
    %152 = vector.extract_strided_slice %149 {offsets = [0, 16], sizes = [32, 8], strides = [1, 1]} : vector<32x96xf32> to vector<32x8xf32>
    %153 = vector.extract_strided_slice %149 {offsets = [0, 24], sizes = [32, 8], strides = [1, 1]} : vector<32x96xf32> to vector<32x8xf32>
    %154 = tpu.concatenate %150, %151, %152, %153 in 0 : vector<32x8xf32>, vector<32x8xf32>, vector<32x8xf32>, vector<32x8xf32> -> vector<128x8xf32>
    %155 = vector.shape_cast %154 : vector<128x8xf32> to vector<8x16x8xf32>
    %156 = vector.extract_strided_slice %149 {offsets = [0, 32], sizes = [32, 8], strides = [1, 1]} : vector<32x96xf32> to vector<32x8xf32>
    %157 = vector.extract_strided_slice %149 {offsets = [0, 40], sizes = [32, 8], strides = [1, 1]} : vector<32x96xf32> to vector<32x8xf32>
    %158 = vector.extract_strided_slice %149 {offsets = [0, 48], sizes = [32, 8], strides = [1, 1]} : vector<32x96xf32> to vector<32x8xf32>
    %159 = vector.extract_strided_slice %149 {offsets = [0, 56], sizes = [32, 8], strides = [1, 1]} : vector<32x96xf32> to vector<32x8xf32>
    %160 = tpu.concatenate %156, %157, %158, %159 in 0 : vector<32x8xf32>, vector<32x8xf32>, vector<32x8xf32>, vector<32x8xf32> -> vector<128x8xf32>
    %161 = vector.shape_cast %160 : vector<128x8xf32> to vector<8x16x8xf32>
    %162 = vector.extract_strided_slice %149 {offsets = [0, 64], sizes = [32, 8], strides = [1, 1]} : vector<32x96xf32> to vector<32x8xf32>
    %163 = vector.extract_strided_slice %149 {offsets = [0, 72], sizes = [32, 8], strides = [1, 1]} : vector<32x96xf32> to vector<32x8xf32>
    %164 = vector.extract_strided_slice %149 {offsets = [0, 80], sizes = [32, 8], strides = [1, 1]} : vector<32x96xf32> to vector<32x8xf32>
    %165 = vector.extract_strided_slice %149 {offsets = [0, 88], sizes = [32, 8], strides = [1, 1]} : vector<32x96xf32> to vector<32x8xf32>
    %166 = tpu.concatenate %162, %163, %164, %165 in 0 : vector<32x8xf32>, vector<32x8xf32>, vector<32x8xf32>, vector<32x8xf32> -> vector<128x8xf32>
    %167 = vector.shape_cast %166 : vector<128x8xf32> to vector<8x16x8xf32>
    "tpu.trace_start"() <{level = 10 : i32, message = "nqd,nkd->nqk"}> : () -> ()
    %cst_64 = arith.constant dense<0.000000e+00> : vector<8x16x16xf32>
    %168 = tpu.matmul %155, %161, %cst_64 {dimension_numbers = #tpu.dot_dimension_numbers<[2], [2], [1], [1], [0, 0, 0, 1, 1, 1], [0], [0]>} : vector<8x16x8xf32>, vector<8x16x8xf32>, vector<8x16x16xf32> -> vector<8x16x16xf32>
    "tpu.trace_stop"() : () -> ()
    %cst_65 = arith.constant dense<0xFF800000> : vector<8x16xf32>
    %169 = vector.multi_reduction <maximumf>, %168, %cst_65 [2] : vector<8x16x16xf32> to vector<8x16xf32>
    %170 = vector.shape_cast %169 : vector<8x16xf32> to vector<8x16x1xf32>
    %171 = vector.broadcast %170 : vector<8x16x1xf32> to vector<8x16x16xf32>
    %172 = arith.subf %168, %171 : vector<8x16x16xf32>
    %173 = math.exp %172 : vector<8x16x16xf32>
    %cst_66 = arith.constant dense<0.000000e+00> : vector<8x16xf32>
    %174 = vector.multi_reduction <add>, %173, %cst_66 [2] : vector<8x16x16xf32> to vector<8x16xf32>
    %175 = vector.shape_cast %174 : vector<8x16xf32> to vector<8x16x1xf32>
    %176 = tpu.reciprocal %175 {approx = true} : vector<8x16x1xf32> -> vector<8x16x1xf32>
    %177 = vector.broadcast %176 : vector<8x16x1xf32> to vector<8x16x16xf32>
    %178 = arith.mulf %173, %177 : vector<8x16x16xf32>
    "tpu.trace_start"() <{level = 10 : i32, message = "nqk,nkd->nqd"}> : () -> ()
    %cst_67 = arith.constant dense<0.000000e+00> : vector<8x16x8xf32>
    %179 = tpu.matmul %178, %167, %cst_67 {dimension_numbers = #tpu.dot_dimension_numbers<[2], [1], [1], [2], [0, 0, 0, 1, 1, 2], [0], [0]>} : vector<8x16x16xf32>, vector<8x16x8xf32>, vector<8x16x8xf32> -> vector<8x16x8xf32>
    "tpu.trace_stop"() : () -> ()
    %180 = vector.shape_cast %179 : vector<8x16x8xf32> to vector<4x32x8xf32>
    %181 = vector.extract_strided_slice %180 {offsets = [0, 0, 0], sizes = [1, 32, 8], strides = [1, 1, 1]} : vector<4x32x8xf32> to vector<1x32x8xf32>
    %182 = vector.shape_cast %181 : vector<1x32x8xf32> to vector<32x8xf32>
    %183 = vector.extract_strided_slice %180 {offsets = [1, 0, 0], sizes = [1, 32, 8], strides = [1, 1, 1]} : vector<4x32x8xf32> to vector<1x32x8xf32>
    %184 = vector.shape_cast %183 : vector<1x32x8xf32> to vector<32x8xf32>
    %185 = vector.extract_strided_slice %180 {offsets = [2, 0, 0], sizes = [1, 32, 8], strides = [1, 1, 1]} : vector<4x32x8xf32> to vector<1x32x8xf32>
    %186 = vector.shape_cast %185 : vector<1x32x8xf32> to vector<32x8xf32>
    %187 = vector.extract_strided_slice %180 {offsets = [3, 0, 0], sizes = [1, 32, 8], strides = [1, 1, 1]} : vector<4x32x8xf32> to vector<1x32x8xf32>
    %188 = vector.shape_cast %187 : vector<1x32x8xf32> to vector<32x8xf32>
    %189 = tpu.concatenate %182, %184, %186, %188 in 1 : vector<32x8xf32>, vector<32x8xf32>, vector<32x8xf32>, vector<32x8xf32> -> vector<32x32xf32>
    %190 = arith.truncf %189 : vector<32x32xf32> to vector<32x32xbf16>
    %c1_68 = arith.constant 1 : index
    %c0_69 = arith.constant 0 : index
    %c0_70 = arith.constant 0 : index
    %191 = vector.load %arg3[%c1_68, %c0_69, %c0_70] : memref<2x32x32xbf16, #tpu.memory_space<vmem>>, vector<1x32x32xbf16>
    %192 = vector.shape_cast %191 : vector<1x32x32xbf16> to vector<32x32xbf16>
    %cst_71 = arith.constant dense<0.000000e+00> : vector<32x32xf32>
    %193 = tpu.matmul %190, %192, %cst_71 {dimension_numbers = #tpu.dot_dimension_numbers<[1], [0], [0], [1], [0, 0, 1, 1], [], []>} : vector<32x32xbf16>, vector<32x32xbf16>, vector<32x32xf32> -> vector<32x32xf32>
    %c1_72 = arith.constant 1 : index
    %c0_73 = arith.constant 0 : index
    %c0_74 = arith.constant 0 : index
    %194 = vector.load %arg4[%c1_72, %c0_73, %c0_74] : memref<2x1x32xf32, #tpu.memory_space<vmem>>, vector<1x1x32xf32>
    %195 = vector.shape_cast %194 : vector<1x1x32xf32> to vector<1x32xf32>
    %196 = vector.broadcast %195 : vector<1x32xf32> to vector<32x32xf32>
    %197 = arith.addf %193, %196 : vector<32x32xf32>
    %198 = arith.addf %141, %197 : vector<32x32xf32>
    %c1_75 = arith.constant 1 : index
    %c0_76 = arith.constant 0 : index
    %c0_77 = arith.constant 0 : index
    %199 = vector.load %arg5[%c1_75, %c0_76, %c0_77] : memref<2x1x32xf32, #tpu.memory_space<vmem>>, vector<1x1x32xf32>
    %200 = vector.shape_cast %199 : vector<1x1x32xf32> to vector<1x32xf32>
    %c1_78 = arith.constant 1 : index
    %c0_79 = arith.constant 0 : index
    %c0_80 = arith.constant 0 : index
    %201 = vector.load %arg6[%c1_78, %c0_79, %c0_80] : memref<2x1x32xf32, #tpu.memory_space<vmem>>, vector<1x1x32xf32>
    %202 = vector.shape_cast %201 : vector<1x1x32xf32> to vector<1x32xf32>
    %203 = arith.mulf %198, %198 : vector<32x32xf32>
    %204 = tpu.concatenate %198, %203 in 1 : vector<32x32xf32>, vector<32x32xf32> -> vector<32x64xf32>
    %cst_81 = arith.constant 1.000000e+00 : f32
    %205 = vector.broadcast %cst_81 : f32 to vector<1x32xf32>
    %cst_82 = arith.constant dense<0.000000e+00> : vector<1x64xf32>
    %206 = tpu.matmul %205, %204, %cst_82 {dimension_numbers = #tpu.dot_dimension_numbers<[1], [0], [0], [1], [0, 0, 1, 1], [], []>} : vector<1x32xf32>, vector<32x64xf32>, vector<1x64xf32> -> vector<1x64xf32>
    %207 = vector.extract_strided_slice %206 {offsets = [0, 0], sizes = [1, 32], strides = [1, 1]} : vector<1x64xf32> to vector<1x32xf32>
    %cst_83 = arith.constant 3.125000e-02 : f32
    %208 = vector.broadcast %cst_83 : f32 to vector<1x32xf32>
    %209 = arith.mulf %207, %208 : vector<1x32xf32>
    %210 = vector.extract_strided_slice %206 {offsets = [0, 32], sizes = [1, 32], strides = [1, 1]} : vector<1x64xf32> to vector<1x32xf32>
    %cst_84 = arith.constant 3.125000e-02 : f32
    %211 = vector.broadcast %cst_84 : f32 to vector<1x32xf32>
    %212 = arith.mulf %210, %211 : vector<1x32xf32>
    %213 = arith.mulf %209, %209 : vector<1x32xf32>
    %214 = arith.subf %212, %213 : vector<1x32xf32>
    %215 = vector.broadcast %209 : vector<1x32xf32> to vector<32x32xf32>
    %216 = arith.subf %198, %215 : vector<32x32xf32>
    %cst_85 = arith.constant 9.99999974E-6 : f32
    %217 = vector.broadcast %cst_85 : f32 to vector<1x32xf32>
    %218 = arith.addf %214, %217 : vector<1x32xf32>
    %219 = math.rsqrt %218 : vector<1x32xf32>
    %220 = vector.broadcast %219 : vector<1x32xf32> to vector<32x32xf32>
    %221 = arith.mulf %216, %220 : vector<32x32xf32>
    %222 = vector.broadcast %200 : vector<1x32xf32> to vector<32x32xf32>
    %223 = arith.mulf %221, %222 : vector<32x32xf32>
    %224 = vector.broadcast %202 : vector<1x32xf32> to vector<32x32xf32>
    %225 = arith.addf %223, %224 : vector<32x32xf32>
    %226 = arith.truncf %225 : vector<32x32xf32> to vector<32x32xbf16>
    %c1_86 = arith.constant 1 : index
    %c0_87 = arith.constant 0 : index
    %c0_88 = arith.constant 0 : index
    %227 = vector.load %arg7[%c1_86, %c0_87, %c0_88] : memref<2x32x64xbf16, #tpu.memory_space<vmem>>, vector<1x32x64xbf16>
    %228 = vector.shape_cast %227 : vector<1x32x64xbf16> to vector<32x64xbf16>
    %cst_89 = arith.constant dense<0.000000e+00> : vector<32x64xf32>
    %229 = tpu.matmul %226, %228, %cst_89 {dimension_numbers = #tpu.dot_dimension_numbers<[1], [0], [0], [1], [0, 0, 1, 1], [], []>} : vector<32x32xbf16>, vector<32x64xbf16>, vector<32x64xf32> -> vector<32x64xf32>
    %c1_90 = arith.constant 1 : index
    %c0_91 = arith.constant 0 : index
    %c0_92 = arith.constant 0 : index
    %230 = vector.load %arg8[%c1_90, %c0_91, %c0_92] : memref<2x1x64xf32, #tpu.memory_space<vmem>>, vector<1x1x64xf32>
    %231 = vector.shape_cast %230 : vector<1x1x64xf32> to vector<1x64xf32>
    %232 = vector.broadcast %231 : vector<1x64xf32> to vector<32x64xf32>
    %233 = arith.addf %229, %232 : vector<32x64xf32>
    %cst_93 = arith.constant 5.000000e-01 : f32
    %234 = vector.broadcast %cst_93 : f32 to vector<32x64xf32>
    %235 = arith.mulf %234, %233 : vector<32x64xf32>
    %cst_94 = arith.constant 4.471500e-02 : f32
    %236 = vector.broadcast %cst_94 : f32 to vector<32x64xf32>
    %237 = arith.mulf %236, %233 : vector<32x64xf32>
    %238 = arith.mulf %237, %233 : vector<32x64xf32>
    %239 = arith.mulf %238, %233 : vector<32x64xf32>
    %240 = arith.addf %233, %239 : vector<32x64xf32>
    %cst_95 = arith.constant 0.797884583 : f32
    %241 = vector.broadcast %cst_95 : f32 to vector<32x64xf32>
    %242 = arith.mulf %241, %240 : vector<32x64xf32>
    %243 = math.tanh %242 : vector<32x64xf32>
    %cst_96 = arith.constant 1.000000e+00 : f32
    %244 = vector.broadcast %cst_96 : f32 to vector<32x64xf32>
    %245 = arith.addf %244, %243 : vector<32x64xf32>
    %246 = arith.mulf %235, %245 : vector<32x64xf32>
    %247 = arith.truncf %246 : vector<32x64xf32> to vector<32x64xbf16>
    %c1_97 = arith.constant 1 : index
    %c0_98 = arith.constant 0 : index
    %c0_99 = arith.constant 0 : index
    %248 = vector.load %arg9[%c1_97, %c0_98, %c0_99] : memref<2x64x32xbf16, #tpu.memory_space<vmem>>, vector<1x64x32xbf16>
    %249 = vector.shape_cast %248 : vector<1x64x32xbf16> to vector<64x32xbf16>
    %cst_100 = arith.constant dense<0.000000e+00> : vector<32x32xf32>
    %250 = tpu.matmul %247, %249, %cst_100 {dimension_numbers = #tpu.dot_dimension_numbers<[1], [0], [0], [1], [0, 0, 1, 1], [], []>} : vector<32x64xbf16>, vector<64x32xbf16>, vector<32x32xf32> -> vector<32x32xf32>
    %c1_101 = arith.constant 1 : index
    %c0_102 = arith.constant 0 : index
    %c0_103 = arith.constant 0 : index
    %251 = vector.load %arg10[%c1_101, %c0_102, %c0_103] : memref<2x1x32xf32, #tpu.memory_space<vmem>>, vector<1x1x32xf32>
    %252 = vector.shape_cast %251 : vector<1x1x32xf32> to vector<1x32xf32>
    %253 = vector.broadcast %252 : vector<1x32xf32> to vector<32x32xf32>
    %254 = arith.addf %250, %253 : vector<32x32xf32>
    %255 = arith.addf %225, %254 : vector<32x32xf32>
    %c1_104 = arith.constant 1 : index
    %c0_105 = arith.constant 0 : index
    %c0_106 = arith.constant 0 : index
    %256 = vector.load %arg11[%c1_104, %c0_105, %c0_106] : memref<2x1x32xf32, #tpu.memory_space<vmem>>, vector<1x1x32xf32>
    %257 = vector.shape_cast %256 : vector<1x1x32xf32> to vector<1x32xf32>
    %c1_107 = arith.constant 1 : index
    %c0_108 = arith.constant 0 : index
    %c0_109 = arith.constant 0 : index
    %258 = vector.load %arg12[%c1_107, %c0_108, %c0_109] : memref<2x1x32xf32, #tpu.memory_space<vmem>>, vector<1x1x32xf32>
    %259 = vector.shape_cast %258 : vector<1x1x32xf32> to vector<1x32xf32>
    %260 = arith.mulf %255, %255 : vector<32x32xf32>
    %261 = tpu.concatenate %255, %260 in 1 : vector<32x32xf32>, vector<32x32xf32> -> vector<32x64xf32>
    %cst_110 = arith.constant 1.000000e+00 : f32
    %262 = vector.broadcast %cst_110 : f32 to vector<1x32xf32>
    %cst_111 = arith.constant dense<0.000000e+00> : vector<1x64xf32>
    %263 = tpu.matmul %262, %261, %cst_111 {dimension_numbers = #tpu.dot_dimension_numbers<[1], [0], [0], [1], [0, 0, 1, 1], [], []>} : vector<1x32xf32>, vector<32x64xf32>, vector<1x64xf32> -> vector<1x64xf32>
    %264 = vector.extract_strided_slice %263 {offsets = [0, 0], sizes = [1, 32], strides = [1, 1]} : vector<1x64xf32> to vector<1x32xf32>
    %cst_112 = arith.constant 3.125000e-02 : f32
    %265 = vector.broadcast %cst_112 : f32 to vector<1x32xf32>
    %266 = arith.mulf %264, %265 : vector<1x32xf32>
    %267 = vector.extract_strided_slice %263 {offsets = [0, 32], sizes = [1, 32], strides = [1, 1]} : vector<1x64xf32> to vector<1x32xf32>
    %cst_113 = arith.constant 3.125000e-02 : f32
    %268 = vector.broadcast %cst_113 : f32 to vector<1x32xf32>
    %269 = arith.mulf %267, %268 : vector<1x32xf32>
    %270 = arith.mulf %266, %266 : vector<1x32xf32>
    %271 = arith.subf %269, %270 : vector<1x32xf32>
    %272 = vector.broadcast %266 : vector<1x32xf32> to vector<32x32xf32>
    %273 = arith.subf %255, %272 : vector<32x32xf32>
    %cst_114 = arith.constant 9.99999974E-6 : f32
    %274 = vector.broadcast %cst_114 : f32 to vector<1x32xf32>
    %275 = arith.addf %271, %274 : vector<1x32xf32>
    %276 = math.rsqrt %275 : vector<1x32xf32>
    %277 = vector.broadcast %276 : vector<1x32xf32> to vector<32x32xf32>
    %278 = arith.mulf %273, %277 : vector<32x32xf32>
    %279 = vector.broadcast %257 : vector<1x32xf32> to vector<32x32xf32>
    %280 = arith.mulf %278, %279 : vector<32x32xf32>
    %281 = vector.broadcast %259 : vector<1x32xf32> to vector<32x32xf32>
    %282 = arith.addf %280, %281 : vector<32x32xf32>
    %c0_115 = arith.constant 0 : index
    %c0_116 = arith.constant 0 : index
    %283 = vector.load %arg13[%c0_115, %c0_116] : memref<32x32xf32, #tpu.memory_space<vmem>>, vector<32x32xf32>
    tpu.vector_store %arg13[%c0_115, %c0_116], %282 {strides = array<i32>} : memref<32x32xf32, #tpu.memory_space<vmem>>, vector<32x32xf32>,
    return
  }
}

</mosaic_0001>

<llo_original>
// kernel: tst_encoder_pallas.1
$region0: #{tst_encoder_pallas.1}
  #allocation0 [shape = 'u32[]', space=smem, size = 0x4, offset = 0x4, fixed_abs, tag = 'smem constant byte address 0x4 - core index']
  #allocation1 [shape = 'u32[144,128]{1,0:T(1,128)}', space=vmem, size = 0x12000, scoped, tag = 'internal scratch']
  %s0 = inlined_call_operand.vmem [shape: f32[32,32], index: 0, kind: input, shape index: {}]
  %s1 = inlined_call_operand.vmem [shape: bf16[2,32,96], index: 1, kind: input, shape index: {}]
  %s2 = inlined_call_operand.vmem [shape: f32[2,1,96], index: 2, kind: input, shape index: {}]
  %s3 = inlined_call_operand.vmem [shape: bf16[2,32,32], index: 3, kind: input, shape index: {}]
  %s4 = inlined_call_operand.vmem [shape: f32[2,1,32], index: 4, kind: input, shape index: {}]
  %s5 = inlined_call_operand.vmem [shape: f32[2,1,32], index: 5, kind: input, shape index: {}]
  %s6 = inlined_call_operand.vmem [shape: f32[2,1,32], index: 6, kind: input, shape index: {}]
  %s7 = inlined_call_operand.hbm [shape: bf16[2,32,64], index: 7, kind: input, shape index: {}]
  %s8 = inlined_call_operand.vmem [shape: f32[2,1,64], index: 8, kind: input, shape index: {}]
  %s9 = inlined_call_operand.vmem [shape: bf16[2,64,32], index: 9, kind: input, shape index: {}]
  %s10 = inlined_call_operand.vmem [shape: f32[2,1,32], index: 10, kind: input, shape index: {}]
  %s11 = inlined_call_operand.vmem [shape: f32[2,1,32], index: 11, kind: input, shape index: {}]
  %s12 = inlined_call_operand.vmem [shape: f32[2,1,32], index: 12, kind: input, shape index: {}]
  %s13 = inlined_call_operand.hbm [shape: f32[32,32], index: 13, kind: output, shape index: {}]
  %s14 = sld [smem:[#allocation0]]
  $region66: #{tst_encoder_pallas.1} parent=0
    _
  %s16 = ssub.s32 1, %s14
  %s17 = scalar_select 0, %s16, %s14
  $region1: #{tst_encoder_pallas.1} parent=0
    #allocation2 [shape = 'u8[16384]{0}', space=vmem, size = 0x4000, scoped, tag = 'input window, operand 7, single buffered']
    #allocation3 [shape = 's32[1]{0}', space=sflag, size = 0x4, scoped, tag = 'scoped memory for tst_encoder_pallas.1']
    #allocation4 [shape = 's32[1]{0}', space=sflag, size = 0x4, scoped, tag = 'scoped memory for tst_encoder_pallas.1']
    #allocation5 [shape = 'u8[16384]{0}', space=vmem, size = 0x4000, scoped, tag = 'output window, operand 0, single buffered']
    %18 = vsyncpa [#allocation3], 0
    %19 = vsyncpa [#allocation4], 0
    // Predicated region
    $region2: #{tst_encoder_pallas.1} parent=1 // pred_check
      _
    $region3: #{tst_encoder_pallas.1} parent=1 // pred_check_branch
      %21 = sbr.rel (0) target = $region5
    $region4: #{tst_encoder_pallas.1} parent=1 // pred_region
      _
    $region5: #{tst_encoder_pallas.1} parent=1 // pred_fallthru
      _
    // Predicated region
    $region6: #{tst_encoder_pallas.1} parent=1 // pred_check
      _
    $region7: #{tst_encoder_pallas.1} parent=1 // pred_check_branch
      %23 = sbr.rel (0) target = $region9
    $region8: #{tst_encoder_pallas.1} parent=1 // pred_region
      _
    $region9: #{tst_encoder_pallas.1} parent=1 // pred_fallthru
      _
    // Predicated region
    $region10: #{tst_encoder_pallas.1} parent=1 // pred_check
      _
    $region11: #{tst_encoder_pallas.1} parent=1 // pred_check_branch
      %25 = sbr.rel (0) target = $region13
    $region12: #{tst_encoder_pallas.1} parent=1 // pred_region
      _
    $region13: #{tst_encoder_pallas.1} parent=1 // pred_fallthru
      _
    // Predicated region
    $region14: #{tst_encoder_pallas.1} parent=1 // pred_check
      _
    $region15: #{tst_encoder_pallas.1} parent=1 // pred_check_branch
      %27 = sbr.rel (0) target = $region17
    $region16: #{tst_encoder_pallas.1} parent=1 // pred_region
      _
    $region17: #{tst_encoder_pallas.1} parent=1 // pred_fallthru
      _
    // Predicated region
    $region18: #{tst_encoder_pallas.1} parent=1 // pred_check
      _
    $region19: #{tst_encoder_pallas.1} parent=1 // pred_check_branch
      %29 = sbr.rel (0) target = $region21
    $region20: #{tst_encoder_pallas.1} parent=1 // pred_region
      _
    $region21: #{tst_encoder_pallas.1} parent=1 // pred_fallthru
      _
    // Predicated region
    $region22: #{tst_encoder_pallas.1} parent=1 // pred_check
      _
    $region23: #{tst_encoder_pallas.1} parent=1 // pred_check_branch
      %31 = sbr.rel (0) target = $region25
    $region24: #{tst_encoder_pallas.1} parent=1 // pred_region
      _
    $region25: #{tst_encoder_pallas.1} parent=1 // pred_fallthru
      _
    // Predicated region
    $region26: #{tst_encoder_pallas.1} parent=1 // pred_check
      _
    $region27: #{tst_encoder_pallas.1} parent=1 // pred_check_branch
      %33 = sbr.rel (0) target = $region29
    $region28: #{tst_encoder_pallas.1} parent=1 // pred_region
      _
    $region29: #{tst_encoder_pallas.1} parent=1 // pred_fallthru
      _
    // Predicated region
    $region30: #{tst_encoder_pallas.1} parent=1 // pred_check
      _
    $region31: #{tst_encoder_pallas.1} parent=1 // pred_check_branch
      %35 = sbr.rel (0) target = $region33
    $region32: #{tst_encoder_pallas.1} parent=1 // pred_region
      %s37 = ssub.s32 512, 512
      %38 = vsyncadd [#allocation3], %s37
      %s39 = sshll.u32 [#allocation2], 4
      %s40 = int_to_ptr.vmem [resolvable:$true] %s39
      %45 = dma.hbm_to_vmem [thread:$0]  %s7, 512, %s40, [#allocation3], 64, 64, 4
    $region33: #{tst_encoder_pallas.1} parent=1 // pred_fallthru
      _
    // Predicated region
    $region34: #{tst_encoder_pallas.1} parent=1 // pred_check
      _
    $region35: #{tst_encoder_pallas.1} parent=1 // pred_check_branch
      %47 = sbr.rel (0) target = $region37
    $region36: #{tst_encoder_pallas.1} parent=1 // pred_region
      _
    $region37: #{tst_encoder_pallas.1} parent=1 // pred_fallthru
      _
    // Predicated region
    $region38: #{tst_encoder_pallas.1} parent=1 // pred_check
      _
    $region39: #{tst_encoder_pallas.1} parent=1 // pred_check_branch
      %49 = sbr.rel (0) target = $region41
    $region40: #{tst_encoder_pallas.1} parent=1 // pred_region
      _
    $region41: #{tst_encoder_pallas.1} parent=1 // pred_fallthru
      _
    // Predicated region
    $region42: #{tst_encoder_pallas.1} parent=1 // pred_check
      _
    $region43: #{tst_encoder_pallas.1} parent=1 // pred_check_branch
      %51 = sbr.rel (0) target = $region45
    $region44: #{tst_encoder_pallas.1} parent=1 // pred_region
      _
    $region45: #{tst_encoder_pallas.1} parent=1 // pred_fallthru
      _
    // Predicated region
    $region46: #{tst_encoder_pallas.1} parent=1 // pred_check
      _
    $region47: #{tst_encoder_pallas.1} parent=1 // pred_check_branch
      %53 = sbr.rel (0) target = $region49
    $region48: #{tst_encoder_pallas.1} parent=1 // pred_region
      _
    $region49: #{tst_encoder_pallas.1} parent=1 // pred_fallthru
      _
    // Predicated region
    $region50: #{tst_encoder_pallas.1} parent=1 // pred_check
      _
    $region51: #{tst_encoder_pallas.1} parent=1 // pred_check_branch
      %55 = sbr.rel (0) target = $region53
    $region52: #{tst_encoder_pallas.1} parent=1 // pred_region
      _
    $region53: #{tst_encoder_pallas.1} parent=1 // pred_fallthru
      _
    // Predicated region
    $region54: #{tst_encoder_pallas.1} parent=1 // pred_check
      _
    $region55: #{tst_encoder_pallas.1} parent=1 // pred_check_branch
      %57 = sbr.rel (0) target = $region57
    $region56: #{tst_encoder_pallas.1} parent=1 // pred_region
      %58 = dma.done [#allocation3], 512
    $region57: #{tst_encoder_pallas.1} parent=1 // pred_fallthru
      _
    %v60 = vld [vmem:[%s0] sm:$0xff]
    %v61 = vld [vmem:[%s0 + $0x8] sm:$0xff]
    %v62 = vld [vmem:[%s0 + $0x10] sm:$0xff]
    %v63 = vld [vmem:[%s0 + $0x18] sm:$0xff]
    %v64 = vpack.c.bf16 %v61, %v60
    %v65 = vpack.c.bf16 %v63, %v62
    %v66 = vld [vmem:[%s1] sm:$0xf]
    %v67 = vld [vmem:[%s1 + $0x4] sm:$0xf]
    %v68 = vld [vmem:[%s1 + $0x8] sm:$0xf]
    %v69 = vld [vmem:[%s1 + $0xc] sm:$0xf]
    %v70 = vld [vmem:[%s2] sm:$0x1]
    %v72 = vlaneseq
    %v73 = vshrl.u32 %v72, 7
    %v74 = vsub.s32 0, %v73
    %v75 = vrot.slane %v70, %v74
    %v81 = vunpack.c.l.b16 %v66
    %v82 = vunpack.c.l.b16 %v67
    %v83 = vunpack.c.l.b16 %v68
    %v84 = vunpack.c.l.b16 %v69
    %v85 = vpack.c.b16 %v82, %v81
    %v86 = vpack.c.b16 %v84, %v83
    %vm89 = vcmask 261120
    %v91 = vsel %vm89, %v64, 0
    %v94 = vsel %vm89, %v65, 0
    %96 = vmatprep.subr.bf16.mxu0 0
    %97 = vmatpush1.bf16.msra.mxu0 0
    %98 = vmatprep.subr.bf16.mxu0 0
    %99 = vmatpush1.bf16.msra.mxu0 0
    %100 = vmatprep.subr.bf16.mxu0 0
    %101 = vmatpush1.bf16.msra.mxu0 0
    %102 = vmatprep.subr.bf16.mxu0 0
    %103 = vmatpush1.bf16.msra.mxu0 0
    %104 = vmatprep.subr.bf16.mxu0 0
    %105 = vmatpush1.bf16.msra.mxu0 0
    %106 = vmatprep.subr.bf16.mxu0 0
    %107 = vmatpush1.bf16.msra.mxu0 0
    %108 = vmatprep.subr.bf16.mxu0 0
    %109 = vmatpush1.bf16.msra.mxu0 %v86
    %110 = vmatprep.subr.bf16.mxu0 0
    %111 = vmatpush1.bf16.msra.mxu0 %v85
    %112 = vmatprep.subr.bf16.mxu0 0
    %113 = vmatpush2.bf16.msra.mxu0 0
    %114 = vmatprep.subr.bf16.mxu0 0
    %115 = vmatpush2.bf16.msra.mxu0 0
    %116 = vmatprep.subr.bf16.mxu0 0
    %117 = vmatpush2.bf16.msra.mxu0 0
    %118 = vmatprep.subr.bf16.mxu0 0
    %119 = vmatpush2.bf16.msra.mxu0 0
    %120 = vmatprep.subr.bf16.mxu0 0
    %121 = vmatpush2.bf16.msra.mxu0 0
    %122 = vmatprep.subr.bf16.mxu0 0
    %123 = vmatpush2.bf16.msra.mxu0 0
    %124 = vmatprep.subr.bf16.mxu0 0
    %125 = vmatpush2.bf16.msra.mxu0 0
    %126 = vmatprep.subr.bf16.mxu0 0
    %127 = vmatpush2.bf16.msra.mxu0 0
    %128 = vmatprep.mubr.bf16.mxu0 0
    %129 = vmatmul.mubr.bf16.gmra.mxu0 %v91
    %v130 = vpop.f32.mrf.mxu0
    %v131 = vadd.f32 %v75, %v130
    %v132 = vpop.f32.mrf.mxu0
    %v133 = vpop.f32.mrf.mxu0
    %v134 = vadd.f32 %v75, %v133
    %v135 = vpop.f32.mrf.mxu0
    %136 = vmatprep.mubr.bf16.mxu0 0
    %137 = vmatmul.mubr.bf16.gmra.mxu0 %v94
    %v138 = vpop.f32.mrf.mxu0
    %v139 = vadd.f32 %v75, %v138
    %v140 = vpop.f32.mrf.mxu0
    %v141 = vpop.f32.mrf.mxu0
    %v142 = vadd.f32 %v75, %v141
    %v143 = vpop.f32.mrf.mxu0
    %144 = vdwg.mxu0
    %149 = vrot.lane.b32.xlu0 %v131, 120
    %v150 = vpop.permute.xlu0 %149
    %151 = vrot.lane.b32.xlu0 %v134, 120
    %v152 = vpop.permute.xlu0 %151
    %153 = vrot.lane.b32.xlu0 %v139, 120
    %v154 = vpop.permute.xlu0 %153
    %155 = vrot.lane.b32.xlu0 %v142, 120
    %v156 = vpop.permute.xlu0 %155
    %157 = vrot.lane.b32.xlu0 %v131, 112
    %v158 = vpop.permute.xlu0 %157
    %159 = vrot.lane.b32.xlu0 %v134, 112
    %v160 = vpop.permute.xlu0 %159
    %161 = vrot.lane.b32.xlu0 %v139, 112
    %v162 = vpop.permute.xlu0 %161
    %163 = vrot.lane.b32.xlu0 %v142, 112
    %v164 = vpop.permute.xlu0 %163
    %165 = vrot.lane.b32.xlu0 %v131, 104
    %v166 = vpop.permute.xlu0 %165
    %167 = vrot.lane.b32.xlu0 %v134, 104
    %v168 = vpop.permute.xlu0 %167
    %169 = vrot.lane.b32.xlu0 %v139, 104
    %v170 = vpop.permute.xlu0 %169
    %171 = vrot.lane.b32.xlu0 %v142, 104
    %v172 = vpop.permute.xlu0 %171
    %173 = vrot.lane.b32.xlu0 %v131, 96
    %v174 = vpop.permute.xlu0 %173
    %175 = vrot.lane.b32.xlu0 %v134, 96
    %v176 = vpop.permute.xlu0 %175
    %vm177 = vcmask 64512
    %v178 = vsel %vm177, %v131, 0
    %v180 = vsel %vm177, %v134, 0
    %v182 = vsel %vm177, %v174, 0
    %v184 = vsel %vm177, %v176, 0
    %186 = vmatprep.subr.mxu0 0.0
    %187 = vmatpush1.xpose.msra.mxu0 0.0
    %188 = vmatprep.subr.mxu0 0.0
    %189 = vmatpush1.xpose.msra.mxu0 0.0
    %190 = vmatprep.subr.mxu0 0.0
    %191 = vmatpush1.xpose.msra.mxu0 0.0
    %192 = vmatprep.subr.mxu0 0.0
    %193 = vmatpush1.xpose.msra.mxu0 0.0
    %194 = vmatprep.subr.mxu0 0.0
    %195 = vmatpush1.xpose.msra.mxu0 0.0
    %196 = vmatprep.subr.mxu0 0.0
    %197 = vmatpush1.xpose.msra.mxu0 0.0
    %198 = vmatprep.subr.mxu0 0.0
    %199 = vmatpush1.xpose.msra.mxu0 0.0
    %200 = vmatprep.subr.mxu0 0.0
    %201 = vmatpush1.xpose.msra.mxu0 0.0
    %202 = vmatprep.subr.mxu0 0.0
    %203 = vmatpush1.xpose.msra.mxu0 0.0
    %204 = vmatprep.subr.mxu0 0.0
    %205 = vmatpush1.xpose.msra.mxu0 0.0
    %206 = vmatprep.subr.mxu0 0.0
    %207 = vmatpush1.xpose.msra.mxu0 0.0
    %208 = vmatprep.subr.mxu0 0.0
    %209 = vmatpush1.xpose.msra.mxu0 0.0
    %210 = vmatprep.subr.mxu0 0.0
    %211 = vmatpush1.xpose.msra.mxu0 0.0
    %212 = vmatprep.subr.mxu0 0.0
    %213 = vmatpush1.xpose.msra.mxu0 0.0
    %214 = vmatprep.subr.mxu0 0.0
    %215 = vmatpush1.xpose.msra.mxu0 %v184
    %216 = vmatprep.subr.mxu0 0.0
    %217 = vmatpush1.xpose.msra.mxu0 %v182
    %218 = vmatprep.subr.mxu0 0.0
    %219 = vmatpush2.xpose.msra.mxu0 0.0
    %220 = vmatprep.subr.mxu0 0.0
    %221 = vmatpush2.xpose.msra.mxu0 0.0
    %222 = vmatprep.subr.mxu0 0.0
    %223 = vmatpush2.xpose.msra.mxu0 0.0
    %224 = vmatprep.subr.mxu0 0.0
    %225 = vmatpush2.xpose.msra.mxu0 0.0
    %226 = vmatprep.subr.mxu0 0.0
    %227 = vmatpush2.xpose.msra.mxu0 0.0
    %228 = vmatprep.subr.mxu0 0.0
    %229 = vmatpush2.xpose.msra.mxu0 0.0
    %230 = vmatprep.subr.mxu0 0.0
    %231 = vmatpush2.xpose.msra.mxu0 0.0
    %232 = vmatprep.subr.mxu0 0.0
    %233 = vmatpush2.xpose.msra.mxu0 0.0
    %234 = vmatprep.subr.mxu0 0.0
    %235 = vmatpush2.xpose.msra.mxu0 0.0
    %236 = vmatprep.subr.mxu0 0.0
    %237 = vmatpush2.xpose.msra.mxu0 0.0
    %238 = vmatprep.subr.mxu0 0.0
    %239 = vmatpush2.xpose.msra.mxu0 0.0
    %240 = vmatprep.subr.mxu0 0.0
    %241 = vmatpush2.xpose.msra.mxu0 0.0
    %242 = vmatprep.subr.mxu0 0.0
    %243 = vmatpush2.xpose.msra.mxu0 0.0
    %244 = vmatprep.subr.mxu0 0.0
    %245 = vmatpush2.xpose.msra.mxu0 0.0
    %246 = vmatprep.subr.mxu0 0.0
    %247 = vmatpush2.xpose.msra.mxu0 0.0
    %248 = vmatprep.subr.mxu0 0.0
    %249 = vmatpush2.xpose.msra.mxu0 0.0
    %250 = vmatprep.mubr.f32.mxu0 0.0
    %251 = vmatmul.mubr.f32.gmra.mxu0 %v178
    %v252 = vpop.f32.mrf.mxu0
    %v253 = vadd.f32 0.0, %v252
    %v254 = vpop.f32.mrf.mxu0
    %255 = vmatprep.mubr.f32.mxu0 0.0
    %256 = vmatmul.mubr.f32.gmra.mxu0 %v180
    %v257 = vpop.f32.mrf.mxu0
    %v258 = vadd.f32 0.0, %v257
    %v259 = vpop.f32.mrf.mxu0
    %260 = vdwg.mxu0
    %261 = vrot.lane.b32.xlu0 %v139, 96
    %v262 = vpop.permute.xlu0 %261
    %263 = vrot.lane.b32.xlu0 %v142, 96
    %v264 = vpop.permute.xlu0 %263
    %v265 = vsel %vm177, %v139, 0
    %v267 = vsel %vm177, %v142, 0
    %v269 = vsel %vm177, %v262, 0
    %v271 = vsel %vm177, %v264, 0
    %273 = vmatprep.subr.mxu0 0.0
    %274 = vmatpush1.xpose.msra.mxu0 0.0
    %275 = vmatprep.subr.mxu0 0.0
    %276 = vmatpush1.xpose.msra.mxu0 0.0
    %277 = vmatprep.subr.mxu0 0.0
    %278 = vmatpush1.xpose.msra.mxu0 0.0
    %279 = vmatprep.subr.mxu0 0.0
    %280 = vmatpush1.xpose.msra.mxu0 0.0
    %281 = vmatprep.subr.mxu0 0.0
    %282 = vmatpush1.xpose.msra.mxu0 0.0
    %283 = vmatprep.subr.mxu0 0.0
    %284 = vmatpush1.xpose.msra.mxu0 0.0
    %285 = vmatprep.subr.mxu0 0.0
    %286 = vmatpush1.xpose.msra.mxu0 0.0
    %287 = vmatprep.subr.mxu0 0.0
    %288 = vmatpush1.xpose.msra.mxu0 0.0
    %289 = vmatprep.subr.mxu0 0.0
    %290 = vmatpush1.xpose.msra.mxu0 0.0
    %291 = vmatprep.subr.mxu0 0.0
    %292 = vmatpush1.xpose.msra.mxu0 0.0
    %293 = vmatprep.subr.mxu0 0.0
    %294 = vmatpush1.xpose.msra.mxu0 0.0
    %295 = vmatprep.subr.mxu0 0.0
    %296 = vmatpush1.xpose.msra.mxu0 0.0
    %297 = vmatprep.subr.mxu0 0.0
    %298 = vmatpush1.xpose.msra.mxu0 0.0
    %299 = vmatprep.subr.mxu0 0.0
    %300 = vmatpush1.xpose.msra.mxu0 0.0
    %301 = vmatprep.subr.mxu0 0.0
    %302 = vmatpush1.xpose.msra.mxu0 %v271
    %303 = vmatprep.subr.mxu0 0.0
    %304 = vmatpush1.xpose.msra.mxu0 %v269
    %305 = vmatprep.subr.mxu0 0.0
    %306 = vmatpush2.xpose.msra.mxu0 0.0
    %307 = vmatprep.subr.mxu0 0.0
    %308 = vmatpush2.xpose.msra.mxu0 0.0
    %309 = vmatprep.subr.mxu0 0.0
    %310 = vmatpush2.xpose.msra.mxu0 0.0
    %311 = vmatprep.subr.mxu0 0.0
    %312 = vmatpush2.xpose.msra.mxu0 0.0
    %313 = vmatprep.subr.mxu0 0.0
    %314 = vmatpush2.xpose.msra.mxu0 0.0
    %315 = vmatprep.subr.mxu0 0.0
    %316 = vmatpush2.xpose.msra.mxu0 0.0
    %317 = vmatprep.subr.mxu0 0.0
    %318 = vmatpush2.xpose.msra.mxu0 0.0
    %319 = vmatprep.subr.mxu0 0.0
    %320 = vmatpush2.xpose.msra.mxu0 0.0
    %321 = vmatprep.subr.mxu0 0.0
    %322 = vmatpush2.xpose.msra.mxu0 0.0
    %323 = vmatprep.subr.mxu0 0.0
    %324 = vmatpush2.xpose.msra.mxu0 0.0
    %325 = vmatprep.subr.mxu0 0.0
    %326 = vmatpush2.xpose.msra.mxu0 0.0
    %327 = vmatprep.subr.mxu0 0.0
    %328 = vmatpush2.xpose.msra.mxu0 0.0
    %329 = vmatprep.subr.mxu0 0.0
    %330 = vmatpush2.xpose.msra.mxu0 0.0
    %331 = vmatprep.subr.mxu0 0.0
    %332 = vmatpush2.xpose.msra.mxu0 0.0
    %333 = vmatprep.subr.mxu0 0.0
    %334 = vmatpush2.xpose.msra.mxu0 0.0
    %335 = vmatprep.subr.mxu0 0.0
    %336 = vmatpush2.xpose.msra.mxu0 0.0
    %337 = vmatprep.mubr.f32.mxu0 0.0
    %338 = vmatmul.mubr.f32.gmra.mxu0 %v265
    %v339 = vpop.f32.mrf.mxu0
    %v340 = vadd.f32 0.0, %v339
    %v341 = vpop.f32.mrf.mxu0
    %342 = vmatprep.mubr.f32.mxu0 0.0
    %343 = vmatmul.mubr.f32.gmra.mxu0 %v267
    %v344 = vpop.f32.mrf.mxu0
    %v345 = vadd.f32 0.0, %v344
    %v346 = vpop.f32.mrf.mxu0
    %347 = vdwg.mxu0
    %348 = vrot.lane.b32.xlu0 %v150, 96
    %v349 = vpop.permute.xlu0 %348
    %350 = vrot.lane.b32.xlu0 %v152, 96
    %v351 = vpop.permute.xlu0 %350
    %v352 = vsel %vm177, %v150, 0
    %v354 = vsel %vm177, %v152, 0
    %v356 = vsel %vm177, %v349, 0
    %v358 = vsel %vm177, %v351, 0
    %360 = vmatprep.subr.mxu0 0.0
    %361 = vmatpush1.xpose.msra.mxu0 0.0
    %362 = vmatprep.subr.mxu0 0.0
    %363 = vmatpush1.xpose.msra.mxu0 0.0
    %364 = vmatprep.subr.mxu0 0.0
    %365 = vmatpush1.xpose.msra.mxu0 0.0
    %366 = vmatprep.subr.mxu0 0.0
    %367 = vmatpush1.xpose.msra.mxu0 0.0
    %368 = vmatprep.subr.mxu0 0.0
    %369 = vmatpush1.xpose.msra.mxu0 0.0
    %370 = vmatprep.subr.mxu0 0.0
    %371 = vmatpush1.xpose.msra.mxu0 0.0
    %372 = vmatprep.subr.mxu0 0.0
    %373 = vmatpush1.xpose.msra.mxu0 0.0
    %374 = vmatprep.subr.mxu0 0.0
    %375 = vmatpush1.xpose.msra.mxu0 0.0
    %376 = vmatprep.subr.mxu0 0.0
    %377 = vmatpush1.xpose.msra.mxu0 0.0
    %378 = vmatprep.subr.mxu0 0.0
    %379 = vmatpush1.xpose.msra.mxu0 0.0
    %380 = vmatprep.subr.mxu0 0.0
    %381 = vmatpush1.xpose.msra.mxu0 0.0
    %382 = vmatprep.subr.mxu0 0.0
    %383 = vmatpush1.xpose.msra.mxu0 0.0
    %384 = vmatprep.subr.mxu0 0.0
    %385 = vmatpush1.xpose.msra.mxu0 0.0
    %386 = vmatprep.subr.mxu0 0.0
    %387 = vmatpush1.xpose.msra.mxu0 0.0
    %388 = vmatprep.subr.mxu0 0.0
    %389 = vmatpush1.xpose.msra.mxu0 %v358
    %390 = vmatprep.subr.mxu0 0.0
    %391 = vmatpush1.xpose.msra.mxu0 %v356
    %392 = vmatprep.subr.mxu0 0.0
    %393 = vmatpush2.xpose.msra.mxu0 0.0
    %394 = vmatprep.subr.mxu0 0.0
    %395 = vmatpush2.xpose.msra.mxu0 0.0
    %396 = vmatprep.subr.mxu0 0.0
    %397 = vmatpush2.xpose.msra.mxu0 0.0
    %398 = vmatprep.subr.mxu0 0.0
    %399 = vmatpush2.xpose.msra.mxu0 0.0
    %400 = vmatprep.subr.mxu0 0.0
    %401 = vmatpush2.xpose.msra.mxu0 0.0
    %402 = vmatprep.subr.mxu0 0.0
    %403 = vmatpush2.xpose.msra.mxu0 0.0
    %404 = vmatprep.subr.mxu0 0.0
    %405 = vmatpush2.xpose.msra.mxu0 0.0
    %406 = vmatprep.subr.mxu0 0.0
    %407 = vmatpush2.xpose.msra.mxu0 0.0
    %408 = vmatprep.subr.mxu0 0.0
    %409 = vmatpush2.xpose.msra.mxu0 0.0
    %410 = vmatprep.subr.mxu0 0.0
    %411 = vmatpush2.xpose.msra.mxu0 0.0
    %412 = vmatprep.subr.mxu0 0.0
    %413 = vmatpush2.xpose.msra.mxu0 0.0
    %414 = vmatprep.subr.mxu0 0.0
    %415 = vmatpush2.xpose.msra.mxu0 0.0
    %416 = vmatprep.subr.mxu0 0.0
    %417 = vmatpush2.xpose.msra.mxu0 0.0
    %418 = vmatprep.subr.mxu0 0.0
    %419 = vmatpush2.xpose.msra.mxu0 0.0
    %420 = vmatprep.subr.mxu0 0.0
    %421 = vmatpush2.xpose.msra.mxu0 0.0
    %422 = vmatprep.subr.mxu0 0.0
    %423 = vmatpush2.xpose.msra.mxu0 0.0
    %424 = vmatprep.mubr.f32.mxu0 0.0
    %425 = vmatmul.mubr.f32.gmra.mxu0 %v352
    %v426 = vpop.f32.mrf.mxu0
    %v427 = vadd.f32 0.0, %v426
    %v428 = vpop.f32.mrf.mxu0
    %429 = vmatprep.mubr.f32.mxu0 0.0
    %430 = vmatmul.mubr.f32.gmra.mxu0 %v354
    %v431 = vpop.f32.mrf.mxu0
    %v432 = vadd.f32 0.0, %v431
    %v433 = vpop.f32.mrf.mxu0
    %434 = vdwg.mxu0
    %435 = vrot.lane.b32.xlu0 %v154, 96
    %v436 = vpop.permute.xlu0 %435
    %437 = vrot.lane.b32.xlu0 %v156, 96
    %v438 = vpop.permute.xlu0 %437
    %v439 = vsel %vm177, %v154, 0
    %v441 = vsel %vm177, %v156, 0
    %v443 = vsel %vm177, %v436, 0
    %v445 = vsel %vm177, %v438, 0
    %447 = vmatprep.subr.mxu0 0.0
    %448 = vmatpush1.xpose.msra.mxu0 0.0
    %449 = vmatprep.subr.mxu0 0.0
    %450 = vmatpush1.xpose.msra.mxu0 0.0
    %451 = vmatprep.subr.mxu0 0.0
    %452 = vmatpush1.xpose.msra.mxu0 0.0
    %453 = vmatprep.subr.mxu0 0.0
    %454 = vmatpush1.xpose.msra.mxu0 0.0
    %455 = vmatprep.subr.mxu0 0.0
    %456 = vmatpush1.xpose.msra.mxu0 0.0
    %457 = vmatprep.subr.mxu0 0.0
    %458 = vmatpush1.xpose.msra.mxu0 0.0
    %459 = vmatprep.subr.mxu0 0.0
    %460 = vmatpush1.xpose.msra.mxu0 0.0
    %461 = vmatprep.subr.mxu0 0.0
    %462 = vmatpush1.xpose.msra.mxu0 0.0
    %463 = vmatprep.subr.mxu0 0.0
    %464 = vmatpush1.xpose.msra.mxu0 0.0
    %465 = vmatprep.subr.mxu0 0.0
    %466 = vmatpush1.xpose.msra.mxu0 0.0
    %467 = vmatprep.subr.mxu0 0.0
    %468 = vmatpush1.xpose.msra.mxu0 0.0
    %469 = vmatprep.subr.mxu0 0.0
    %470 = vmatpush1.xpose.msra.mxu0 0.0
    %471 = vmatprep.subr.mxu0 0.0
    %472 = vmatpush1.xpose.msra.mxu0 0.0
    %473 = vmatprep.subr.mxu0 0.0
    %474 = vmatpush1.xpose.msra.mxu0 0.0
    %475 = vmatprep.subr.mxu0 0.0
    %476 = vmatpush1.xpose.msra.mxu0 %v445
    %477 = vmatprep.subr.mxu0 0.0
    %478 = vmatpush1.xpose.msra.mxu0 %v443
    %479 = vmatprep.subr.mxu0 0.0
    %480 = vmatpush2.xpose.msra.mxu0 0.0
    %481 = vmatprep.subr.mxu0 0.0
    %482 = vmatpush2.xpose.msra.mxu0 0.0
    %483 = vmatprep.subr.mxu0 0.0
    %484 = vmatpush2.xpose.msra.mxu0 0.0
    %485 = vmatprep.subr.mxu0 0.0
    %486 = vmatpush2.xpose.msra.mxu0 0.0
    %487 = vmatprep.subr.mxu0 0.0
    %488 = vmatpush2.xpose.msra.mxu0 0.0
    %489 = vmatprep.subr.mxu0 0.0
    %490 = vmatpush2.xpose.msra.mxu0 0.0
    %491 = vmatprep.subr.mxu0 0.0
    %492 = vmatpush2.xpose.msra.mxu0 0.0
    %493 = vmatprep.subr.mxu0 0.0
    %494 = vmatpush2.xpose.msra.mxu0 0.0
    %495 = vmatprep.subr.mxu0 0.0
    %496 = vmatpush2.xpose.msra.mxu0 0.0
    %497 = vmatprep.subr.mxu0 0.0
    %498 = vmatpush2.xpose.msra.mxu0 0.0
    %499 = vmatprep.subr.mxu0 0.0
    %500 = vmatpush2.xpose.msra.mxu0 0.0
    %501 = vmatprep.subr.mxu0 0.0
    %502 = vmatpush2.xpose.msra.mxu0 0.0
    %503 = vmatprep.subr.mxu0 0.0
    %504 = vmatpush2.xpose.msra.mxu0 0.0
    %505 = vmatprep.subr.mxu0 0.0
    %506 = vmatpush2.xpose.msra.mxu0 0.0
    %507 = vmatprep.subr.mxu0 0.0
    %508 = vmatpush2.xpose.msra.mxu0 0.0
    %509 = vmatprep.subr.mxu0 0.0
    %510 = vmatpush2.xpose.msra.mxu0 0.0
    %511 = vmatprep.mubr.f32.mxu0 0.0
    %512 = vmatmul.mubr.f32.gmra.mxu0 %v439
    %v513 = vpop.f32.mrf.mxu0
    %v514 = vadd.f32 0.0, %v513
    %v515 = vpop.f32.mrf.mxu0
    %516 = vmatprep.mubr.f32.mxu0 0.0
    %517 = vmatmul.mubr.f32.gmra.mxu0 %v441
    %v518 = vpop.f32.mrf.mxu0
    %v519 = vadd.f32 0.0, %v518
    %v520 = vpop.f32.mrf.mxu0
    %521 = vdwg.mxu0
    %522 = vrot.lane.b32.xlu0 %v158, 96
    %v523 = vpop.permute.xlu0 %522
    %524 = vrot.lane.b32.xlu0 %v160, 96
    %v525 = vpop.permute.xlu0 %524
    %v526 = vsel %vm177, %v158, 0
    %v528 = vsel %vm177, %v160, 0
    %v530 = vsel %vm177, %v523, 0
    %v532 = vsel %vm177, %v525, 0
    %534 = vmatprep.subr.mxu0 0.0
    %535 = vmatpush1.xpose.msra.mxu0 0.0
    %536 = vmatprep.subr.mxu0 0.0
    %537 = vmatpush1.xpose.msra.mxu0 0.0
    %538 = vmatprep.subr.mxu0 0.0
    %539 = vmatpush1.xpose.msra.mxu0 0.0
    %540 = vmatprep.subr.mxu0 0.0
    %541 = vmatpush1.xpose.msra.mxu0 0.0
    %542 = vmatprep.subr.mxu0 0.0
    %543 = vmatpush1.xpose.msra.mxu0 0.0
    %544 = vmatprep.subr.mxu0 0.0
    %545 = vmatpush1.xpose.msra.mxu0 0.0
    %546 = vmatprep.subr.mxu0 0.0
    %547 = vmatpush1.xpose.msra.mxu0 0.0
    %548 = vmatprep.subr.mxu0 0.0
    %549 = vmatpush1.xpose.msra.mxu0 0.0
    %550 = vmatprep.subr.mxu0 0.0
    %551 = vmatpush1.xpose.msra.mxu0 0.0
    %552 = vmatprep.subr.mxu0 0.0
    %553 = vmatpush1.xpose.msra.mxu0 0.0
    %554 = vmatprep.subr.mxu0 0.0
    %555 = vmatpush1.xpose.msra.mxu0 0.0
    %556 = vmatprep.subr.mxu0 0.0
    %557 = vmatpush1.xpose.msra.mxu0 0.0
    %558 = vmatprep.subr.mxu0 0.0
    %559 = vmatpush1.xpose.msra.mxu0 0.0
    %560 = vmatprep.subr.mxu0 0.0
    %561 = vmatpush1.xpose.msra.mxu0 0.0
    %562 = vmatprep.subr.mxu0 0.0
    %563 = vmatpush1.xpose.msra.mxu0 %v532
    %564 = vmatprep.subr.mxu0 0.0
    %565 = vmatpush1.xpose.msra.mxu0 %v530
    %566 = vmatprep.subr.mxu0 0.0
    %567 = vmatpush2.xpose.msra.mxu0 0.0
    %568 = vmatprep.subr.mxu0 0.0
    %569 = vmatpush2.xpose.msra.mxu0 0.0
    %570 = vmatprep.subr.mxu0 0.0
    %571 = vmatpush2.xpose.msra.mxu0 0.0
    %572 = vmatprep.subr.mxu0 0.0
    %573 = vmatpush2.xpose.msra.mxu0 0.0
    %574 = vmatprep.subr.mxu0 0.0
    %575 = vmatpush2.xpose.msra.mxu0 0.0
    %576 = vmatprep.subr.mxu0 0.0
    %577 = vmatpush2.xpose.msra.mxu0 0.0
    %578 = vmatprep.subr.mxu0 0.0
    %579 = vmatpush2.xpose.msra.mxu0 0.0
    %580 = vmatprep.subr.mxu0 0.0
    %581 = vmatpush2.xpose.msra.mxu0 0.0
    %582 = vmatprep.subr.mxu0 0.0
    %583 = vmatpush2.xpose.msra.mxu0 0.0
    %584 = vmatprep.subr.mxu0 0.0
    %585 = vmatpush2.xpose.msra.mxu0 0.0
    %586 = vmatprep.subr.mxu0 0.0
    %587 = vmatpush2.xpose.msra.mxu0 0.0
    %588 = vmatprep.subr.mxu0 0.0
    %589 = vmatpush2.xpose.msra.mxu0 0.0
    %590 = vmatprep.subr.mxu0 0.0
    %591 = vmatpush2.xpose.msra.mxu0 0.0
    %592 = vmatprep.subr.mxu0 0.0
    %593 = vmatpush2.xpose.msra.mxu0 0.0
    %594 = vmatprep.subr.mxu0 0.0
    %595 = vmatpush2.xpose.msra.mxu0 0.0
    %596 = vmatprep.subr.mxu0 0.0
    %597 = vmatpush2.xpose.msra.mxu0 0.0
    %598 = vmatprep.mubr.f32.mxu0 0.0
    %599 = vmatmul.mubr.f32.gmra.mxu0 %v526
    %v600 = vpop.f32.mrf.mxu0
    %v601 = vadd.f32 0.0, %v600
    %v602 = vpop.f32.mrf.mxu0
    %603 = vmatprep.mubr.f32.mxu0 0.0
    %604 = vmatmul.mubr.f32.gmra.mxu0 %v528
    %v605 = vpop.f32.mrf.mxu0
    %v606 = vadd.f32 0.0, %v605
    %v607 = vpop.f32.mrf.mxu0
    %608 = vdwg.mxu0
    %609 = vrot.lane.b32.xlu0 %v162, 96
    %v610 = vpop.permute.xlu0 %609
    %611 = vrot.lane.b32.xlu0 %v164, 96
    %v612 = vpop.permute.xlu0 %611
    %v613 = vsel %vm177, %v162, 0
    %v615 = vsel %vm177, %v164, 0
    %v617 = vsel %vm177, %v610, 0
    %v619 = vsel %vm177, %v612, 0
    %621 = vmatprep.subr.mxu0 0.0
    %622 = vmatpush1.xpose.msra.mxu0 0.0
    %623 = vmatprep.subr.mxu0 0.0
    %624 = vmatpush1.xpose.msra.mxu0 0.0
    %625 = vmatprep.subr.mxu0 0.0
    %626 = vmatpush1.xpose.msra.mxu0 0.0
    %627 = vmatprep.subr.mxu0 0.0
    %628 = vmatpush1.xpose.msra.mxu0 0.0
    %629 = vmatprep.subr.mxu0 0.0
    %630 = vmatpush1.xpose.msra.mxu0 0.0
    %631 = vmatprep.subr.mxu0 0.0
    %632 = vmatpush1.xpose.msra.mxu0 0.0
    %633 = vmatprep.subr.mxu0 0.0
    %634 = vmatpush1.xpose.msra.mxu0 0.0
    %635 = vmatprep.subr.mxu0 0.0
    %636 = vmatpush1.xpose.msra.mxu0 0.0
    %637 = vmatprep.subr.mxu0 0.0
    %638 = vmatpush1.xpose.msra.mxu0 0.0
    %639 = vmatprep.subr.mxu0 0.0
    %640 = vmatpush1.xpose.msra.mxu0 0.0
    %641 = vmatprep.subr.mxu0 0.0
    %642 = vmatpush1.xpose.msra.mxu0 0.0
    %643 = vmatprep.subr.mxu0 0.0
    %644 = vmatpush1.xpose.msra.mxu0 0.0
    %645 = vmatprep.subr.mxu0 0.0
    %646 = vmatpush1.xpose.msra.mxu0 0.0
    %647 = vmatprep.subr.mxu0 0.0
    %648 = vmatpush1.xpose.msra.mxu0 0.0
    %649 = vmatprep.subr.mxu0 0.0
    %650 = vmatpush1.xpose.msra.mxu0 %v619
    %651 = vmatprep.subr.mxu0 0.0
    %652 = vmatpush1.xpose.msra.mxu0 %v617
    %653 = vmatprep.subr.mxu0 0.0
    %654 = vmatpush2.xpose.msra.mxu0 0.0
    %655 = vmatprep.subr.mxu0 0.0
    %656 = vmatpush2.xpose.msra.mxu0 0.0
    %657 = vmatprep.subr.mxu0 0.0
    %658 = vmatpush2.xpose.msra.mxu0 0.0
    %659 = vmatprep.subr.mxu0 0.0
    %660 = vmatpush2.xpose.msra.mxu0 0.0
    %661 = vmatprep.subr.mxu0 0.0
    %662 = vmatpush2.xpose.msra.mxu0 0.0
    %663 = vmatprep.subr.mxu0 0.0
    %664 = vmatpush2.xpose.msra.mxu0 0.0
    %665 = vmatprep.subr.mxu0 0.0
    %666 = vmatpush2.xpose.msra.mxu0 0.0
    %667 = vmatprep.subr.mxu0 0.0
    %668 = vmatpush2.xpose.msra.mxu0 0.0
    %669 = vmatprep.subr.mxu0 0.0
    %670 = vmatpush2.xpose.msra.mxu0 0.0
    %671 = vmatprep.subr.mxu0 0.0
    %672 = vmatpush2.xpose.msra.mxu0 0.0
    %673 = vmatprep.subr.mxu0 0.0
    %674 = vmatpush2.xpose.msra.mxu0 0.0
    %675 = vmatprep.subr.mxu0 0.0
    %676 = vmatpush2.xpose.msra.mxu0 0.0
    %677 = vmatprep.subr.mxu0 0.0
    %678 = vmatpush2.xpose.msra.mxu0 0.0
    %679 = vmatprep.subr.mxu0 0.0
    %680 = vmatpush2.xpose.msra.mxu0 0.0
    %681 = vmatprep.subr.mxu0 0.0
    %682 = vmatpush2.xpose.msra.mxu0 0.0
    %683 = vmatprep.subr.mxu0 0.0
    %684 = vmatpush2.xpose.msra.mxu0 0.0
    %685 = vmatprep.mubr.f32.mxu0 0.0
    %686 = vmatmul.mubr.f32.gmra.mxu0 %v613
    %v687 = vpop.f32.mrf.mxu0
    %v688 = vadd.f32 0.0, %v687
    %v689 = vpop.f32.mrf.mxu0
    %690 = vmatprep.mubr.f32.mxu0 0.0
    %691 = vmatmul.mubr.f32.gmra.mxu0 %v615
    %v692 = vpop.f32.mrf.mxu0
    %v693 = vadd.f32 0.0, %v692
    %v694 = vpop.f32.mrf.mxu0
    %695 = vdwg.mxu0
    %696 = vrot.lane.b32.xlu0 %v166, 96
    %v697 = vpop.permute.xlu0 %696
    %698 = vrot.lane.b32.xlu0 %v168, 96
    %v699 = vpop.permute.xlu0 %698
    %v700 = vsel %vm177, %v166, 0
    %v702 = vsel %vm177, %v168, 0
    %v704 = vsel %vm177, %v697, 0
    %v706 = vsel %vm177, %v699, 0
    %708 = vmatprep.subr.mxu0 0.0
    %709 = vmatpush1.xpose.msra.mxu0 0.0
    %710 = vmatprep.subr.mxu0 0.0
    %711 = vmatpush1.xpose.msra.mxu0 0.0
    %712 = vmatprep.subr.mxu0 0.0
    %713 = vmatpush1.xpose.msra.mxu0 0.0
    %714 = vmatprep.subr.mxu0 0.0
    %715 = vmatpush1.xpose.msra.mxu0 0.0
    %716 = vmatprep.subr.mxu0 0.0
    %717 = vmatpush1.xpose.msra.mxu0 0.0
    %718 = vmatprep.subr.mxu0 0.0
    %719 = vmatpush1.xpose.msra.mxu0 0.0
    %720 = vmatprep.subr.mxu0 0.0
    %721 = vmatpush1.xpose.msra.mxu0 0.0
    %722 = vmatprep.subr.mxu0 0.0
    %723 = vmatpush1.xpose.msra.mxu0 0.0
    %724 = vmatprep.subr.mxu0 0.0
    %725 = vmatpush1.xpose.msra.mxu0 0.0
    %726 = vmatprep.subr.mxu0 0.0
    %727 = vmatpush1.xpose.msra.mxu0 0.0
    %728 = vmatprep.subr.mxu0 0.0
    %729 = vmatpush1.xpose.msra.mxu0 0.0
    %730 = vmatprep.subr.mxu0 0.0
    %731 = vmatpush1.xpose.msra.mxu0 0.0
    %732 = vmatprep.subr.mxu0 0.0
    %733 = vmatpush1.xpose.msra.mxu0 0.0
    %734 = vmatprep.subr.mxu0 0.0
    %735 = vmatpush1.xpose.msra.mxu0 0.0
    %736 = vmatprep.subr.mxu0 0.0
    %737 = vmatpush1.xpose.msra.mxu0 %v706
    %738 = vmatprep.subr.mxu0 0.0
    %739 = vmatpush1.xpose.msra.mxu0 %v704
    %740 = vmatprep.subr.mxu0 0.0
    %741 = vmatpush2.xpose.msra.mxu0 0.0
    %742 = vmatprep.subr.mxu0 0.0
    %743 = vmatpush2.xpose.msra.mxu0 0.0
    %744 = vmatprep.subr.mxu0 0.0
    %745 = vmatpush2.xpose.msra.mxu0 0.0
    %746 = vmatprep.subr.mxu0 0.0
    %747 = vmatpush2.xpose.msra.mxu0 0.0
    %748 = vmatprep.subr.mxu0 0.0
    %749 = vmatpush2.xpose.msra.mxu0 0.0
    %750 = vmatprep.subr.mxu0 0.0
    %751 = vmatpush2.xpose.msra.mxu0 0.0
    %752 = vmatprep.subr.mxu0 0.0
    %753 = vmatpush2.xpose.msra.mxu0 0.0
    %754 = vmatprep.subr.mxu0 0.0
    %755 = vmatpush2.xpose.msra.mxu0 0.0
    %756 = vmatprep.subr.mxu0 0.0
    %757 = vmatpush2.xpose.msra.mxu0 0.0
    %758 = vmatprep.subr.mxu0 0.0
    %759 = vmatpush2.xpose.msra.mxu0 0.0
    %760 = vmatprep.subr.mxu0 0.0
    %761 = vmatpush2.xpose.msra.mxu0 0.0
    %762 = vmatprep.subr.mxu0 0.0
    %763 = vmatpush2.xpose.msra.mxu0 0.0
    %764 = vmatprep.subr.mxu0 0.0
    %765 = vmatpush2.xpose.msra.mxu0 0.0
    %766 = vmatprep.subr.mxu0 0.0
    %767 = vmatpush2.xpose.msra.mxu0 0.0
    %768 = vmatprep.subr.mxu0 0.0
    %769 = vmatpush2.xpose.msra.mxu0 0.0
    %770 = vmatprep.subr.mxu0 0.0
    %771 = vmatpush2.xpose.msra.mxu0 0.0
    %772 = vmatprep.mubr.f32.mxu0 0.0
    %773 = vmatmul.mubr.f32.gmra.mxu0 %v700
    %v774 = vpop.f32.mrf.mxu0
    %v775 = vadd.f32 0.0, %v774
    %v776 = vpop.f32.mrf.mxu0
    %777 = vmatprep.mubr.f32.mxu0 0.0
    %778 = vmatmul.mubr.f32.gmra.mxu0 %v702
    %v779 = vpop.f32.mrf.mxu0
    %v780 = vadd.f32 0.0, %v779
    %v781 = vpop.f32.mrf.mxu0
    %782 = vdwg.mxu0
    %783 = vrot.lane.b32.xlu0 %v170, 96
    %v784 = vpop.permute.xlu0 %783
    %785 = vrot.lane.b32.xlu0 %v172, 96
    %v786 = vpop.permute.xlu0 %785
    %v787 = vsel %vm177, %v170, 0
    %v789 = vsel %vm177, %v172, 0
    %v791 = vsel %vm177, %v784, 0
    %v793 = vsel %vm177, %v786, 0
    %795 = vmatprep.subr.mxu0 0.0
    %796 = vmatpush1.xpose.msra.mxu0 0.0
    %797 = vmatprep.subr.mxu0 0.0
    %798 = vmatpush1.xpose.msra.mxu0 0.0
    %799 = vmatprep.subr.mxu0 0.0
    %800 = vmatpush1.xpose.msra.mxu0 0.0
    %801 = vmatprep.subr.mxu0 0.0
    %802 = vmatpush1.xpose.msra.mxu0 0.0
    %803 = vmatprep.subr.mxu0 0.0
    %804 = vmatpush1.xpose.msra.mxu0 0.0
    %805 = vmatprep.subr.mxu0 0.0
    %806 = vmatpush1.xpose.msra.mxu0 0.0
    %807 = vmatprep.subr.mxu0 0.0
    %808 = vmatpush1.xpose.msra.mxu0 0.0
    %809 = vmatprep.subr.mxu0 0.0
    %810 = vmatpush1.xpose.msra.mxu0 0.0
    %811 = vmatprep.subr.mxu0 0.0
    %812 = vmatpush1.xpose.msra.mxu0 0.0
    %813 = vmatprep.subr.mxu0 0.0
    %814 = vmatpush1.xpose.msra.mxu0 0.0
    %815 = vmatprep.subr.mxu0 0.0
    %816 = vmatpush1.xpose.msra.mxu0 0.0
    %817 = vmatprep.subr.mxu0 0.0
    %818 = vmatpush1.xpose.msra.mxu0 0.0
    %819 = vmatprep.subr.mxu0 0.0
    %820 = vmatpush1.xpose.msra.mxu0 0.0
    %821 = vmatprep.subr.mxu0 0.0
    %822 = vmatpush1.xpose.msra.mxu0 0.0
    %823 = vmatprep.subr.mxu0 0.0
    %824 = vmatpush1.xpose.msra.mxu0 %v793
    %825 = vmatprep.subr.mxu0 0.0
    %826 = vmatpush1.xpose.msra.mxu0 %v791
    %827 = vmatprep.subr.mxu0 0.0
    %828 = vmatpush2.xpose.msra.mxu0 0.0
    %829 = vmatprep.subr.mxu0 0.0
    %830 = vmatpush2.xpose.msra.mxu0 0.0
    %831 = vmatprep.subr.mxu0 0.0
    %832 = vmatpush2.xpose.msra.mxu0 0.0
    %833 = vmatprep.subr.mxu0 0.0
    %834 = vmatpush2.xpose.msra.mxu0 0.0
    %835 = vmatprep.subr.mxu0 0.0
    %836 = vmatpush2.xpose.msra.mxu0 0.0
    %837 = vmatprep.subr.mxu0 0.0
    %838 = vmatpush2.xpose.msra.mxu0 0.0
    %839 = vmatprep.subr.mxu0 0.0
    %840 = vmatpush2.xpose.msra.mxu0 0.0
    %841 = vmatprep.subr.mxu0 0.0
    %842 = vmatpush2.xpose.msra.mxu0 0.0
    %843 = vmatprep.subr.mxu0 0.0
    %844 = vmatpush2.xpose.msra.mxu0 0.0
    %845 = vmatprep.subr.mxu0 0.0
    %846 = vmatpush2.xpose.msra.mxu0 0.0
    %847 = vmatprep.subr.mxu0 0.0
    %848 = vmatpush2.xpose.msra.mxu0 0.0
    %849 = vmatprep.subr.mxu0 0.0
    %850 = vmatpush2.xpose.msra.mxu0 0.0
    %851 = vmatprep.subr.mxu0 0.0
    %852 = vmatpush2.xpose.msra.mxu0 0.0
    %853 = vmatprep.subr.mxu0 0.0
    %854 = vmatpush2.xpose.msra.mxu0 0.0
    %855 = vmatprep.subr.mxu0 0.0
    %856 = vmatpush2.xpose.msra.mxu0 0.0
    %857 = vmatprep.subr.mxu0 0.0
    %858 = vmatpush2.xpose.msra.mxu0 0.0
    %859 = vmatprep.mubr.f32.mxu0 0.0
    %860 = vmatmul.mubr.f32.gmra.mxu0 %v787
    %v861 = vpop.f32.mrf.mxu0
    %v862 = vadd.f32 0.0, %v861
    %v863 = vpop.f32.mrf.mxu0
    %864 = vmatprep.mubr.f32.mxu0 0.0
    %865 = vmatmul.mubr.f32.gmra.mxu0 %v789
    %v866 = vpop.f32.mrf.mxu0
    %v867 = vadd.f32 0.0, %v866
    %v868 = vpop.f32.mrf.mxu0
    %869 = vdwg.mxu0
    %vm870 = vcmask 130048
    %v871 = vsel %vm870, %v253, -inf
    %872 = vmax.xlane.f32.xlu0 %v871
    %v873 = vpop.xlane.xlu0 %872
    %v874 = vsel %vm870, %v258, -inf
    %875 = vmax.xlane.f32.xlu0 %v874
    %v876 = vpop.xlane.xlu0 %875
    %v877 = vsel %vm870, %v340, -inf
    %878 = vmax.xlane.f32.xlu0 %v877
    %v879 = vpop.xlane.xlu0 %878
    %v880 = vsel %vm870, %v345, -inf
    %881 = vmax.xlane.f32.xlu0 %v880
    %v882 = vpop.xlane.xlu0 %881
    %v883 = vsel %vm870, %v427, -inf
    %884 = vmax.xlane.f32.xlu0 %v883
    %v885 = vpop.xlane.xlu0 %884
    %v886 = vsel %vm870, %v432, -inf
    %887 = vmax.xlane.f32.xlu0 %v886
    %v888 = vpop.xlane.xlu0 %887
    %v889 = vsel %vm870, %v514, -inf
    %890 = vmax.xlane.f32.xlu0 %v889
    %v891 = vpop.xlane.xlu0 %890
    %v892 = vsel %vm870, %v519, -inf
    %893 = vmax.xlane.f32.xlu0 %v892
    %v894 = vpop.xlane.xlu0 %893
    %v895 = vsel %vm870, %v601, -inf
    %896 = vmax.xlane.f32.xlu0 %v895
    %v897 = vpop.xlane.xlu0 %896
    %v898 = vsel %vm870, %v606, -inf
    %899 = vmax.xlane.f32.xlu0 %v898
    %v900 = vpop.xlane.xlu0 %899
    %v901 = vsel %vm870, %v688, -inf
    %902 = vmax.xlane.f32.xlu0 %v901
    %v903 = vpop.xlane.xlu0 %902
    %v904 = vsel %vm870, %v693, -inf
    %905 = vmax.xlane.f32.xlu0 %v904
    %v906 = vpop.xlane.xlu0 %905
    %v907 = vsel %vm870, %v775, -inf
    %908 = vmax.xlane.f32.xlu0 %v907
    %v909 = vpop.xlane.xlu0 %908
    %v910 = vsel %vm870, %v780, -inf
    %911 = vmax.xlane.f32.xlu0 %v910
    %v912 = vpop.xlane.xlu0 %911
    %v913 = vsel %vm870, %v862, -inf
    %914 = vmax.xlane.f32.xlu0 %v913
    %v915 = vpop.xlane.xlu0 %914
    %v916 = vsel %vm870, %v867, -inf
    %917 = vmax.xlane.f32.xlu0 %v916
    %v918 = vpop.xlane.xlu0 %917
    %v919 = vsub.f32 %v253, %v873
    %v920 = vsub.f32 %v258, %v876
    %v921 = vsub.f32 %v340, %v879
    %v922 = vsub.f32 %v345, %v882
    %v923 = vsub.f32 %v427, %v885
    %v924 = vsub.f32 %v432, %v888
    %v925 = vsub.f32 %v514, %v891
    %v926 = vsub.f32 %v519, %v894
    %v927 = vsub.f32 %v601, %v897
    %v928 = vsub.f32 %v606, %v900
    %v929 = vsub.f32 %v688, %v903
    %v930 = vsub.f32 %v693, %v906
    %v931 = vsub.f32 %v775, %v909
    %v932 = vsub.f32 %v780, %v912
    %v933 = vsub.f32 %v862, %v915
    %v934 = vsub.f32 %v867, %v918
    %v935 = vmul.f32 %v919, 1.442695
    %v936 = vpow.pop %v935
    %v937 = vmul.f32 %v920, 1.442695
    %v938 = vpow.pop %v937
    %v939 = vmul.f32 %v921, 1.442695
    %v940 = vpow.pop %v939
    %v941 = vmul.f32 %v922, 1.442695
    %v942 = vpow.pop %v941
    %v943 = vmul.f32 %v923, 1.442695
    %v944 = vpow.pop %v943
    %v945 = vmul.f32 %v924, 1.442695
    %v946 = vpow.pop %v945
    %v947 = vmul.f32 %v925, 1.442695
    %v948 = vpow.pop %v947
    %v949 = vmul.f32 %v926, 1.442695
    %v950 = vpow.pop %v949
    %v951 = vmul.f32 %v927, 1.442695
    %v952 = vpow.pop %v951
    %v953 = vmul.f32 %v928, 1.442695
    %v954 = vpow.pop %v953
    %v955 = vmul.f32 %v929, 1.442695
    %v956 = vpow.pop %v955
    %v957 = vmul.f32 %v930, 1.442695
    %v958 = vpow.pop %v957
    %v959 = vmul.f32 %v931, 1.442695
    %v960 = vpow.pop %v959
    %v961 = vmul.f32 %v932, 1.442695
    %v962 = vpow.pop %v961
    %v963 = vmul.f32 %v933, 1.442695
    %v964 = vpow.pop %v963
    %v965 = vmul.f32 %v934, 1.442695
    %v966 = vpow.pop %v965
    %v967 = vsel %vm870, %v936, 0.0
    %968 = vadd.xlane.f32.xlu0 %v967
    %v969 = vpop.xlane.xlu0 %968
    %v970 = vsel %vm870, %v938, 0.0
    %971 = vadd.xlane.f32.xlu0 %v970
    %v972 = vpop.xlane.xlu0 %971
    %v973 = vsel %vm870, %v940, 0.0
    %974 = vadd.xlane.f32.xlu0 %v973
    %v975 = vpop.xlane.xlu0 %974
    %v976 = vsel %vm870, %v942, 0.0
    %977 = vadd.xlane.f32.xlu0 %v976
    %v978 = vpop.xlane.xlu0 %977
    %v979 = vsel %vm870, %v944, 0.0
    %980 = vadd.xlane.f32.xlu0 %v979
    %v981 = vpop.xlane.xlu0 %980
    %v982 = vsel %vm870, %v946, 0.0
    %983 = vadd.xlane.f32.xlu0 %v982
    %v984 = vpop.xlane.xlu0 %983
    %v985 = vsel %vm870, %v948, 0.0
    %986 = vadd.xlane.f32.xlu0 %v985
    %v987 = vpop.xlane.xlu0 %986
    %v988 = vsel %vm870, %v950, 0.0
    %989 = vadd.xlane.f32.xlu0 %v988
    %v990 = vpop.xlane.xlu0 %989
    %v991 = vsel %vm870, %v952, 0.0
    %992 = vadd.xlane.f32.xlu0 %v991
    %v993 = vpop.xlane.xlu0 %992
    %v994 = vsel %vm870, %v954, 0.0
    %995 = vadd.xlane.f32.xlu0 %v994
    %v996 = vpop.xlane.xlu0 %995
    %v997 = vsel %vm870, %v956, 0.0
    %998 = vadd.xlane.f32.xlu0 %v997
    %v999 = vpop.xlane.xlu0 %998
    %v1000 = vsel %vm870, %v958, 0.0
    %1001 = vadd.xlane.f32.xlu0 %v1000
    %v1002 = vpop.xlane.xlu0 %1001
    %v1003 = vsel %vm870, %v960, 0.0
    %1004 = vadd.xlane.f32.xlu0 %v1003
    %v1005 = vpop.xlane.xlu0 %1004
    %v1006 = vsel %vm870, %v962, 0.0
    %1007 = vadd.xlane.f32.xlu0 %v1006
    %v1008 = vpop.xlane.xlu0 %1007
    %v1009 = vsel %vm870, %v964, 0.0
    %1010 = vadd.xlane.f32.xlu0 %v1009
    %v1011 = vpop.xlane.xlu0 %1010
    %v1012 = vsel %vm870, %v966, 0.0
    %1013 = vadd.xlane.f32.xlu0 %v1012
    %v1014 = vpop.xlane.xlu0 %1013
    %v1015 = vrcp.pop %v969
    %v1016 = vrcp.pop %v972
    %v1017 = vrcp.pop %v975
    %v1018 = vrcp.pop %v978
    %v1019 = vrcp.pop %v981
    %v1020 = vrcp.pop %v984
    %v1021 = vrcp.pop %v987
    %v1022 = vrcp.pop %v990
    %v1023 = vrcp.pop %v993
    %v1024 = vrcp.pop %v996
    %v1025 = vrcp.pop %v999
    %v1026 = vrcp.pop %v1002
    %v1027 = vrcp.pop %v1005
    %v1028 = vrcp.pop %v1008
    %v1029 = vrcp.pop %v1011
    %v1030 = vrcp.pop %v1014
    %v1031 = vmul.f32 %v936, %v1015
    %v1032 = vmul.f32 %v938, %v1016
    %v1033 = vmul.f32 %v940, %v1017
    %v1034 = vmul.f32 %v942, %v1018
    %v1035 = vmul.f32 %v944, %v1019
    %v1036 = vmul.f32 %v946, %v1020
    %v1037 = vmul.f32 %v948, %v1021
    %v1038 = vmul.f32 %v950, %v1022
    %v1039 = vmul.f32 %v952, %v1023
    %v1040 = vmul.f32 %v954, %v1024
    %v1041 = vmul.f32 %v956, %v1025
    %v1042 = vmul.f32 %v958, %v1026
    %v1043 = vmul.f32 %v960, %v1027
    %v1044 = vmul.f32 %v962, %v1028
    %v1045 = vmul.f32 %v964, %v1029
    %v1046 = vmul.f32 %v966, %v1030
    %1047 = vrot.lane.b32.xlu0 %v131, 64
    %v1048 = vpop.permute.xlu0 %1047
    %1049 = vrot.lane.b32.xlu0 %v134, 64
    %v1050 = vpop.permute.xlu0 %1049
    %v1054 = vsel %vm870, %v1031, 0
    %v1057 = vsel %vm870, %v1032, 0
    %1059 = vmatprep.subr.mxu0 0.0
    %1060 = vmatpush1.msra.mxu0 0.0
    %1061 = vmatprep.subr.mxu0 0.0
    %1062 = vmatpush1.msra.mxu0 0.0
    %1063 = vmatprep.subr.mxu0 0.0
    %1064 = vmatpush1.msra.mxu0 0.0
    %1065 = vmatprep.subr.mxu0 0.0
    %1066 = vmatpush1.msra.mxu0 0.0
    %1067 = vmatprep.subr.mxu0 0.0
    %1068 = vmatpush1.msra.mxu0 0.0
    %1069 = vmatprep.subr.mxu0 0.0
    %1070 = vmatpush1.msra.mxu0 0.0
    %1071 = vmatprep.subr.mxu0 0.0
    %1072 = vmatpush1.msra.mxu0 0.0
    %1073 = vmatprep.subr.mxu0 0.0
    %1074 = vmatpush1.msra.mxu0 0.0
    %1075 = vmatprep.subr.mxu0 0.0
    %1076 = vmatpush1.msra.mxu0 0.0
    %1077 = vmatprep.subr.mxu0 0.0
    %1078 = vmatpush1.msra.mxu0 0.0
    %1079 = vmatprep.subr.mxu0 0.0
    %1080 = vmatpush1.msra.mxu0 0.0
    %1081 = vmatprep.subr.mxu0 0.0
    %1082 = vmatpush1.msra.mxu0 0.0
    %1083 = vmatprep.subr.mxu0 0.0
    %1084 = vmatpush1.msra.mxu0 0.0
    %1085 = vmatprep.subr.mxu0 0.0
    %1086 = vmatpush1.msra.mxu0 0.0
    %1087 = vmatprep.subr.mxu0 0.0
    %1088 = vmatpush1.msra.mxu0 %v1050
    %1089 = vmatprep.subr.mxu0 0.0
    %1090 = vmatpush1.msra.mxu0 %v1048
    %1091 = vmatprep.subr.mxu0 0.0
    %1092 = vmatpush2.msra.mxu0 0.0
    %1093 = vmatprep.subr.mxu0 0.0
    %1094 = vmatpush2.msra.mxu0 0.0
    %1095 = vmatprep.subr.mxu0 0.0
    %1096 = vmatpush2.msra.mxu0 0.0
    %1097 = vmatprep.subr.mxu0 0.0
    %1098 = vmatpush2.msra.mxu0 0.0
    %1099 = vmatprep.subr.mxu0 0.0
    %1100 = vmatpush2.msra.mxu0 0.0
    %1101 = vmatprep.subr.mxu0 0.0
    %1102 = vmatpush2.msra.mxu0 0.0
    %1103 = vmatprep.subr.mxu0 0.0
    %1104 = vmatpush2.msra.mxu0 0.0
    %1105 = vmatprep.subr.mxu0 0.0
    %1106 = vmatpush2.msra.mxu0 0.0
    %1107 = vmatprep.subr.mxu0 0.0
    %1108 = vmatpush2.msra.mxu0 0.0
    %1109 = vmatprep.subr.mxu0 0.0
    %1110 = vmatpush2.msra.mxu0 0.0
    %1111 = vmatprep.subr.mxu0 0.0
    %1112 = vmatpush2.msra.mxu0 0.0
    %1113 = vmatprep.subr.mxu0 0.0
    %1114 = vmatpush2.msra.mxu0 0.0
    %1115 = vmatprep.subr.mxu0 0.0
    %1116 = vmatpush2.msra.mxu0 0.0
    %1117 = vmatprep.subr.mxu0 0.0
    %1118 = vmatpush2.msra.mxu0 0.0
    %1119 = vmatprep.subr.mxu0 0.0
    %1120 = vmatpush2.msra.mxu0 0.0
    %1121 = vmatprep.subr.mxu0 0.0
    %1122 = vmatpush2.msra.mxu0 0.0
    %1123 = vmatprep.mubr.f32.mxu0 0.0
    %1124 = vmatmul.mubr.f32.gmra.mxu0 %v1054
    %v1125 = vpop.f32.mrf.mxu0
    %v1126 = vadd.f32 0.0, %v1125
    %v1127 = vpop.f32.mrf.mxu0
    %1128 = vmatprep.mubr.f32.mxu0 0.0
    %1129 = vmatmul.mubr.f32.gmra.mxu0 %v1057
    %v1130 = vpop.f32.mrf.mxu0
    %v1131 = vadd.f32 0.0, %v1130
    %v1132 = vpop.f32.mrf.mxu0
    %1133 = vdwg.mxu0
    %1134 = vrot.lane.b32.xlu0 %v139, 64
    %v1135 = vpop.permute.xlu0 %1134
    %1136 = vrot.lane.b32.xlu0 %v142, 64
    %v1137 = vpop.permute.xlu0 %1136
    %v1141 = vsel %vm870, %v1033, 0
    %v1144 = vsel %vm870, %v1034, 0
    %1146 = vmatprep.subr.mxu0 0.0
    %1147 = vmatpush1.msra.mxu0 0.0
    %1148 = vmatprep.subr.mxu0 0.0
    %1149 = vmatpush1.msra.mxu0 0.0
    %1150 = vmatprep.subr.mxu0 0.0
    %1151 = vmatpush1.msra.mxu0 0.0
    %1152 = vmatprep.subr.mxu0 0.0
    %1153 = vmatpush1.msra.mxu0 0.0
    %1154 = vmatprep.subr.mxu0 0.0
    %1155 = vmatpush1.msra.mxu0 0.0
    %1156 = vmatprep.subr.mxu0 0.0
    %1157 = vmatpush1.msra.mxu0 0.0
    %1158 = vmatprep.subr.mxu0 0.0
    %1159 = vmatpush1.msra.mxu0 0.0
    %1160 = vmatprep.subr.mxu0 0.0
    %1161 = vmatpush1.msra.mxu0 0.0
    %1162 = vmatprep.subr.mxu0 0.0
    %1163 = vmatpush1.msra.mxu0 0.0
    %1164 = vmatprep.subr.mxu0 0.0
    %1165 = vmatpush1.msra.mxu0 0.0
    %1166 = vmatprep.subr.mxu0 0.0
    %1167 = vmatpush1.msra.mxu0 0.0
    %1168 = vmatprep.subr.mxu0 0.0
    %1169 = vmatpush1.msra.mxu0 0.0
    %1170 = vmatprep.subr.mxu0 0.0
    %1171 = vmatpush1.msra.mxu0 0.0
    %1172 = vmatprep.subr.mxu0 0.0
    %1173 = vmatpush1.msra.mxu0 0.0
    %1174 = vmatprep.subr.mxu0 0.0
    %1175 = vmatpush1.msra.mxu0 %v1137
    %1176 = vmatprep.subr.mxu0 0.0
    %1177 = vmatpush1.msra.mxu0 %v1135
    %1178 = vmatprep.subr.mxu0 0.0
    %1179 = vmatpush2.msra.mxu0 0.0
    %1180 = vmatprep.subr.mxu0 0.0
    %1181 = vmatpush2.msra.mxu0 0.0
    %1182 = vmatprep.subr.mxu0 0.0
    %1183 = vmatpush2.msra.mxu0 0.0
    %1184 = vmatprep.subr.mxu0 0.0
    %1185 = vmatpush2.msra.mxu0 0.0
    %1186 = vmatprep.subr.mxu0 0.0
    %1187 = vmatpush2.msra.mxu0 0.0
    %1188 = vmatprep.subr.mxu0 0.0
    %1189 = vmatpush2.msra.mxu0 0.0
    %1190 = vmatprep.subr.mxu0 0.0
    %1191 = vmatpush2.msra.mxu0 0.0
    %1192 = vmatprep.subr.mxu0 0.0
    %1193 = vmatpush2.msra.mxu0 0.0
    %1194 = vmatprep.subr.mxu0 0.0
    %1195 = vmatpush2.msra.mxu0 0.0
    %1196 = vmatprep.subr.mxu0 0.0
    %1197 = vmatpush2.msra.mxu0 0.0
    %1198 = vmatprep.subr.mxu0 0.0
    %1199 = vmatpush2.msra.mxu0 0.0
    %1200 = vmatprep.subr.mxu0 0.0
    %1201 = vmatpush2.msra.mxu0 0.0
    %1202 = vmatprep.subr.mxu0 0.0
    %1203 = vmatpush2.msra.mxu0 0.0
    %1204 = vmatprep.subr.mxu0 0.0
    %1205 = vmatpush2.msra.mxu0 0.0
    %1206 = vmatprep.subr.mxu0 0.0
    %1207 = vmatpush2.msra.mxu0 0.0
    %1208 = vmatprep.subr.mxu0 0.0
    %1209 = vmatpush2.msra.mxu0 0.0
    %1210 = vmatprep.mubr.f32.mxu0 0.0
    %1211 = vmatmul.mubr.f32.gmra.mxu0 %v1141
    %v1212 = vpop.f32.mrf.mxu0
    %v1213 = vadd.f32 0.0, %v1212
    %v1214 = vpop.f32.mrf.mxu0
    %1215 = vmatprep.mubr.f32.mxu0 0.0
    %1216 = vmatmul.mubr.f32.gmra.mxu0 %v1144
    %v1217 = vpop.f32.mrf.mxu0
    %v1218 = vadd.f32 0.0, %v1217
    %v1219 = vpop.f32.mrf.mxu0
    %1220 = vdwg.mxu0
    %1221 = vrot.lane.b32.xlu0 %v150, 64
    %v1222 = vpop.permute.xlu0 %1221
    %1223 = vrot.lane.b32.xlu0 %v152, 64
    %v1224 = vpop.permute.xlu0 %1223
    %v1228 = vsel %vm870, %v1035, 0
    %v1231 = vsel %vm870, %v1036, 0
    %1233 = vmatprep.subr.mxu0 0.0
    %1234 = vmatpush1.msra.mxu0 0.0
    %1235 = vmatprep.subr.mxu0 0.0
    %1236 = vmatpush1.msra.mxu0 0.0
    %1237 = vmatprep.subr.mxu0 0.0
    %1238 = vmatpush1.msra.mxu0 0.0
    %1239 = vmatprep.subr.mxu0 0.0
    %1240 = vmatpush1.msra.mxu0 0.0
    %1241 = vmatprep.subr.mxu0 0.0
    %1242 = vmatpush1.msra.mxu0 0.0
    %1243 = vmatprep.subr.mxu0 0.0
    %1244 = vmatpush1.msra.mxu0 0.0
    %1245 = vmatprep.subr.mxu0 0.0
    %1246 = vmatpush1.msra.mxu0 0.0
    %1247 = vmatprep.subr.mxu0 0.0
    %1248 = vmatpush1.msra.mxu0 0.0
    %1249 = vmatprep.subr.mxu0 0.0
    %1250 = vmatpush1.msra.mxu0 0.0
    %1251 = vmatprep.subr.mxu0 0.0
    %1252 = vmatpush1.msra.mxu0 0.0
    %1253 = vmatprep.subr.mxu0 0.0
    %1254 = vmatpush1.msra.mxu0 0.0
    %1255 = vmatprep.subr.mxu0 0.0
    %1256 = vmatpush1.msra.mxu0 0.0
    %1257 = vmatprep.subr.mxu0 0.0
    %1258 = vmatpush1.msra.mxu0 0.0
    %1259 = vmatprep.subr.mxu0 0.0
    %1260 = vmatpush1.msra.mxu0 0.0
    %1261 = vmatprep.subr.mxu0 0.0
    %1262 = vmatpush1.msra.mxu0 %v1224
    %1263 = vmatprep.subr.mxu0 0.0
    %1264 = vmatpush1.msra.mxu0 %v1222
    %1265 = vmatprep.subr.mxu0 0.0
    %1266 = vmatpush2.msra.mxu0 0.0
    %1267 = vmatprep.subr.mxu0 0.0
    %1268 = vmatpush2.msra.mxu0 0.0
    %1269 = vmatprep.subr.mxu0 0.0
    %1270 = vmatpush2.msra.mxu0 0.0
    %1271 = vmatprep.subr.mxu0 0.0
    %1272 = vmatpush2.msra.mxu0 0.0
    %1273 = vmatprep.subr.mxu0 0.0
    %1274 = vmatpush2.msra.mxu0 0.0
    %1275 = vmatprep.subr.mxu0 0.0
    %1276 = vmatpush2.msra.mxu0 0.0
    %1277 = vmatprep.subr.mxu0 0.0
    %1278 = vmatpush2.msra.mxu0 0.0
    %1279 = vmatprep.subr.mxu0 0.0
    %1280 = vmatpush2.msra.mxu0 0.0
    %1281 = vmatprep.subr.mxu0 0.0
    %1282 = vmatpush2.msra.mxu0 0.0
    %1283 = vmatprep.subr.mxu0 0.0
    %1284 = vmatpush2.msra.mxu0 0.0
    %1285 = vmatprep.subr.mxu0 0.0
    %1286 = vmatpush2.msra.mxu0 0.0
    %1287 = vmatprep.subr.mxu0 0.0
    %1288 = vmatpush2.msra.mxu0 0.0
    %1289 = vmatprep.subr.mxu0 0.0
    %1290 = vmatpush2.msra.mxu0 0.0
    %1291 = vmatprep.subr.mxu0 0.0
    %1292 = vmatpush2.msra.mxu0 0.0
    %1293 = vmatprep.subr.mxu0 0.0
    %1294 = vmatpush2.msra.mxu0 0.0
    %1295 = vmatprep.subr.mxu0 0.0
    %1296 = vmatpush2.msra.mxu0 0.0
    %1297 = vmatprep.mubr.f32.mxu0 0.0
    %1298 = vmatmul.mubr.f32.gmra.mxu0 %v1228
    %v1299 = vpop.f32.mrf.mxu0
    %v1300 = vadd.f32 0.0, %v1299
    %v1301 = vpop.f32.mrf.mxu0
    %1302 = vmatprep.mubr.f32.mxu0 0.0
    %1303 = vmatmul.mubr.f32.gmra.mxu0 %v1231
    %v1304 = vpop.f32.mrf.mxu0
    %v1305 = vadd.f32 0.0, %v1304
    %v1306 = vpop.f32.mrf.mxu0
    %1307 = vdwg.mxu0
    %1308 = vrot.lane.b32.xlu0 %v154, 64
    %v1309 = vpop.permute.xlu0 %1308
    %1310 = vrot.lane.b32.xlu0 %v156, 64
    %v1311 = vpop.permute.xlu0 %1310
    %v1315 = vsel %vm870, %v1037, 0
    %v1318 = vsel %vm870, %v1038, 0
    %1320 = vmatprep.subr.mxu0 0.0
    %1321 = vmatpush1.msra.mxu0 0.0
    %1322 = vmatprep.subr.mxu0 0.0
    %1323 = vmatpush1.msra.mxu0 0.0
    %1324 = vmatprep.subr.mxu0 0.0
    %1325 = vmatpush1.msra.mxu0 0.0
    %1326 = vmatprep.subr.mxu0 0.0
    %1327 = vmatpush1.msra.mxu0 0.0
    %1328 = vmatprep.subr.mxu0 0.0
    %1329 = vmatpush1.msra.mxu0 0.0
    %1330 = vmatprep.subr.mxu0 0.0
    %1331 = vmatpush1.msra.mxu0 0.0
    %1332 = vmatprep.subr.mxu0 0.0
    %1333 = vmatpush1.msra.mxu0 0.0
    %1334 = vmatprep.subr.mxu0 0.0
    %1335 = vmatpush1.msra.mxu0 0.0
    %1336 = vmatprep.subr.mxu0 0.0
    %1337 = vmatpush1.msra.mxu0 0.0
    %1338 = vmatprep.subr.mxu0 0.0
    %1339 = vmatpush1.msra.mxu0 0.0
    %1340 = vmatprep.subr.mxu0 0.0
    %1341 = vmatpush1.msra.mxu0 0.0
    %1342 = vmatprep.subr.mxu0 0.0
    %1343 = vmatpush1.msra.mxu0 0.0
    %1344 = vmatprep.subr.mxu0 0.0
    %1345 = vmatpush1.msra.mxu0 0.0
    %1346 = vmatprep.subr.mxu0 0.0
    %1347 = vmatpush1.msra.mxu0 0.0
    %1348 = vmatprep.subr.mxu0 0.0
    %1349 = vmatpush1.msra.mxu0 %v1311
    %1350 = vmatprep.subr.mxu0 0.0
    %1351 = vmatpush1.msra.mxu0 %v1309
    %1352 = vmatprep.subr.mxu0 0.0
    %1353 = vmatpush2.msra.mxu0 0.0
    %1354 = vmatprep.subr.mxu0 0.0
    %1355 = vmatpush2.msra.mxu0 0.0
    %1356 = vmatprep.subr.mxu0 0.0
    %1357 = vmatpush2.msra.mxu0 0.0
    %1358 = vmatprep.subr.mxu0 0.0
    %1359 = vmatpush2.msra.mxu0 0.0
    %1360 = vmatprep.subr.mxu0 0.0
    %1361 = vmatpush2.msra.mxu0 0.0
    %1362 = vmatprep.subr.mxu0 0.0
    %1363 = vmatpush2.msra.mxu0 0.0
    %1364 = vmatprep.subr.mxu0 0.0
    %1365 = vmatpush2.msra.mxu0 0.0
    %1366 = vmatprep.subr.mxu0 0.0
    %1367 = vmatpush2.msra.mxu0 0.0
    %1368 = vmatprep.subr.mxu0 0.0
    %1369 = vmatpush2.msra.mxu0 0.0
    %1370 = vmatprep.subr.mxu0 0.0
    %1371 = vmatpush2.msra.mxu0 0.0
    %1372 = vmatprep.subr.mxu0 0.0
    %1373 = vmatpush2.msra.mxu0 0.0
    %1374 = vmatprep.subr.mxu0 0.0
    %1375 = vmatpush2.msra.mxu0 0.0
    %1376 = vmatprep.subr.mxu0 0.0
    %1377 = vmatpush2.msra.mxu0 0.0
    %1378 = vmatprep.subr.mxu0 0.0
    %1379 = vmatpush2.msra.mxu0 0.0
    %1380 = vmatprep.subr.mxu0 0.0
    %1381 = vmatpush2.msra.mxu0 0.0
    %1382 = vmatprep.subr.mxu0 0.0
    %1383 = vmatpush2.msra.mxu0 0.0
    %1384 = vmatprep.mubr.f32.mxu0 0.0
    %1385 = vmatmul.mubr.f32.gmra.mxu0 %v1315
    %v1386 = vpop.f32.mrf.mxu0
    %v1387 = vadd.f32 0.0, %v1386
    %v1388 = vpop.f32.mrf.mxu0
    %1389 = vmatprep.mubr.f32.mxu0 0.0
    %1390 = vmatmul.mubr.f32.gmra.mxu0 %v1318
    %v1391 = vpop.f32.mrf.mxu0
    %v1392 = vadd.f32 0.0, %v1391
    %v1393 = vpop.f32.mrf.mxu0
    %1394 = vdwg.mxu0
    %1395 = vrot.lane.b32.xlu0 %v158, 64
    %v1396 = vpop.permute.xlu0 %1395
    %1397 = vrot.lane.b32.xlu0 %v160, 64
    %v1398 = vpop.permute.xlu0 %1397
    %v1402 = vsel %vm870, %v1039, 0
    %v1405 = vsel %vm870, %v1040, 0
    %1407 = vmatprep.subr.mxu0 0.0
    %1408 = vmatpush1.msra.mxu0 0.0
    %1409 = vmatprep.subr.mxu0 0.0
    %1410 = vmatpush1.msra.mxu0 0.0
    %1411 = vmatprep.subr.mxu0 0.0
    %1412 = vmatpush1.msra.mxu0 0.0
    %1413 = vmatprep.subr.mxu0 0.0
    %1414 = vmatpush1.msra.mxu0 0.0
    %1415 = vmatprep.subr.mxu0 0.0
    %1416 = vmatpush1.msra.mxu0 0.0
    %1417 = vmatprep.subr.mxu0 0.0
    %1418 = vmatpush1.msra.mxu0 0.0
    %1419 = vmatprep.subr.mxu0 0.0
    %1420 = vmatpush1.msra.mxu0 0.0
    %1421 = vmatprep.subr.mxu0 0.0
    %1422 = vmatpush1.msra.mxu0 0.0
    %1423 = vmatprep.subr.mxu0 0.0
    %1424 = vmatpush1.msra.mxu0 0.0
    %1425 = vmatprep.subr.mxu0 0.0
    %1426 = vmatpush1.msra.mxu0 0.0
    %1427 = vmatprep.subr.mxu0 0.0
    %1428 = vmatpush1.msra.mxu0 0.0
    %1429 = vmatprep.subr.mxu0 0.0
    %1430 = vmatpush1.msra.mxu0 0.0
    %1431 = vmatprep.subr.mxu0 0.0
    %1432 = vmatpush1.msra.mxu0 0.0
    %1433 = vmatprep.subr.mxu0 0.0
    %1434 = vmatpush1.msra.mxu0 0.0
    %1435 = vmatprep.subr.mxu0 0.0
    %1436 = vmatpush1.msra.mxu0 %v1398
    %1437 = vmatprep.subr.mxu0 0.0
    %1438 = vmatpush1.msra.mxu0 %v1396
    %1439 = vmatprep.subr.mxu0 0.0
    %1440 = vmatpush2.msra.mxu0 0.0
    %1441 = vmatprep.subr.mxu0 0.0
    %1442 = vmatpush2.msra.mxu0 0.0
    %1443 = vmatprep.subr.mxu0 0.0
    %1444 = vmatpush2.msra.mxu0 0.0
    %1445 = vmatprep.subr.mxu0 0.0
    %1446 = vmatpush2.msra.mxu0 0.0
    %1447 = vmatprep.subr.mxu0 0.0
    %1448 = vmatpush2.msra.mxu0 0.0
    %1449 = vmatprep.subr.mxu0 0.0
    %1450 = vmatpush2.msra.mxu0 0.0
    %1451 = vmatprep.subr.mxu0 0.0
    %1452 = vmatpush2.msra.mxu0 0.0
    %1453 = vmatprep.subr.mxu0 0.0
    %1454 = vmatpush2.msra.mxu0 0.0
    %1455 = vmatprep.subr.mxu0 0.0
    %1456 = vmatpush2.msra.mxu0 0.0
    %1457 = vmatprep.subr.mxu0 0.0
    %1458 = vmatpush2.msra.mxu0 0.0
    %1459 = vmatprep.subr.mxu0 0.0
    %1460 = vmatpush2.msra.mxu0 0.0
    %1461 = vmatprep.subr.mxu0 0.0
    %1462 = vmatpush2.msra.mxu0 0.0
    %1463 = vmatprep.subr.mxu0 0.0
    %1464 = vmatpush2.msra.mxu0 0.0
    %1465 = vmatprep.subr.mxu0 0.0
    %1466 = vmatpush2.msra.mxu0 0.0
    %1467 = vmatprep.subr.mxu0 0.0
    %1468 = vmatpush2.msra.mxu0 0.0
    %1469 = vmatprep.subr.mxu0 0.0
    %1470 = vmatpush2.msra.mxu0 0.0
    %1471 = vmatprep.mubr.f32.mxu0 0.0
    %1472 = vmatmul.mubr.f32.gmra.mxu0 %v1402
    %v1473 = vpop.f32.mrf.mxu0
    %v1474 = vadd.f32 0.0, %v1473
    %v1475 = vpop.f32.mrf.mxu0
    %1476 = vmatprep.mubr.f32.mxu0 0.0
    %1477 = vmatmul.mubr.f32.gmra.mxu0 %v1405
    %v1478 = vpop.f32.mrf.mxu0
    %v1479 = vadd.f32 0.0, %v1478
    %v1480 = vpop.f32.mrf.mxu0
    %1481 = vdwg.mxu0
    %1482 = vrot.lane.b32.xlu0 %v162, 64
    %v1483 = vpop.permute.xlu0 %1482
    %1484 = vrot.lane.b32.xlu0 %v164, 64
    %v1485 = vpop.permute.xlu0 %1484
    %v1489 = vsel %vm870, %v1041, 0
    %v1492 = vsel %vm870, %v1042, 0
    %1494 = vmatprep.subr.mxu0 0.0
    %1495 = vmatpush1.msra.mxu0 0.0
    %1496 = vmatprep.subr.mxu0 0.0
    %1497 = vmatpush1.msra.mxu0 0.0
    %1498 = vmatprep.subr.mxu0 0.0
    %1499 = vmatpush1.msra.mxu0 0.0
    %1500 = vmatprep.subr.mxu0 0.0
    %1501 = vmatpush1.msra.mxu0 0.0
    %1502 = vmatprep.subr.mxu0 0.0
    %1503 = vmatpush1.msra.mxu0 0.0
    %1504 = vmatprep.subr.mxu0 0.0
    %1505 = vmatpush1.msra.mxu0 0.0
    %1506 = vmatprep.subr.mxu0 0.0
    %1507 = vmatpush1.msra.mxu0 0.0
    %1508 = vmatprep.subr.mxu0 0.0
    %1509 = vmatpush1.msra.mxu0 0.0
    %1510 = vmatprep.subr.mxu0 0.0
    %1511 = vmatpush1.msra.mxu0 0.0
    %1512 = vmatprep.subr.mxu0 0.0
    %1513 = vmatpush1.msra.mxu0 0.0
    %1514 = vmatprep.subr.mxu0 0.0
    %1515 = vmatpush1.msra.mxu0 0.0
    %1516 = vmatprep.subr.mxu0 0.0
    %1517 = vmatpush1.msra.mxu0 0.0
    %1518 = vmatprep.subr.mxu0 0.0
    %1519 = vmatpush1.msra.mxu0 0.0
    %1520 = vmatprep.subr.mxu0 0.0
    %1521 = vmatpush1.msra.mxu0 0.0
    %1522 = vmatprep.subr.mxu0 0.0
    %1523 = vmatpush1.msra.mxu0 %v1485
    %1524 = vmatprep.subr.mxu0 0.0
    %1525 = vmatpush1.msra.mxu0 %v1483
    %1526 = vmatprep.subr.mxu0 0.0
    %1527 = vmatpush2.msra.mxu0 0.0
    %1528 = vmatprep.subr.mxu0 0.0
    %1529 = vmatpush2.msra.mxu0 0.0
    %1530 = vmatprep.subr.mxu0 0.0
    %1531 = vmatpush2.msra.mxu0 0.0
    %1532 = vmatprep.subr.mxu0 0.0
    %1533 = vmatpush2.msra.mxu0 0.0
    %1534 = vmatprep.subr.mxu0 0.0
    %1535 = vmatpush2.msra.mxu0 0.0
    %1536 = vmatprep.subr.mxu0 0.0
    %1537 = vmatpush2.msra.mxu0 0.0
    %1538 = vmatprep.subr.mxu0 0.0
    %1539 = vmatpush2.msra.mxu0 0.0
    %1540 = vmatprep.subr.mxu0 0.0
    %1541 = vmatpush2.msra.mxu0 0.0
    %1542 = vmatprep.subr.mxu0 0.0
    %1543 = vmatpush2.msra.mxu0 0.0
    %1544 = vmatprep.subr.mxu0 0.0
    %1545 = vmatpush2.msra.mxu0 0.0
    %1546 = vmatprep.subr.mxu0 0.0
    %1547 = vmatpush2.msra.mxu0 0.0
    %1548 = vmatprep.subr.mxu0 0.0
    %1549 = vmatpush2.msra.mxu0 0.0
    %1550 = vmatprep.subr.mxu0 0.0
    %1551 = vmatpush2.msra.mxu0 0.0
    %1552 = vmatprep.subr.mxu0 0.0
    %1553 = vmatpush2.msra.mxu0 0.0
    %1554 = vmatprep.subr.mxu0 0.0
    %1555 = vmatpush2.msra.mxu0 0.0
    %1556 = vmatprep.subr.mxu0 0.0
    %1557 = vmatpush2.msra.mxu0 0.0
    %1558 = vmatprep.mubr.f32.mxu0 0.0
    %1559 = vmatmul.mubr.f32.gmra.mxu0 %v1489
    %v1560 = vpop.f32.mrf.mxu0
    %v1561 = vadd.f32 0.0, %v1560
    %v1562 = vpop.f32.mrf.mxu0
    %1563 = vmatprep.mubr.f32.mxu0 0.0
    %1564 = vmatmul.mubr.f32.gmra.mxu0 %v1492
    %v1565 = vpop.f32.mrf.mxu0
    %v1566 = vadd.f32 0.0, %v1565
    %v1567 = vpop.f32.mrf.mxu0
    %1568 = vdwg.mxu0
    %1569 = vrot.lane.b32.xlu0 %v166, 64
    %v1570 = vpop.permute.xlu0 %1569
    %1571 = vrot.lane.b32.xlu0 %v168, 64
    %v1572 = vpop.permute.xlu0 %1571
    %v1576 = vsel %vm870, %v1043, 0
    %v1579 = vsel %vm870, %v1044, 0
    %1581 = vmatprep.subr.mxu0 0.0
    %1582 = vmatpush1.msra.mxu0 0.0
    %1583 = vmatprep.subr.mxu0 0.0
    %1584 = vmatpush1.msra.mxu0 0.0
    %1585 = vmatprep.subr.mxu0 0.0
    %1586 = vmatpush1.msra.mxu0 0.0
    %1587 = vmatprep.subr.mxu0 0.0
    %1588 = vmatpush1.msra.mxu0 0.0
    %1589 = vmatprep.subr.mxu0 0.0
    %1590 = vmatpush1.msra.mxu0 0.0
    %1591 = vmatprep.subr.mxu0 0.0
    %1592 = vmatpush1.msra.mxu0 0.0
    %1593 = vmatprep.subr.mxu0 0.0
    %1594 = vmatpush1.msra.mxu0 0.0
    %1595 = vmatprep.subr.mxu0 0.0
    %1596 = vmatpush1.msra.mxu0 0.0
    %1597 = vmatprep.subr.mxu0 0.0
    %1598 = vmatpush1.msra.mxu0 0.0
    %1599 = vmatprep.subr.mxu0 0.0
    %1600 = vmatpush1.msra.mxu0 0.0
    %1601 = vmatprep.subr.mxu0 0.0
    %1602 = vmatpush1.msra.mxu0 0.0
    %1603 = vmatprep.subr.mxu0 0.0
    %1604 = vmatpush1.msra.mxu0 0.0
    %1605 = vmatprep.subr.mxu0 0.0
    %1606 = vmatpush1.msra.mxu0 0.0
    %1607 = vmatprep.subr.mxu0 0.0
    %1608 = vmatpush1.msra.mxu0 0.0
    %1609 = vmatprep.subr.mxu0 0.0
    %1610 = vmatpush1.msra.mxu0 %v1572
    %1611 = vmatprep.subr.mxu0 0.0
    %1612 = vmatpush1.msra.mxu0 %v1570
    %1613 = vmatprep.subr.mxu0 0.0
    %1614 = vmatpush2.msra.mxu0 0.0
    %1615 = vmatprep.subr.mxu0 0.0
    %1616 = vmatpush2.msra.mxu0 0.0
    %1617 = vmatprep.subr.mxu0 0.0
    %1618 = vmatpush2.msra.mxu0 0.0
    %1619 = vmatprep.subr.mxu0 0.0
    %1620 = vmatpush2.msra.mxu0 0.0
    %1621 = vmatprep.subr.mxu0 0.0
    %1622 = vmatpush2.msra.mxu0 0.0
    %1623 = vmatprep.subr.mxu0 0.0
    %1624 = vmatpush2.msra.mxu0 0.0
    %1625 = vmatprep.subr.mxu0 0.0
    %1626 = vmatpush2.msra.mxu0 0.0
    %1627 = vmatprep.subr.mxu0 0.0
    %1628 = vmatpush2.msra.mxu0 0.0
    %1629 = vmatprep.subr.mxu0 0.0
    %1630 = vmatpush2.msra.mxu0 0.0
    %1631 = vmatprep.subr.mxu0 0.0
    %1632 = vmatpush2.msra.mxu0 0.0
    %1633 = vmatprep.subr.mxu0 0.0
    %1634 = vmatpush2.msra.mxu0 0.0
    %1635 = vmatprep.subr.mxu0 0.0
    %1636 = vmatpush2.msra.mxu0 0.0
    %1637 = vmatprep.subr.mxu0 0.0
    %1638 = vmatpush2.msra.mxu0 0.0
    %1639 = vmatprep.subr.mxu0 0.0
    %1640 = vmatpush2.msra.mxu0 0.0
    %1641 = vmatprep.subr.mxu0 0.0
    %1642 = vmatpush2.msra.mxu0 0.0
    %1643 = vmatprep.subr.mxu0 0.0
    %1644 = vmatpush2.msra.mxu0 0.0
    %1645 = vmatprep.mubr.f32.mxu0 0.0
    %1646 = vmatmul.mubr.f32.gmra.mxu0 %v1576
    %v1647 = vpop.f32.mrf.mxu0
    %v1648 = vadd.f32 0.0, %v1647
    %v1649 = vpop.f32.mrf.mxu0
    %1650 = vmatprep.mubr.f32.mxu0 0.0
    %1651 = vmatmul.mubr.f32.gmra.mxu0 %v1579
    %v1652 = vpop.f32.mrf.mxu0
    %v1653 = vadd.f32 0.0, %v1652
    %v1654 = vpop.f32.mrf.mxu0
    %1655 = vdwg.mxu0
    %1656 = vrot.lane.b32.xlu0 %v170, 64
    %v1657 = vpop.permute.xlu0 %1656
    %1658 = vrot.lane.b32.xlu0 %v172, 64
    %v1659 = vpop.permute.xlu0 %1658
    %v1663 = vsel %vm870, %v1045, 0
    %v1666 = vsel %vm870, %v1046, 0
    %1668 = vmatprep.subr.mxu0 0.0
    %1669 = vmatpush1.msra.mxu0 0.0
    %1670 = vmatprep.subr.mxu0 0.0
    %1671 = vmatpush1.msra.mxu0 0.0
    %1672 = vmatprep.subr.mxu0 0.0
    %1673 = vmatpush1.msra.mxu0 0.0
    %1674 = vmatprep.subr.mxu0 0.0
    %1675 = vmatpush1.msra.mxu0 0.0
    %1676 = vmatprep.subr.mxu0 0.0
    %1677 = vmatpush1.msra.mxu0 0.0
    %1678 = vmatprep.subr.mxu0 0.0
    %1679 = vmatpush1.msra.mxu0 0.0
    %1680 = vmatprep.subr.mxu0 0.0
    %1681 = vmatpush1.msra.mxu0 0.0
    %1682 = vmatprep.subr.mxu0 0.0
    %1683 = vmatpush1.msra.mxu0 0.0
    %1684 = vmatprep.subr.mxu0 0.0
    %1685 = vmatpush1.msra.mxu0 0.0
    %1686 = vmatprep.subr.mxu0 0.0
    %1687 = vmatpush1.msra.mxu0 0.0
    %1688 = vmatprep.subr.mxu0 0.0
    %1689 = vmatpush1.msra.mxu0 0.0
    %1690 = vmatprep.subr.mxu0 0.0
    %1691 = vmatpush1.msra.mxu0 0.0
    %1692 = vmatprep.subr.mxu0 0.0
    %1693 = vmatpush1.msra.mxu0 0.0
    %1694 = vmatprep.subr.mxu0 0.0
    %1695 = vmatpush1.msra.mxu0 0.0
    %1696 = vmatprep.subr.mxu0 0.0
    %1697 = vmatpush1.msra.mxu0 %v1659
    %1698 = vmatprep.subr.mxu0 0.0
    %1699 = vmatpush1.msra.mxu0 %v1657
    %1700 = vmatprep.subr.mxu0 0.0
    %1701 = vmatpush2.msra.mxu0 0.0
    %1702 = vmatprep.subr.mxu0 0.0
    %1703 = vmatpush2.msra.mxu0 0.0
    %1704 = vmatprep.subr.mxu0 0.0
    %1705 = vmatpush2.msra.mxu0 0.0
    %1706 = vmatprep.subr.mxu0 0.0
    %1707 = vmatpush2.msra.mxu0 0.0
    %1708 = vmatprep.subr.mxu0 0.0
    %1709 = vmatpush2.msra.mxu0 0.0
    %1710 = vmatprep.subr.mxu0 0.0
    %1711 = vmatpush2.msra.mxu0 0.0
    %1712 = vmatprep.subr.mxu0 0.0
    %1713 = vmatpush2.msra.mxu0 0.0
    %1714 = vmatprep.subr.mxu0 0.0
    %1715 = vmatpush2.msra.mxu0 0.0
    %1716 = vmatprep.subr.mxu0 0.0
    %1717 = vmatpush2.msra.mxu0 0.0
    %1718 = vmatprep.subr.mxu0 0.0
    %1719 = vmatpush2.msra.mxu0 0.0
    %1720 = vmatprep.subr.mxu0 0.0
    %1721 = vmatpush2.msra.mxu0 0.0
    %1722 = vmatprep.subr.mxu0 0.0
    %1723 = vmatpush2.msra.mxu0 0.0
    %1724 = vmatprep.subr.mxu0 0.0
    %1725 = vmatpush2.msra.mxu0 0.0
    %1726 = vmatprep.subr.mxu0 0.0
    %1727 = vmatpush2.msra.mxu0 0.0
    %1728 = vmatprep.subr.mxu0 0.0
    %1729 = vmatpush2.msra.mxu0 0.0
    %1730 = vmatprep.subr.mxu0 0.0
    %1731 = vmatpush2.msra.mxu0 0.0
    %1732 = vmatprep.mubr.f32.mxu0 0.0
    %1733 = vmatmul.mubr.f32.gmra.mxu0 %v1663
    %v1734 = vpop.f32.mrf.mxu0
    %v1735 = vadd.f32 0.0, %v1734
    %v1736 = vpop.f32.mrf.mxu0
    %1737 = vmatprep.mubr.f32.mxu0 0.0
    %1738 = vmatmul.mubr.f32.gmra.mxu0 %v1666
    %v1739 = vpop.f32.mrf.mxu0
    %v1740 = vadd.f32 0.0, %v1739
    %v1741 = vpop.f32.mrf.mxu0
    %1742 = vdwg.mxu0
    %1747 = vrot.lane.b32.xlu0 %v1300, 8
    %v1748 = vpop.permute.xlu0 %1747
    %1749 = vrot.lane.b32.xlu0 %v1305, 8
    %v1750 = vpop.permute.xlu0 %1749
    %1751 = vrot.lane.b32.xlu0 %v1387, 8
    %v1752 = vpop.permute.xlu0 %1751
    %1753 = vrot.lane.b32.xlu0 %v1392, 8
    %v1754 = vpop.permute.xlu0 %1753
    %1763 = vrot.lane.b32.xlu0 %v1474, 16
    %v1764 = vpop.permute.xlu0 %1763
    %1765 = vrot.lane.b32.xlu0 %v1479, 16
    %v1766 = vpop.permute.xlu0 %1765
    %1767 = vrot.lane.b32.xlu0 %v1561, 16
    %v1768 = vpop.permute.xlu0 %1767
    %1769 = vrot.lane.b32.xlu0 %v1566, 16
    %v1770 = vpop.permute.xlu0 %1769
    %1779 = vrot.lane.b32.xlu0 %v1648, 24
    %v1780 = vpop.permute.xlu0 %1779
    %1781 = vrot.lane.b32.xlu0 %v1653, 24
    %v1782 = vpop.permute.xlu0 %1781
    %1783 = vrot.lane.b32.xlu0 %v1735, 24
    %v1784 = vpop.permute.xlu0 %1783
    %1785 = vrot.lane.b32.xlu0 %v1740, 24
    %v1786 = vpop.permute.xlu0 %1785
    %v1791 = vsel %vm177, %v1126, %v1748
    %v1792 = vsel %vm177, %v1131, %v1750
    %v1793 = vsel %vm177, %v1213, %v1752
    %v1794 = vsel %vm177, %v1218, %v1754
    %v1795 = vsel %vm870, %v1791, %v1764
    %v1796 = vsel %vm870, %v1792, %v1766
    %v1797 = vsel %vm870, %v1793, %v1768
    %v1798 = vsel %vm870, %v1794, %v1770
    %vm1799 = vcmask 195584
    %v1800 = vsel %vm1799, %v1795, %v1780
    %v1801 = vsel %vm1799, %v1796, %v1782
    %v1802 = vsel %vm1799, %v1797, %v1784
    %v1803 = vsel %vm1799, %v1798, %v1786
    %v1804 = vpack.c.bf16 %v1801, %v1800
    %v1805 = vpack.c.bf16 %v1803, %v1802
    %v1806 = vld [vmem:[%s3] sm:$0xf]
    %v1807 = vld [vmem:[%s3 + $0x4] sm:$0xf]
    %v1808 = vld [vmem:[%s3 + $0x8] sm:$0xf]
    %v1809 = vld [vmem:[%s3 + $0xc] sm:$0xf]
    %v1810 = vld [vmem:[%s4] sm:$0x1]
    %v1812 = vlaneseq
    %v1813 = vshrl.u32 %v1812, 7
    %v1814 = vsub.s32 0, %v1813
    %v1815 = vrot.slane %v1810, %v1814
    %v1821 = vunpack.c.l.b16 %v1806
    %v1822 = vunpack.c.l.b16 %v1807
    %v1823 = vunpack.c.l.b16 %v1808
    %v1824 = vunpack.c.l.b16 %v1809
    %v1825 = vpack.c.b16 %v1822, %v1821
    %v1826 = vpack.c.b16 %v1824, %v1823
    %v1830 = vsel %vm89, %v1804, 0
    %v1833 = vsel %vm89, %v1805, 0
    %1835 = vmatprep.subr.bf16.mxu0 0
    %1836 = vmatpush1.bf16.msra.mxu0 0
    %1837 = vmatprep.subr.bf16.mxu0 0
    %1838 = vmatpush1.bf16.msra.mxu0 0
    %1839 = vmatprep.subr.bf16.mxu0 0
    %1840 = vmatpush1.bf16.msra.mxu0 0
    %1841 = vmatprep.subr.bf16.mxu0 0
    %1842 = vmatpush1.bf16.msra.mxu0 0
    %1843 = vmatprep.subr.bf16.mxu0 0
    %1844 = vmatpush1.bf16.msra.mxu0 0
    %1845 = vmatprep.subr.bf16.mxu0 0
    %1846 = vmatpush1.bf16.msra.mxu0 0
    %1847 = vmatprep.subr.bf16.mxu0 0
    %1848 = vmatpush1.bf16.msra.mxu0 %v1826
    %1849 = vmatprep.subr.bf16.mxu0 0
    %1850 = vmatpush1.bf16.msra.mxu0 %v1825
    %1851 = vmatprep.subr.bf16.mxu0 0
    %1852 = vmatpush2.bf16.msra.mxu0 0
    %1853 = vmatprep.subr.bf16.mxu0 0
    %1854 = vmatpush2.bf16.msra.mxu0 0
    %1855 = vmatprep.subr.bf16.mxu0 0
    %1856 = vmatpush2.bf16.msra.mxu0 0
    %1857 = vmatprep.subr.bf16.mxu0 0
    %1858 = vmatpush2.bf16.msra.mxu0 0
    %1859 = vmatprep.subr.bf16.mxu0 0
    %1860 = vmatpush2.bf16.msra.mxu0 0
    %1861 = vmatprep.subr.bf16.mxu0 0
    %1862 = vmatpush2.bf16.msra.mxu0 0
    %1863 = vmatprep.subr.bf16.mxu0 0
    %1864 = vmatpush2.bf16.msra.mxu0 0
    %1865 = vmatprep.subr.bf16.mxu0 0
    %1866 = vmatpush2.bf16.msra.mxu0 0
    %1867 = vmatprep.mubr.bf16.mxu0 0
    %1868 = vmatmul.mubr.bf16.gmra.mxu0 %v1830
    %v1869 = vpop.f32.mrf.mxu0
    %v1870 = vadd.f32 %v1815, %v1869
    %v1871 = vpop.f32.mrf.mxu0
    %v1872 = vpop.f32.mrf.mxu0
    %v1873 = vadd.f32 %v1815, %v1872
    %v1874 = vpop.f32.mrf.mxu0
    %1875 = vmatprep.mubr.bf16.mxu0 0
    %1876 = vmatmul.mubr.bf16.gmra.mxu0 %v1833
    %v1877 = vpop.f32.mrf.mxu0
    %v1878 = vadd.f32 %v1815, %v1877
    %v1879 = vpop.f32.mrf.mxu0
    %v1880 = vpop.f32.mrf.mxu0
    %v1881 = vadd.f32 %v1815, %v1880
    %v1882 = vpop.f32.mrf.mxu0
    %1883 = vdwg.mxu0
    %v1884 = vadd.f32 %v60, %v1870
    %v1885 = vadd.f32 %v61, %v1873
    %v1886 = vadd.f32 %v62, %v1878
    %v1887 = vadd.f32 %v63, %v1881
    %v1888 = vld [vmem:[%s5] sm:$0x1]
    %v1889 = vld [vmem:[%s6] sm:$0x1]
    %v1890 = vmul.f32 %v1884, %v1884
    %v1891 = vmul.f32 %v1885, %v1885
    %v1892 = vmul.f32 %v1886, %v1886
    %v1893 = vmul.f32 %v1887, %v1887
    %1898 = vrot.lane.b32.xlu0 %v1890, 32
    %v1899 = vpop.permute.xlu0 %1898
    %1900 = vrot.lane.b32.xlu0 %v1891, 32
    %v1901 = vpop.permute.xlu0 %1900
    %1902 = vrot.lane.b32.xlu0 %v1892, 32
    %v1903 = vpop.permute.xlu0 %1902
    %1904 = vrot.lane.b32.xlu0 %v1893, 32
    %v1905 = vpop.permute.xlu0 %1904
    %v1910 = vsel %vm89, %v1884, %v1899
    %v1911 = vsel %vm89, %v1885, %v1901
    %v1912 = vsel %vm89, %v1886, %v1903
    %v1913 = vsel %vm89, %v1887, %v1905
    %v1915 = vsel %vm89, 1.0, 0
    %1917 = vmatprep.subr.mxu0 0.0
    %1918 = vmatpush1.msra.mxu0 0.0
    %1919 = vmatprep.subr.mxu0 0.0
    %1920 = vmatpush1.msra.mxu0 0.0
    %1921 = vmatprep.subr.mxu0 0.0
    %1922 = vmatpush1.msra.mxu0 0.0
    %1923 = vmatprep.subr.mxu0 0.0
    %1924 = vmatpush1.msra.mxu0 0.0
    %1925 = vmatprep.subr.mxu0 0.0
    %1926 = vmatpush1.msra.mxu0 0.0
    %1927 = vmatprep.subr.mxu0 0.0
    %1928 = vmatpush1.msra.mxu0 0.0
    %1929 = vmatprep.subr.mxu0 0.0
    %1930 = vmatpush1.msra.mxu0 0.0
    %1931 = vmatprep.subr.mxu0 0.0
    %1932 = vmatpush1.msra.mxu0 0.0
    %1933 = vmatprep.subr.mxu0 0.0
    %1934 = vmatpush1.msra.mxu0 0.0
    %1935 = vmatprep.subr.mxu0 0.0
    %1936 = vmatpush1.msra.mxu0 0.0
    %1937 = vmatprep.subr.mxu0 0.0
    %1938 = vmatpush1.msra.mxu0 0.0
    %1939 = vmatprep.subr.mxu0 0.0
    %1940 = vmatpush1.msra.mxu0 0.0
    %1941 = vmatprep.subr.mxu0 0.0
    %1942 = vmatpush1.msra.mxu0 %v1913
    %1943 = vmatprep.subr.mxu0 0.0
    %1944 = vmatpush1.msra.mxu0 %v1912
    %1945 = vmatprep.subr.mxu0 0.0
    %1946 = vmatpush1.msra.mxu0 %v1911
    %1947 = vmatprep.subr.mxu0 0.0
    %1948 = vmatpush1.msra.mxu0 %v1910
    %1949 = vmatprep.subr.mxu0 0.0
    %1950 = vmatpush2.msra.mxu0 0.0
    %1951 = vmatprep.subr.mxu0 0.0
    %1952 = vmatpush2.msra.mxu0 0.0
    %1953 = vmatprep.subr.mxu0 0.0
    %1954 = vmatpush2.msra.mxu0 0.0
    %1955 = vmatprep.subr.mxu0 0.0
    %1956 = vmatpush2.msra.mxu0 0.0
    %1957 = vmatprep.subr.mxu0 0.0
    %1958 = vmatpush2.msra.mxu0 0.0
    %1959 = vmatprep.subr.mxu0 0.0
    %1960 = vmatpush2.msra.mxu0 0.0
    %1961 = vmatprep.subr.mxu0 0.0
    %1962 = vmatpush2.msra.mxu0 0.0
    %1963 = vmatprep.subr.mxu0 0.0
    %1964 = vmatpush2.msra.mxu0 0.0
    %1965 = vmatprep.subr.mxu0 0.0
    %1966 = vmatpush2.msra.mxu0 0.0
    %1967 = vmatprep.subr.mxu0 0.0
    %1968 = vmatpush2.msra.mxu0 0.0
    %1969 = vmatprep.subr.mxu0 0.0
    %1970 = vmatpush2.msra.mxu0 0.0
    %1971 = vmatprep.subr.mxu0 0.0
    %1972 = vmatpush2.msra.mxu0 0.0
    %1973 = vmatprep.subr.mxu0 0.0
    %1974 = vmatpush2.msra.mxu0 0.0
    %1975 = vmatprep.subr.mxu0 0.0
    %1976 = vmatpush2.msra.mxu0 0.0
    %1977 = vmatprep.subr.mxu0 0.0
    %1978 = vmatpush2.msra.mxu0 0.0
    %1979 = vmatprep.subr.mxu0 0.0
    %1980 = vmatpush2.msra.mxu0 0.0
    %1981 = vmatprep.mubr.f32.mxu0 0.0
    %1982 = vmatmul.mubr.f32.gmra.mxu0 %v1915
    %v1983 = vpop.f32.mrf.mxu0
    %v1984 = vadd.f32 0.0, %v1983
    %v1985 = vpop.f32.mrf.mxu0
    %1986 = vdwg.mxu0
    %v1987 = vmul.f32 %v1984, 0.03125
    %v1988 = vmul.f32 %v1987, %v1987
    %1990 = vrot.lane.b32.xlu0 %v1988, 32
    %v1991 = vpop.permute.xlu0 %1990
    %v1993 = vsub.f32 %v1987, %v1991
    %v1994 = vlaneseq
    %v1995 = vshrl.u32 %v1994, 7
    %v1996 = vsub.s32 0, %v1995
    %v1997 = vrot.slane %v1987, %v1996
    %v1998 = vsub.f32 %v1884, %v1997
    %v1999 = vsub.f32 %v1885, %v1997
    %v2000 = vsub.f32 %v1886, %v1997
    %v2001 = vsub.f32 %v1887, %v1997
    %v2002 = vadd.f32 %v1993, 1e-05
    %v2003 = vrsqrt.pop %v2002
    %v2004 = vlaneseq
    %v2005 = vshrl.u32 %v2004, 7
    %v2006 = vsub.s32 0, %v2005
    %v2007 = vrot.slane %v2003, %v2006
    %2009 = vrot.lane.b32.xlu0 %v2007, 96
    %v2010 = vpop.permute.xlu0 %2009
    %v2012 = vmul.f32 %v1998, %v2010
    %v2013 = vmul.f32 %v1999, %v2010
    %v2014 = vmul.f32 %v2000, %v2010
    %v2015 = vmul.f32 %v2001, %v2010
    %v2017 = vlaneseq
    %v2018 = vshrl.u32 %v2017, 7
    %v2019 = vsub.s32 0, %v2018
    %v2020 = vrot.slane %v1888, %v2019
    %v2022 = vmul.f32 %v2012, %v2020
    %v2023 = vmul.f32 %v2013, %v2020
    %v2024 = vmul.f32 %v2014, %v2020
    %v2025 = vmul.f32 %v2015, %v2020
    %v2027 = vlaneseq
    %v2028 = vshrl.u32 %v2027, 7
    %v2029 = vsub.s32 0, %v2028
    %v2030 = vrot.slane %v1889, %v2029
    %v2032 = vadd.f32 %v2022, %v2030
    %v2033 = vadd.f32 %v2023, %v2030
    %v2034 = vadd.f32 %v2024, %v2030
    %v2035 = vadd.f32 %v2025, %v2030
    %v2036 = vpack.c.bf16 %v2033, %v2032
    %v2037 = vpack.c.bf16 %v2035, %v2034
    %v2038 = vld [vmem:[#allocation2] sm:$0xf]
    %v2039 = vld [vmem:[#allocation2 + $0x4] sm:$0xf]
    %v2040 = vld [vmem:[#allocation2 + $0x8] sm:$0xf]
    %v2041 = vld [vmem:[#allocation2 + $0xc] sm:$0xf]
    %v2042 = vld [vmem:[%s8] sm:$0x1]
    %v2044 = vlaneseq
    %v2045 = vshrl.u32 %v2044, 7
    %v2046 = vsub.s32 0, %v2045
    %v2047 = vrot.slane %v2042, %v2046
    %v2053 = vunpack.c.l.b16 %v2038
    %v2054 = vunpack.c.l.b16 %v2039
    %v2055 = vunpack.c.l.b16 %v2040
    %v2056 = vunpack.c.l.b16 %v2041
    %v2057 = vpack.c.b16 %v2054, %v2053
    %v2058 = vpack.c.b16 %v2056, %v2055
    %v2062 = vsel %vm89, %v2036, 0
    %v2065 = vsel %vm89, %v2037, 0
    %2067 = vmatprep.subr.bf16.mxu0 0
    %2068 = vmatpush1.bf16.msra.mxu0 0
    %2069 = vmatprep.subr.bf16.mxu0 0
    %2070 = vmatpush1.bf16.msra.mxu0 0
    %2071 = vmatprep.subr.bf16.mxu0 0
    %2072 = vmatpush1.bf16.msra.mxu0 0
    %2073 = vmatprep.subr.bf16.mxu0 0
    %2074 = vmatpush1.bf16.msra.mxu0 0
    %2075 = vmatprep.subr.bf16.mxu0 0
    %2076 = vmatpush1.bf16.msra.mxu0 0
    %2077 = vmatprep.subr.bf16.mxu0 0
    %2078 = vmatpush1.bf16.msra.mxu0 0
    %2079 = vmatprep.subr.bf16.mxu0 0
    %2080 = vmatpush1.bf16.msra.mxu0 %v2058
    %2081 = vmatprep.subr.bf16.mxu0 0
    %2082 = vmatpush1.bf16.msra.mxu0 %v2057
    %2083 = vmatprep.subr.bf16.mxu0 0
    %2084 = vmatpush2.bf16.msra.mxu0 0
    %2085 = vmatprep.subr.bf16.mxu0 0
    %2086 = vmatpush2.bf16.msra.mxu0 0
    %2087 = vmatprep.subr.bf16.mxu0 0
    %2088 = vmatpush2.bf16.msra.mxu0 0
    %2089 = vmatprep.subr.bf16.mxu0 0
    %2090 = vmatpush2.bf16.msra.mxu0 0
    %2091 = vmatprep.subr.bf16.mxu0 0
    %2092 = vmatpush2.bf16.msra.mxu0 0
    %2093 = vmatprep.subr.bf16.mxu0 0
    %2094 = vmatpush2.bf16.msra.mxu0 0
    %2095 = vmatprep.subr.bf16.mxu0 0
    %2096 = vmatpush2.bf16.msra.mxu0 0
    %2097 = vmatprep.subr.bf16.mxu0 0
    %2098 = vmatpush2.bf16.msra.mxu0 0
    %2099 = vmatprep.mubr.bf16.mxu0 0
    %2100 = vmatmul.mubr.bf16.gmra.mxu0 %v2062
    %v2101 = vpop.f32.mrf.mxu0
    %v2102 = vadd.f32 %v2047, %v2101
    %v2103 = vpop.f32.mrf.mxu0
    %v2104 = vpop.f32.mrf.mxu0
    %v2105 = vadd.f32 %v2047, %v2104
    %v2106 = vpop.f32.mrf.mxu0
    %2107 = vmatprep.mubr.bf16.mxu0 0
    %2108 = vmatmul.mubr.bf16.gmra.mxu0 %v2065
    %v2109 = vpop.f32.mrf.mxu0
    %v2110 = vadd.f32 %v2047, %v2109
    %v2111 = vpop.f32.mrf.mxu0
    %v2112 = vpop.f32.mrf.mxu0
    %v2113 = vadd.f32 %v2047, %v2112
    %v2114 = vpop.f32.mrf.mxu0
    %2115 = vdwg.mxu0
    %v2116 = vmul.f32 %v2102, 0.5
    %v2117 = vmul.f32 %v2105, 0.5
    %v2118 = vmul.f32 %v2110, 0.5
    %v2119 = vmul.f32 %v2113, 0.5
    %v2120 = vmul.f32 %v2102, 0.044715
    %v2121 = vmul.f32 %v2105, 0.044715
    %v2122 = vmul.f32 %v2110, 0.044715
    %v2123 = vmul.f32 %v2113, 0.044715
    %v2124 = vmul.f32 %v2120, %v2102
    %v2125 = vmul.f32 %v2121, %v2105
    %v2126 = vmul.f32 %v2122, %v2110
    %v2127 = vmul.f32 %v2123, %v2113
    %v2128 = vmul.f32 %v2124, %v2102
    %v2129 = vmul.f32 %v2125, %v2105
    %v2130 = vmul.f32 %v2126, %v2110
    %v2131 = vmul.f32 %v2127, %v2113
    %v2132 = vadd.f32 %v2102, %v2128
    %v2133 = vadd.f32 %v2105, %v2129
    %v2134 = vadd.f32 %v2110, %v2130
    %v2135 = vadd.f32 %v2113, %v2131
    %v2136 = vmul.f32 %v2132, 0.7978846
    %v2137 = vmul.f32 %v2133, 0.7978846
    %v2138 = vmul.f32 %v2134, 0.7978846
    %v2139 = vmul.f32 %v2135, 0.7978846
    %v2140 = vtanh.pop %v2136
    %v2141 = vtanh.pop %v2137
    %v2142 = vtanh.pop %v2138
    %v2143 = vtanh.pop %v2139
    %v2144 = vadd.f32 %v2140, 1.0
    %v2145 = vadd.f32 %v2141, 1.0
    %v2146 = vadd.f32 %v2142, 1.0
    %v2147 = vadd.f32 %v2143, 1.0
    %v2148 = vmul.f32 %v2116, %v2144
    %v2149 = vmul.f32 %v2117, %v2145
    %v2150 = vmul.f32 %v2118, %v2146
    %v2151 = vmul.f32 %v2119, %v2147
    %v2152 = vpack.c.bf16 %v2149, %v2148
    %v2153 = vpack.c.bf16 %v2151, %v2150
    %v2154 = vld [vmem:[%s9] sm:$0xf]
    %v2155 = vld [vmem:[%s9 + $0x4] sm:$0xf]
    %v2156 = vld [vmem:[%s9 + $0x8] sm:$0xf]
    %v2157 = vld [vmem:[%s9 + $0xc] sm:$0xf]
    %v2158 = vld [vmem:[%s9 + $0x10] sm:$0xf]
    %v2159 = vld [vmem:[%s9 + $0x14] sm:$0xf]
    %v2160 = vld [vmem:[%s9 + $0x18] sm:$0xf]
    %v2161 = vld [vmem:[%s9 + $0x1c] sm:$0xf]
    %v2162 = vld [vmem:[%s10] sm:$0x1]
    %v2164 = vlaneseq
    %v2165 = vshrl.u32 %v2164, 7
    %v2166 = vsub.s32 0, %v2165
    %v2167 = vrot.slane %v2162, %v2166
    %v2177 = vunpack.c.l.b16 %v2154
    %v2178 = vunpack.c.l.b16 %v2155
    %v2179 = vunpack.c.l.b16 %v2156
    %v2180 = vunpack.c.l.b16 %v2157
    %v2181 = vunpack.c.l.b16 %v2158
    %v2182 = vunpack.c.l.b16 %v2159
    %v2183 = vunpack.c.l.b16 %v2160
    %v2184 = vunpack.c.l.b16 %v2161
    %v2185 = vpack.c.b16 %v2178, %v2177
    %v2186 = vpack.c.b16 %v2180, %v2179
    %v2187 = vpack.c.b16 %v2182, %v2181
    %v2188 = vpack.c.b16 %v2184, %v2183
    %vm2193 = vcmask 523264
    %v2195 = vsel %vm2193, %v2152, 0
    %v2198 = vsel %vm2193, %v2153, 0
    %2200 = vmatprep.subr.bf16.mxu0 0
    %2201 = vmatpush1.bf16.msra.mxu0 0
    %2202 = vmatprep.subr.bf16.mxu0 0
    %2203 = vmatpush1.bf16.msra.mxu0 0
    %2204 = vmatprep.subr.bf16.mxu0 0
    %2205 = vmatpush1.bf16.msra.mxu0 0
    %2206 = vmatprep.subr.bf16.mxu0 0
    %2207 = vmatpush1.bf16.msra.mxu0 0
    %2208 = vmatprep.subr.bf16.mxu0 0
    %2209 = vmatpush1.bf16.msra.mxu0 %v2188
    %2210 = vmatprep.subr.bf16.mxu0 0
    %2211 = vmatpush1.bf16.msra.mxu0 %v2187
    %2212 = vmatprep.subr.bf16.mxu0 0
    %2213 = vmatpush1.bf16.msra.mxu0 %v2186
    %2214 = vmatprep.subr.bf16.mxu0 0
    %2215 = vmatpush1.bf16.msra.mxu0 %v2185
    %2216 = vmatprep.subr.bf16.mxu0 0
    %2217 = vmatpush2.bf16.msra.mxu0 0
    %2218 = vmatprep.subr.bf16.mxu0 0
    %2219 = vmatpush2.bf16.msra.mxu0 0
    %2220 = vmatprep.subr.bf16.mxu0 0
    %2221 = vmatpush2.bf16.msra.mxu0 0
    %2222 = vmatprep.subr.bf16.mxu0 0
    %2223 = vmatpush2.bf16.msra.mxu0 0
    %2224 = vmatprep.subr.bf16.mxu0 0
    %2225 = vmatpush2.bf16.msra.mxu0 0
    %2226 = vmatprep.subr.bf16.mxu0 0
    %2227 = vmatpush2.bf16.msra.mxu0 0
    %2228 = vmatprep.subr.bf16.mxu0 0
    %2229 = vmatpush2.bf16.msra.mxu0 0
    %2230 = vmatprep.subr.bf16.mxu0 0
    %2231 = vmatpush2.bf16.msra.mxu0 0
    %2232 = vmatprep.mubr.bf16.mxu0 0
    %2233 = vmatmul.mubr.bf16.gmra.mxu0 %v2195
    %v2234 = vpop.f32.mrf.mxu0
    %v2235 = vadd.f32 %v2167, %v2234
    %v2236 = vpop.f32.mrf.mxu0
    %v2237 = vpop.f32.mrf.mxu0
    %v2238 = vadd.f32 %v2167, %v2237
    %v2239 = vpop.f32.mrf.mxu0
    %2240 = vmatprep.mubr.bf16.mxu0 0
    %2241 = vmatmul.mubr.bf16.gmra.mxu0 %v2198
    %v2242 = vpop.f32.mrf.mxu0
    %v2243 = vadd.f32 %v2167, %v2242
    %v2244 = vpop.f32.mrf.mxu0
    %v2245 = vpop.f32.mrf.mxu0
    %v2246 = vadd.f32 %v2167, %v2245
    %v2247 = vpop.f32.mrf.mxu0
    %2248 = vdwg.mxu0
    %v2249 = vadd.f32 %v2032, %v2235
    %v2250 = vadd.f32 %v2033, %v2238
    %v2251 = vadd.f32 %v2034, %v2243
    %v2252 = vadd.f32 %v2035, %v2246
    %v2253 = vld [vmem:[%s11] sm:$0x1]
    %v2254 = vld [vmem:[%s12] sm:$0x1]
    %v2255 = vmul.f32 %v2249, %v2249
    %v2256 = vmul.f32 %v2250, %v2250
    %v2257 = vmul.f32 %v2251, %v2251
    %v2258 = vmul.f32 %v2252, %v2252
    %2263 = vrot.lane.b32.xlu0 %v2255, 32
    %v2264 = vpop.permute.xlu0 %2263
    %2265 = vrot.lane.b32.xlu0 %v2256, 32
    %v2266 = vpop.permute.xlu0 %2265
    %2267 = vrot.lane.b32.xlu0 %v2257, 32
    %v2268 = vpop.permute.xlu0 %2267
    %2269 = vrot.lane.b32.xlu0 %v2258, 32
    %v2270 = vpop.permute.xlu0 %2269
    %v2275 = vsel %vm89, %v2249, %v2264
    %v2276 = vsel %vm89, %v2250, %v2266
    %v2277 = vsel %vm89, %v2251, %v2268
    %v2278 = vsel %vm89, %v2252, %v2270
    %2279 = vmatprep.subr.mxu0 0.0
    %2280 = vmatpush1.msra.mxu0 0.0
    %2281 = vmatprep.subr.mxu0 0.0
    %2282 = vmatpush1.msra.mxu0 0.0
    %2283 = vmatprep.subr.mxu0 0.0
    %2284 = vmatpush1.msra.mxu0 0.0
    %2285 = vmatprep.subr.mxu0 0.0
    %2286 = vmatpush1.msra.mxu0 0.0
    %2287 = vmatprep.subr.mxu0 0.0
    %2288 = vmatpush1.msra.mxu0 0.0
    %2289 = vmatprep.subr.mxu0 0.0
    %2290 = vmatpush1.msra.mxu0 0.0
    %2291 = vmatprep.subr.mxu0 0.0
    %2292 = vmatpush1.msra.mxu0 0.0
    %2293 = vmatprep.subr.mxu0 0.0
    %2294 = vmatpush1.msra.mxu0 0.0
    %2295 = vmatprep.subr.mxu0 0.0
    %2296 = vmatpush1.msra.mxu0 0.0
    %2297 = vmatprep.subr.mxu0 0.0
    %2298 = vmatpush1.msra.mxu0 0.0
    %2299 = vmatprep.subr.mxu0 0.0
    %2300 = vmatpush1.msra.mxu0 0.0
    %2301 = vmatprep.subr.mxu0 0.0
    %2302 = vmatpush1.msra.mxu0 0.0
    %2303 = vmatprep.subr.mxu0 0.0
    %2304 = vmatpush1.msra.mxu0 %v2278
    %2305 = vmatprep.subr.mxu0 0.0
    %2306 = vmatpush1.msra.mxu0 %v2277
    %2307 = vmatprep.subr.mxu0 0.0
    %2308 = vmatpush1.msra.mxu0 %v2276
    %2309 = vmatprep.subr.mxu0 0.0
    %2310 = vmatpush1.msra.mxu0 %v2275
    %2311 = vmatprep.subr.mxu0 0.0
    %2312 = vmatpush2.msra.mxu0 0.0
    %2313 = vmatprep.subr.mxu0 0.0
    %2314 = vmatpush2.msra.mxu0 0.0
    %2315 = vmatprep.subr.mxu0 0.0
    %2316 = vmatpush2.msra.mxu0 0.0
    %2317 = vmatprep.subr.mxu0 0.0
    %2318 = vmatpush2.msra.mxu0 0.0
    %2319 = vmatprep.subr.mxu0 0.0
    %2320 = vmatpush2.msra.mxu0 0.0
    %2321 = vmatprep.subr.mxu0 0.0
    %2322 = vmatpush2.msra.mxu0 0.0
    %2323 = vmatprep.subr.mxu0 0.0
    %2324 = vmatpush2.msra.mxu0 0.0
    %2325 = vmatprep.subr.mxu0 0.0
    %2326 = vmatpush2.msra.mxu0 0.0
    %2327 = vmatprep.subr.mxu0 0.0
    %2328 = vmatpush2.msra.mxu0 0.0
    %2329 = vmatprep.subr.mxu0 0.0
    %2330 = vmatpush2.msra.mxu0 0.0
    %2331 = vmatprep.subr.mxu0 0.0
    %2332 = vmatpush2.msra.mxu0 0.0
    %2333 = vmatprep.subr.mxu0 0.0
    %2334 = vmatpush2.msra.mxu0 0.0
    %2335 = vmatprep.subr.mxu0 0.0
    %2336 = vmatpush2.msra.mxu0 0.0
    %2337 = vmatprep.subr.mxu0 0.0
    %2338 = vmatpush2.msra.mxu0 0.0
    %2339 = vmatprep.subr.mxu0 0.0
    %2340 = vmatpush2.msra.mxu0 0.0
    %2341 = vmatprep.subr.mxu0 0.0
    %2342 = vmatpush2.msra.mxu0 0.0
    %2343 = vmatprep.mubr.f32.mxu0 0.0
    %2344 = vmatmul.mubr.f32.gmra.mxu0 %v1915
    %v2345 = vpop.f32.mrf.mxu0
    %v2346 = vadd.f32 0.0, %v2345
    %v2347 = vpop.f32.mrf.mxu0
    %2348 = vdwg.mxu0
    %v2349 = vmul.f32 %v2346, 0.03125
    %v2350 = vmul.f32 %v2349, %v2349
    %2352 = vrot.lane.b32.xlu0 %v2350, 32
    %v2353 = vpop.permute.xlu0 %2352
    %v2355 = vsub.f32 %v2349, %v2353
    %v2356 = vlaneseq
    %v2357 = vshrl.u32 %v2356, 7
    %v2358 = vsub.s32 0, %v2357
    %v2359 = vrot.slane %v2349, %v2358
    %v2360 = vsub.f32 %v2249, %v2359
    %v2361 = vsub.f32 %v2250, %v2359
    %v2362 = vsub.f32 %v2251, %v2359
    %v2363 = vsub.f32 %v2252, %v2359
    %v2364 = vadd.f32 %v2355, 1e-05
    %v2365 = vrsqrt.pop %v2364
    %v2366 = vlaneseq
    %v2367 = vshrl.u32 %v2366, 7
    %v2368 = vsub.s32 0, %v2367
    %v2369 = vrot.slane %v2365, %v2368
    %2371 = vrot.lane.b32.xlu0 %v2369, 96
    %v2372 = vpop.permute.xlu0 %2371
    %v2374 = vmul.f32 %v2360, %v2372
    %v2375 = vmul.f32 %v2361, %v2372
    %v2376 = vmul.f32 %v2362, %v2372
    %v2377 = vmul.f32 %v2363, %v2372
    %v2379 = vlaneseq
    %v2380 = vshrl.u32 %v2379, 7
    %v2381 = vsub.s32 0, %v2380
    %v2382 = vrot.slane %v2253, %v2381
    %v2384 = vmul.f32 %v2374, %v2382
    %v2385 = vmul.f32 %v2375, %v2382
    %v2386 = vmul.f32 %v2376, %v2382
    %v2387 = vmul.f32 %v2377, %v2382
    %v2389 = vlaneseq
    %v2390 = vshrl.u32 %v2389, 7
    %v2391 = vsub.s32 0, %v2390
    %v2392 = vrot.slane %v2254, %v2391
    %v2394 = vadd.f32 %v2384, %v2392
    %v2395 = vadd.f32 %v2385, %v2392
    %v2396 = vadd.f32 %v2386, %v2392
    %v2397 = vadd.f32 %v2387, %v2392
    %v2398 = vpack.c.bf16 %v2395, %v2394
    %v2399 = vpack.c.bf16 %v2397, %v2396
    %s2400 = scalar_lea.vmem %s1, 16
    %v2401 = vld [vmem:[%s2400] sm:$0xf]
    %v2402 = vld [vmem:[%s2400 + $0x4] sm:$0xf]
    %v2403 = vld [vmem:[%s2400 + $0x8] sm:$0xf]
    %v2404 = vld [vmem:[%s2400 + $0xc] sm:$0xf]
    %s2405 = scalar_lea.vmem %s2, 1
    %v2406 = vld [vmem:[%s2405] sm:$0x1]
    %v2408 = vlaneseq
    %v2409 = vshrl.u32 %v2408, 7
    %v2410 = vsub.s32 0, %v2409
    %v2411 = vrot.slane %v2406, %v2410
    %v2417 = vunpack.c.l.b16 %v2401
    %v2418 = vunpack.c.l.b16 %v2402
    %v2419 = vunpack.c.l.b16 %v2403
    %v2420 = vunpack.c.l.b16 %v2404
    %v2421 = vpack.c.b16 %v2418, %v2417
    %v2422 = vpack.c.b16 %v2420, %v2419
    %v2426 = vsel %vm89, %v2398, 0
    %v2429 = vsel %vm89, %v2399, 0
    %2431 = vmatprep.subr.bf16.mxu0 0
    %2432 = vmatpush1.bf16.msra.mxu0 0
    %2433 = vmatprep.subr.bf16.mxu0 0
    %2434 = vmatpush1.bf16.msra.mxu0 0
    %2435 = vmatprep.subr.bf16.mxu0 0
    %2436 = vmatpush1.bf16.msra.mxu0 0
    %2437 = vmatprep.subr.bf16.mxu0 0
    %2438 = vmatpush1.bf16.msra.mxu0 0
    %2439 = vmatprep.subr.bf16.mxu0 0
    %2440 = vmatpush1.bf16.msra.mxu0 0
    %2441 = vmatprep.subr.bf16.mxu0 0
    %2442 = vmatpush1.bf16.msra.mxu0 0
    %2443 = vmatprep.subr.bf16.mxu0 0
    %2444 = vmatpush1.bf16.msra.mxu0 %v2422
    %2445 = vmatprep.subr.bf16.mxu0 0
    %2446 = vmatpush1.bf16.msra.mxu0 %v2421
    %2447 = vmatprep.subr.bf16.mxu0 0
    %2448 = vmatpush2.bf16.msra.mxu0 0
    %2449 = vmatprep.subr.bf16.mxu0 0
    %2450 = vmatpush2.bf16.msra.mxu0 0
    %2451 = vmatprep.subr.bf16.mxu0 0
    %2452 = vmatpush2.bf16.msra.mxu0 0
    %2453 = vmatprep.subr.bf16.mxu0 0
    %2454 = vmatpush2.bf16.msra.mxu0 0
    %2455 = vmatprep.subr.bf16.mxu0 0
    %2456 = vmatpush2.bf16.msra.mxu0 0
    %2457 = vmatprep.subr.bf16.mxu0 0
    %2458 = vmatpush2.bf16.msra.mxu0 0
    %2459 = vmatprep.subr.bf16.mxu0 0
    %2460 = vmatpush2.bf16.msra.mxu0 0
    %2461 = vmatprep.subr.bf16.mxu0 0
    %2462 = vmatpush2.bf16.msra.mxu0 0
    %2463 = vmatprep.mubr.bf16.mxu0 0
    %2464 = vmatmul.mubr.bf16.gmra.mxu0 %v2426
    %v2465 = vpop.f32.mrf.mxu0
    %v2466 = vadd.f32 %v2411, %v2465
    %v2467 = vpop.f32.mrf.mxu0
    %v2468 = vpop.f32.mrf.mxu0
    %v2469 = vadd.f32 %v2411, %v2468
    %v2470 = vpop.f32.mrf.mxu0
    %2471 = vmatprep.mubr.bf16.mxu0 0
    %2472 = vmatmul.mubr.bf16.gmra.mxu0 %v2429
    %v2473 = vpop.f32.mrf.mxu0
    %v2474 = vadd.f32 %v2411, %v2473
    %v2475 = vpop.f32.mrf.mxu0
    %v2476 = vpop.f32.mrf.mxu0
    %v2477 = vadd.f32 %v2411, %v2476
    %v2478 = vpop.f32.mrf.mxu0
    %2479 = vdwg.mxu0
    %2484 = vrot.lane.b32.xlu0 %v2466, 120
    %v2485 = vpop.permute.xlu0 %2484
    %2486 = vrot.lane.b32.xlu0 %v2469, 120
    %v2487 = vpop.permute.xlu0 %2486
    %2488 = vrot.lane.b32.xlu0 %v2474, 120
    %v2489 = vpop.permute.xlu0 %2488
    %2490 = vrot.lane.b32.xlu0 %v2477, 120
    %v2491 = vpop.permute.xlu0 %2490
    %2492 = vrot.lane.b32.xlu0 %v2466, 112
    %v2493 = vpop.permute.xlu0 %2492
    %2494 = vrot.lane.b32.xlu0 %v2469, 112
    %v2495 = vpop.permute.xlu0 %2494
    %2496 = vrot.lane.b32.xlu0 %v2474, 112
    %v2497 = vpop.permute.xlu0 %2496
    %2498 = vrot.lane.b32.xlu0 %v2477, 112
    %v2499 = vpop.permute.xlu0 %2498
    %2500 = vrot.lane.b32.xlu0 %v2466, 104
    %v2501 = vpop.permute.xlu0 %2500
    %2502 = vrot.lane.b32.xlu0 %v2469, 104
    %v2503 = vpop.permute.xlu0 %2502
    %2504 = vrot.lane.b32.xlu0 %v2474, 104
    %v2505 = vpop.permute.xlu0 %2504
    %2506 = vrot.lane.b32.xlu0 %v2477, 104
    %v2507 = vpop.permute.xlu0 %2506
    %2508 = vrot.lane.b32.xlu0 %v2466, 96
    %v2509 = vpop.permute.xlu0 %2508
    %2510 = vrot.lane.b32.xlu0 %v2469, 96
    %v2511 = vpop.permute.xlu0 %2510
    %v2512 = vsel %vm177, %v2466, 0
    %v2514 = vsel %vm177, %v2469, 0
    %v2516 = vsel %vm177, %v2509, 0
    %v2518 = vsel %vm177, %v2511, 0
    %2520 = vmatprep.subr.mxu0 0.0
    %2521 = vmatpush1.xpose.msra.mxu0 0.0
    %2522 = vmatprep.subr.mxu0 0.0
    %2523 = vmatpush1.xpose.msra.mxu0 0.0
    %2524 = vmatprep.subr.mxu0 0.0
    %2525 = vmatpush1.xpose.msra.mxu0 0.0
    %2526 = vmatprep.subr.mxu0 0.0
    %2527 = vmatpush1.xpose.msra.mxu0 0.0
    %2528 = vmatprep.subr.mxu0 0.0
    %2529 = vmatpush1.xpose.msra.mxu0 0.0
    %2530 = vmatprep.subr.mxu0 0.0
    %2531 = vmatpush1.xpose.msra.mxu0 0.0
    %2532 = vmatprep.subr.mxu0 0.0
    %2533 = vmatpush1.xpose.msra.mxu0 0.0
    %2534 = vmatprep.subr.mxu0 0.0
    %2535 = vmatpush1.xpose.msra.mxu0 0.0
    %2536 = vmatprep.subr.mxu0 0.0
    %2537 = vmatpush1.xpose.msra.mxu0 0.0
    %2538 = vmatprep.subr.mxu0 0.0
    %2539 = vmatpush1.xpose.msra.mxu0 0.0
    %2540 = vmatprep.subr.mxu0 0.0
    %2541 = vmatpush1.xpose.msra.mxu0 0.0
    %2542 = vmatprep.subr.mxu0 0.0
    %2543 = vmatpush1.xpose.msra.mxu0 0.0
    %2544 = vmatprep.subr.mxu0 0.0
    %2545 = vmatpush1.xpose.msra.mxu0 0.0
    %2546 = vmatprep.subr.mxu0 0.0
    %2547 = vmatpush1.xpose.msra.mxu0 0.0
    %2548 = vmatprep.subr.mxu0 0.0
    %2549 = vmatpush1.xpose.msra.mxu0 %v2518
    %2550 = vmatprep.subr.mxu0 0.0
    %2551 = vmatpush1.xpose.msra.mxu0 %v2516
    %2552 = vmatprep.subr.mxu0 0.0
    %2553 = vmatpush2.xpose.msra.mxu0 0.0
    %2554 = vmatprep.subr.mxu0 0.0
    %2555 = vmatpush2.xpose.msra.mxu0 0.0
    %2556 = vmatprep.subr.mxu0 0.0
    %2557 = vmatpush2.xpose.msra.mxu0 0.0
    %2558 = vmatprep.subr.mxu0 0.0
    %2559 = vmatpush2.xpose.msra.mxu0 0.0
    %2560 = vmatprep.subr.mxu0 0.0
    %2561 = vmatpush2.xpose.msra.mxu0 0.0
    %2562 = vmatprep.subr.mxu0 0.0
    %2563 = vmatpush2.xpose.msra.mxu0 0.0
    %2564 = vmatprep.subr.mxu0 0.0
    %2565 = vmatpush2.xpose.msra.mxu0 0.0
    %2566 = vmatprep.subr.mxu0 0.0
    %2567 = vmatpush2.xpose.msra.mxu0 0.0
    %2568 = vmatprep.subr.mxu0 0.0
    %2569 = vmatpush2.xpose.msra.mxu0 0.0
    %2570 = vmatprep.subr.mxu0 0.0
    %2571 = vmatpush2.xpose.msra.mxu0 0.0
    %2572 = vmatprep.subr.mxu0 0.0
    %2573 = vmatpush2.xpose.msra.mxu0 0.0
    %2574 = vmatprep.subr.mxu0 0.0
    %2575 = vmatpush2.xpose.msra.mxu0 0.0
    %2576 = vmatprep.subr.mxu0 0.0
    %2577 = vmatpush2.xpose.msra.mxu0 0.0
    %2578 = vmatprep.subr.mxu0 0.0
    %2579 = vmatpush2.xpose.msra.mxu0 0.0
    %2580 = vmatprep.subr.mxu0 0.0
    %2581 = vmatpush2.xpose.msra.mxu0 0.0
    %2582 = vmatprep.subr.mxu0 0.0
    %2583 = vmatpush2.xpose.msra.mxu0 0.0
    %2584 = vmatprep.mubr.f32.mxu0 0.0
    %2585 = vmatmul.mubr.f32.gmra.mxu0 %v2512
    %v2586 = vpop.f32.mrf.mxu0
    %v2587 = vadd.f32 0.0, %v2586
    %v2588 = vpop.f32.mrf.mxu0
    %2589 = vmatprep.mubr.f32.mxu0 0.0
    %2590 = vmatmul.mubr.f32.gmra.mxu0 %v2514
    %v2591 = vpop.f32.mrf.mxu0
    %v2592 = vadd.f32 0.0, %v2591
    %v2593 = vpop.f32.mrf.mxu0
    %2594 = vdwg.mxu0
    %2595 = vrot.lane.b32.xlu0 %v2474, 96
    %v2596 = vpop.permute.xlu0 %2595
    %2597 = vrot.lane.b32.xlu0 %v2477, 96
    %v2598 = vpop.permute.xlu0 %2597
    %v2599 = vsel %vm177, %v2474, 0
    %v2601 = vsel %vm177, %v2477, 0
    %v2603 = vsel %vm177, %v2596, 0
    %v2605 = vsel %vm177, %v2598, 0
    %2607 = vmatprep.subr.mxu0 0.0
    %2608 = vmatpush1.xpose.msra.mxu0 0.0
    %2609 = vmatprep.subr.mxu0 0.0
    %2610 = vmatpush1.xpose.msra.mxu0 0.0
    %2611 = vmatprep.subr.mxu0 0.0
    %2612 = vmatpush1.xpose.msra.mxu0 0.0
    %2613 = vmatprep.subr.mxu0 0.0
    %2614 = vmatpush1.xpose.msra.mxu0 0.0
    %2615 = vmatprep.subr.mxu0 0.0
    %2616 = vmatpush1.xpose.msra.mxu0 0.0
    %2617 = vmatprep.subr.mxu0 0.0
    %2618 = vmatpush1.xpose.msra.mxu0 0.0
    %2619 = vmatprep.subr.mxu0 0.0
    %2620 = vmatpush1.xpose.msra.mxu0 0.0
    %2621 = vmatprep.subr.mxu0 0.0
    %2622 = vmatpush1.xpose.msra.mxu0 0.0
    %2623 = vmatprep.subr.mxu0 0.0
    %2624 = vmatpush1.xpose.msra.mxu0 0.0
    %2625 = vmatprep.subr.mxu0 0.0
    %2626 = vmatpush1.xpose.msra.mxu0 0.0
    %2627 = vmatprep.subr.mxu0 0.0
    %2628 = vmatpush1.xpose.msra.mxu0 0.0
    %2629 = vmatprep.subr.mxu0 0.0
    %2630 = vmatpush1.xpose.msra.mxu0 0.0
    %2631 = vmatprep.subr.mxu0 0.0
    %2632 = vmatpush1.xpose.msra.mxu0 0.0
    %2633 = vmatprep.subr.mxu0 0.0
    %2634 = vmatpush1.xpose.msra.mxu0 0.0
    %2635 = vmatprep.subr.mxu0 0.0
    %2636 = vmatpush1.xpose.msra.mxu0 %v2605
    %2637 = vmatprep.subr.mxu0 0.0
    %2638 = vmatpush1.xpose.msra.mxu0 %v2603
    %2639 = vmatprep.subr.mxu0 0.0
    %2640 = vmatpush2.xpose.msra.mxu0 0.0
    %2641 = vmatprep.subr.mxu0 0.0
    %2642 = vmatpush2.xpose.msra.mxu0 0.0
    %2643 = vmatprep.subr.mxu0 0.0
    %2644 = vmatpush2.xpose.msra.mxu0 0.0
    %2645 = vmatprep.subr.mxu0 0.0
    %2646 = vmatpush2.xpose.msra.mxu0 0.0
    %2647 = vmatprep.subr.mxu0 0.0
    %2648 = vmatpush2.xpose.msra.mxu0 0.0
    %2649 = vmatprep.subr.mxu0 0.0
    %2650 = vmatpush2.xpose.msra.mxu0 0.0
    %2651 = vmatprep.subr.mxu0 0.0
    %2652 = vmatpush2.xpose.msra.mxu0 0.0
    %2653 = vmatprep.subr.mxu0 0.0
    %2654 = vmatpush2.xpose.msra.mxu0 0.0
    %2655 = vmatprep.subr.mxu0 0.0
    %2656 = vmatpush2.xpose.msra.mxu0 0.0
    %2657 = vmatprep.subr.mxu0 0.0
    %2658 = vmatpush2.xpose.msra.mxu0 0.0
    %2659 = vmatprep.subr.mxu0 0.0
    %2660 = vmatpush2.xpose.msra.mxu0 0.0
    %2661 = vmatprep.subr.mxu0 0.0
    %2662 = vmatpush2.xpose.msra.mxu0 0.0
    %2663 = vmatprep.subr.mxu0 0.0
    %2664 = vmatpush2.xpose.msra.mxu0 0.0
    %2665 = vmatprep.subr.mxu0 0.0
    %2666 = vmatpush2.xpose.msra.mxu0 0.0
    %2667 = vmatprep.subr.mxu0 0.0
    %2668 = vmatpush2.xpose.msra.mxu0 0.0
    %2669 = vmatprep.subr.mxu0 0.0
    %2670 = vmatpush2.xpose.msra.mxu0 0.0
    %2671 = vmatprep.mubr.f32.mxu0 0.0
    %2672 = vmatmul.mubr.f32.gmra.mxu0 %v2599
    %v2673 = vpop.f32.mrf.mxu0
    %v2674 = vadd.f32 0.0, %v2673
    %v2675 = vpop.f32.mrf.mxu0
    %2676 = vmatprep.mubr.f32.mxu0 0.0
    %2677 = vmatmul.mubr.f32.gmra.mxu0 %v2601
    %v2678 = vpop.f32.mrf.mxu0
    %v2679 = vadd.f32 0.0, %v2678
    %v2680 = vpop.f32.mrf.mxu0
    %2681 = vdwg.mxu0
    %2682 = vrot.lane.b32.xlu0 %v2485, 96
    %v2683 = vpop.permute.xlu0 %2682
    %2684 = vrot.lane.b32.xlu0 %v2487, 96
    %v2685 = vpop.permute.xlu0 %2684
    %v2686 = vsel %vm177, %v2485, 0
    %v2688 = vsel %vm177, %v2487, 0
    %v2690 = vsel %vm177, %v2683, 0
    %v2692 = vsel %vm177, %v2685, 0
    %2694 = vmatprep.subr.mxu0 0.0
    %2695 = vmatpush1.xpose.msra.mxu0 0.0
    %2696 = vmatprep.subr.mxu0 0.0
    %2697 = vmatpush1.xpose.msra.mxu0 0.0
    %2698 = vmatprep.subr.mxu0 0.0
    %2699 = vmatpush1.xpose.msra.mxu0 0.0
    %2700 = vmatprep.subr.mxu0 0.0
    %2701 = vmatpush1.xpose.msra.mxu0 0.0
    %2702 = vmatprep.subr.mxu0 0.0
    %2703 = vmatpush1.xpose.msra.mxu0 0.0
    %2704 = vmatprep.subr.mxu0 0.0
    %2705 = vmatpush1.xpose.msra.mxu0 0.0
    %2706 = vmatprep.subr.mxu0 0.0
    %2707 = vmatpush1.xpose.msra.mxu0 0.0
    %2708 = vmatprep.subr.mxu0 0.0
    %2709 = vmatpush1.xpose.msra.mxu0 0.0
    %2710 = vmatprep.subr.mxu0 0.0
    %2711 = vmatpush1.xpose.msra.mxu0 0.0
    %2712 = vmatprep.subr.mxu0 0.0
    %2713 = vmatpush1.xpose.msra.mxu0 0.0
    %2714 = vmatprep.subr.mxu0 0.0
    %2715 = vmatpush1.xpose.msra.mxu0 0.0
    %2716 = vmatprep.subr.mxu0 0.0
    %2717 = vmatpush1.xpose.msra.mxu0 0.0
    %2718 = vmatprep.subr.mxu0 0.0
    %2719 = vmatpush1.xpose.msra.mxu0 0.0
    %2720 = vmatprep.subr.mxu0 0.0
    %2721 = vmatpush1.xpose.msra.mxu0 0.0
    %2722 = vmatprep.subr.mxu0 0.0
    %2723 = vmatpush1.xpose.msra.mxu0 %v2692
    %2724 = vmatprep.subr.mxu0 0.0
    %2725 = vmatpush1.xpose.msra.mxu0 %v2690
    %2726 = vmatprep.subr.mxu0 0.0
    %2727 = vmatpush2.xpose.msra.mxu0 0.0
    %2728 = vmatprep.subr.mxu0 0.0
    %2729 = vmatpush2.xpose.msra.mxu0 0.0
    %2730 = vmatprep.subr.mxu0 0.0
    %2731 = vmatpush2.xpose.msra.mxu0 0.0
    %2732 = vmatprep.subr.mxu0 0.0
    %2733 = vmatpush2.xpose.msra.mxu0 0.0
    %2734 = vmatprep.subr.mxu0 0.0
    %2735 = vmatpush2.xpose.msra.mxu0 0.0
    %2736 = vmatprep.subr.mxu0 0.0
    %2737 = vmatpush2.xpose.msra.mxu0 0.0
    %2738 = vmatprep.subr.mxu0 0.0
    %2739 = vmatpush2.xpose.msra.mxu0 0.0
    %2740 = vmatprep.subr.mxu0 0.0
    %2741 = vmatpush2.xpose.msra.mxu0 0.0
    %2742 = vmatprep.subr.mxu0 0.0
    %2743 = vmatpush2.xpose.msra.mxu0 0.0
    %2744 = vmatprep.subr.mxu0 0.0
    %2745 = vmatpush2.xpose.msra.mxu0 0.0
    %2746 = vmatprep.subr.mxu0 0.0
    %2747 = vmatpush2.xpose.msra.mxu0 0.0
    %2748 = vmatprep.subr.mxu0 0.0
    %2749 = vmatpush2.xpose.msra.mxu0 0.0
    %2750 = vmatprep.subr.mxu0 0.0
    %2751 = vmatpush2.xpose.msra.mxu0 0.0
    %2752 = vmatprep.subr.mxu0 0.0
    %2753 = vmatpush2.xpose.msra.mxu0 0.0
    %2754 = vmatprep.subr.mxu0 0.0
    %2755 = vmatpush2.xpose.msra.mxu0 0.0
    %2756 = vmatprep.subr.mxu0 0.0
    %2757 = vmatpush2.xpose.msra.mxu0 0.0
    %2758 = vmatprep.mubr.f32.mxu0 0.0
    %2759 = vmatmul.mubr.f32.gmra.mxu0 %v2686
    %v2760 = vpop.f32.mrf.mxu0
    %v2761 = vadd.f32 0.0, %v2760
    %v2762 = vpop.f32.mrf.mxu0
    %2763 = vmatprep.mubr.f32.mxu0 0.0
    %2764 = vmatmul.mubr.f32.gmra.mxu0 %v2688
    %v2765 = vpop.f32.mrf.mxu0
    %v2766 = vadd.f32 0.0, %v2765
    %v2767 = vpop.f32.mrf.mxu0
    %2768 = vdwg.mxu0
    %2769 = vrot.lane.b32.xlu0 %v2489, 96
    %v2770 = vpop.permute.xlu0 %2769
    %2771 = vrot.lane.b32.xlu0 %v2491, 96
    %v2772 = vpop.permute.xlu0 %2771
    %v2773 = vsel %vm177, %v2489, 0
    %v2775 = vsel %vm177, %v2491, 0
    %v2777 = vsel %vm177, %v2770, 0
    %v2779 = vsel %vm177, %v2772, 0
    %2781 = vmatprep.subr.mxu0 0.0
    %2782 = vmatpush1.xpose.msra.mxu0 0.0
    %2783 = vmatprep.subr.mxu0 0.0
    %2784 = vmatpush1.xpose.msra.mxu0 0.0
    %2785 = vmatprep.subr.mxu0 0.0
    %2786 = vmatpush1.xpose.msra.mxu0 0.0
    %2787 = vmatprep.subr.mxu0 0.0
    %2788 = vmatpush1.xpose.msra.mxu0 0.0
    %2789 = vmatprep.subr.mxu0 0.0
    %2790 = vmatpush1.xpose.msra.mxu0 0.0
    %2791 = vmatprep.subr.mxu0 0.0
    %2792 = vmatpush1.xpose.msra.mxu0 0.0
    %2793 = vmatprep.subr.mxu0 0.0
    %2794 = vmatpush1.xpose.msra.mxu0 0.0
    %2795 = vmatprep.subr.mxu0 0.0
    %2796 = vmatpush1.xpose.msra.mxu0 0.0
    %2797 = vmatprep.subr.mxu0 0.0
    %2798 = vmatpush1.xpose.msra.mxu0 0.0
    %2799 = vmatprep.subr.mxu0 0.0
    %2800 = vmatpush1.xpose.msra.mxu0 0.0
    %2801 = vmatprep.subr.mxu0 0.0
    %2802 = vmatpush1.xpose.msra.mxu0 0.0
    %2803 = vmatprep.subr.mxu0 0.0
    %2804 = vmatpush1.xpose.msra.mxu0 0.0
    %2805 = vmatprep.subr.mxu0 0.0
    %2806 = vmatpush1.xpose.msra.mxu0 0.0
    %2807 = vmatprep.subr.mxu0 0.0
    %2808 = vmatpush1.xpose.msra.mxu0 0.0
    %2809 = vmatprep.subr.mxu0 0.0
    %2810 = vmatpush1.xpose.msra.mxu0 %v2779
    %2811 = vmatprep.subr.mxu0 0.0
    %2812 = vmatpush1.xpose.msra.mxu0 %v2777
    %2813 = vmatprep.subr.mxu0 0.0
    %2814 = vmatpush2.xpose.msra.mxu0 0.0
    %2815 = vmatprep.subr.mxu0 0.0
    %2816 = vmatpush2.xpose.msra.mxu0 0.0
    %2817 = vmatprep.subr.mxu0 0.0
    %2818 = vmatpush2.xpose.msra.mxu0 0.0
    %2819 = vmatprep.subr.mxu0 0.0
    %2820 = vmatpush2.xpose.msra.mxu0 0.0
    %2821 = vmatprep.subr.mxu0 0.0
    %2822 = vmatpush2.xpose.msra.mxu0 0.0
    %2823 = vmatprep.subr.mxu0 0.0
    %2824 = vmatpush2.xpose.msra.mxu0 0.0
    %2825 = vmatprep.subr.mxu0 0.0
    %2826 = vmatpush2.xpose.msra.mxu0 0.0
    %2827 = vmatprep.subr.mxu0 0.0
    %2828 = vmatpush2.xpose.msra.mxu0 0.0
    %2829 = vmatprep.subr.mxu0 0.0
    %2830 = vmatpush2.xpose.msra.mxu0 0.0
    %2831 = vmatprep.subr.mxu0 0.0
    %2832 = vmatpush2.xpose.msra.mxu0 0.0
    %2833 = vmatprep.subr.mxu0 0.0
    %2834 = vmatpush2.xpose.msra.mxu0 0.0
    %2835 = vmatprep.subr.mxu0 0.0
    %2836 = vmatpush2.xpose.msra.mxu0 0.0
    %2837 = vmatprep.subr.mxu0 0.0
    %2838 = vmatpush2.xpose.msra.mxu0 0.0
    %2839 = vmatprep.subr.mxu0 0.0
    %2840 = vmatpush2.xpose.msra.mxu0 0.0
    %2841 = vmatprep.subr.mxu0 0.0
    %2842 = vmatpush2.xpose.msra.mxu0 0.0
    %2843 = vmatprep.subr.mxu0 0.0
    %2844 = vmatpush2.xpose.msra.mxu0 0.0
    %2845 = vmatprep.mubr.f32.mxu0 0.0
    %2846 = vmatmul.mubr.f32.gmra.mxu0 %v2773
    %v2847 = vpop.f32.mrf.mxu0
    %v2848 = vadd.f32 0.0, %v2847
    %v2849 = vpop.f32.mrf.mxu0
    %2850 = vmatprep.mubr.f32.mxu0 0.0
    %2851 = vmatmul.mubr.f32.gmra.mxu0 %v2775
    %v2852 = vpop.f32.mrf.mxu0
    %v2853 = vadd.f32 0.0, %v2852
    %v2854 = vpop.f32.mrf.mxu0
    %2855 = vdwg.mxu0
    %2856 = vrot.lane.b32.xlu0 %v2493, 96
    %v2857 = vpop.permute.xlu0 %2856
    %2858 = vrot.lane.b32.xlu0 %v2495, 96
    %v2859 = vpop.permute.xlu0 %2858
    %v2860 = vsel %vm177, %v2493, 0
    %v2862 = vsel %vm177, %v2495, 0
    %v2864 = vsel %vm177, %v2857, 0
    %v2866 = vsel %vm177, %v2859, 0
    %2868 = vmatprep.subr.mxu0 0.0
    %2869 = vmatpush1.xpose.msra.mxu0 0.0
    %2870 = vmatprep.subr.mxu0 0.0
    %2871 = vmatpush1.xpose.msra.mxu0 0.0
    %2872 = vmatprep.subr.mxu0 0.0
    %2873 = vmatpush1.xpose.msra.mxu0 0.0
    %2874 = vmatprep.subr.mxu0 0.0
    %2875 = vmatpush1.xpose.msra.mxu0 0.0
    %2876 = vmatprep.subr.mxu0 0.0
    %2877 = vmatpush1.xpose.msra.mxu0 0.0
    %2878 = vmatprep.subr.mxu0 0.0
    %2879 = vmatpush1.xpose.msra.mxu0 0.0
    %2880 = vmatprep.subr.mxu0 0.0
    %2881 = vmatpush1.xpose.msra.mxu0 0.0
    %2882 = vmatprep.subr.mxu0 0.0
    %2883 = vmatpush1.xpose.msra.mxu0 0.0
    %2884 = vmatprep.subr.mxu0 0.0
    %2885 = vmatpush1.xpose.msra.mxu0 0.0
    %2886 = vmatprep.subr.mxu0 0.0
    %2887 = vmatpush1.xpose.msra.mxu0 0.0
    %2888 = vmatprep.subr.mxu0 0.0
    %2889 = vmatpush1.xpose.msra.mxu0 0.0
    %2890 = vmatprep.subr.mxu0 0.0
    %2891 = vmatpush1.xpose.msra.mxu0 0.0
    %2892 = vmatprep.subr.mxu0 0.0
    %2893 = vmatpush1.xpose.msra.mxu0 0.0
    %2894 = vmatprep.subr.mxu0 0.0
    %2895 = vmatpush1.xpose.msra.mxu0 0.0
    %2896 = vmatprep.subr.mxu0 0.0
    %2897 = vmatpush1.xpose.msra.mxu0 %v2866
    %2898 = vmatprep.subr.mxu0 0.0
    %2899 = vmatpush1.xpose.msra.mxu0 %v2864
    %2900 = vmatprep.subr.mxu0 0.0
    %2901 = vmatpush2.xpose.msra.mxu0 0.0
    %2902 = vmatprep.subr.mxu0 0.0
    %2903 = vmatpush2.xpose.msra.mxu0 0.0
    %2904 = vmatprep.subr.mxu0 0.0
    %2905 = vmatpush2.xpose.msra.mxu0 0.0
    %2906 = vmatprep.subr.mxu0 0.0
    %2907 = vmatpush2.xpose.msra.mxu0 0.0
    %2908 = vmatprep.subr.mxu0 0.0
    %2909 = vmatpush2.xpose.msra.mxu0 0.0
    %2910 = vmatprep.subr.mxu0 0.0
    %2911 = vmatpush2.xpose.msra.mxu0 0.0
    %2912 = vmatprep.subr.mxu0 0.0
    %2913 = vmatpush2.xpose.msra.mxu0 0.0
    %2914 = vmatprep.subr.mxu0 0.0
    %2915 = vmatpush2.xpose.msra.mxu0 0.0
    %2916 = vmatprep.subr.mxu0 0.0
    %2917 = vmatpush2.xpose.msra.mxu0 0.0
    %2918 = vmatprep.subr.mxu0 0.0
    %2919 = vmatpush2.xpose.msra.mxu0 0.0
    %2920 = vmatprep.subr.mxu0 0.0
    %2921 = vmatpush2.xpose.msra.mxu0 0.0
    %2922 = vmatprep.subr.mxu0 0.0
    %2923 = vmatpush2.xpose.msra.mxu0 0.0
    %2924 = vmatprep.subr.mxu0 0.0
    %2925 = vmatpush2.xpose.msra.mxu0 0.0
    %2926 = vmatprep.subr.mxu0 0.0
    %2927 = vmatpush2.xpose.msra.mxu0 0.0
    %2928 = vmatprep.subr.mxu0 0.0
    %2929 = vmatpush2.xpose.msra.mxu0 0.0
    %2930 = vmatprep.subr.mxu0 0.0
    %2931 = vmatpush2.xpose.msra.mxu0 0.0
    %2932 = vmatprep.mubr.f32.mxu0 0.0
    %2933 = vmatmul.mubr.f32.gmra.mxu0 %v2860
    %v2934 = vpop.f32.mrf.mxu0
    %v2935 = vadd.f32 0.0, %v2934
    %v2936 = vpop.f32.mrf.mxu0
    %2937 = vmatprep.mubr.f32.mxu0 0.0
    %2938 = vmatmul.mubr.f32.gmra.mxu0 %v2862
    %v2939 = vpop.f32.mrf.mxu0
    %v2940 = vadd.f32 0.0, %v2939
    %v2941 = vpop.f32.mrf.mxu0
    %2942 = vdwg.mxu0
    %2943 = vrot.lane.b32.xlu0 %v2497, 96
    %v2944 = vpop.permute.xlu0 %2943
    %2945 = vrot.lane.b32.xlu0 %v2499, 96
    %v2946 = vpop.permute.xlu0 %2945
    %v2947 = vsel %vm177, %v2497, 0
    %v2949 = vsel %vm177, %v2499, 0
    %v2951 = vsel %vm177, %v2944, 0
    %v2953 = vsel %vm177, %v2946, 0
    %2955 = vmatprep.subr.mxu0 0.0
    %2956 = vmatpush1.xpose.msra.mxu0 0.0
    %2957 = vmatprep.subr.mxu0 0.0
    %2958 = vmatpush1.xpose.msra.mxu0 0.0
    %2959 = vmatprep.subr.mxu0 0.0
    %2960 = vmatpush1.xpose.msra.mxu0 0.0
    %2961 = vmatprep.subr.mxu0 0.0
    %2962 = vmatpush1.xpose.msra.mxu0 0.0
    %2963 = vmatprep.subr.mxu0 0.0
    %2964 = vmatpush1.xpose.msra.mxu0 0.0
    %2965 = vmatprep.subr.mxu0 0.0
    %2966 = vmatpush1.xpose.msra.mxu0 0.0
    %2967 = vmatprep.subr.mxu0 0.0
    %2968 = vmatpush1.xpose.msra.mxu0 0.0
    %2969 = vmatprep.subr.mxu0 0.0
    %2970 = vmatpush1.xpose.msra.mxu0 0.0
    %2971 = vmatprep.subr.mxu0 0.0
    %2972 = vmatpush1.xpose.msra.mxu0 0.0
    %2973 = vmatprep.subr.mxu0 0.0
    %2974 = vmatpush1.xpose.msra.mxu0 0.0
    %2975 = vmatprep.subr.mxu0 0.0
    %2976 = vmatpush1.xpose.msra.mxu0 0.0
    %2977 = vmatprep.subr.mxu0 0.0
    %2978 = vmatpush1.xpose.msra.mxu0 0.0
    %2979 = vmatprep.subr.mxu0 0.0
    %2980 = vmatpush1.xpose.msra.mxu0 0.0
    %2981 = vmatprep.subr.mxu0 0.0
    %2982 = vmatpush1.xpose.msra.mxu0 0.0
    %2983 = vmatprep.subr.mxu0 0.0
    %2984 = vmatpush1.xpose.msra.mxu0 %v2953
    %2985 = vmatprep.subr.mxu0 0.0
    %2986 = vmatpush1.xpose.msra.mxu0 %v2951
    %2987 = vmatprep.subr.mxu0 0.0
    %2988 = vmatpush2.xpose.msra.mxu0 0.0
    %2989 = vmatprep.subr.mxu0 0.0
    %2990 = vmatpush2.xpose.msra.mxu0 0.0
    %2991 = vmatprep.subr.mxu0 0.0
    %2992 = vmatpush2.xpose.msra.mxu0 0.0
    %2993 = vmatprep.subr.mxu0 0.0
    %2994 = vmatpush2.xpose.msra.mxu0 0.0
    %2995 = vmatprep.subr.mxu0 0.0
    %2996 = vmatpush2.xpose.msra.mxu0 0.0
    %2997 = vmatprep.subr.mxu0 0.0
    %2998 = vmatpush2.xpose.msra.mxu0 0.0
    %2999 = vmatprep.subr.mxu0 0.0
    %3000 = vmatpush2.xpose.msra.mxu0 0.0
    %3001 = vmatprep.subr.mxu0 0.0
    %3002 = vmatpush2.xpose.msra.mxu0 0.0
    %3003 = vmatprep.subr.mxu0 0.0
    %3004 = vmatpush2.xpose.msra.mxu0 0.0
    %3005 = vmatprep.subr.mxu0 0.0
    %3006 = vmatpush2.xpose.msra.mxu0 0.0
    %3007 = vmatprep.subr.mxu0 0.0
    %3008 = vmatpush2.xpose.msra.mxu0 0.0
    %3009 = vmatprep.subr.mxu0 0.0
    %3010 = vmatpush2.xpose.msra.mxu0 0.0
    %3011 = vmatprep.subr.mxu0 0.0
    %3012 = vmatpush2.xpose.msra.mxu0 0.0
    %3013 = vmatprep.subr.mxu0 0.0
    %3014 = vmatpush2.xpose.msra.mxu0 0.0
    %3015 = vmatprep.subr.mxu0 0.0
    %3016 = vmatpush2.xpose.msra.mxu0 0.0
    %3017 = vmatprep.subr.mxu0 0.0
    %3018 = vmatpush2.xpose.msra.mxu0 0.0
    %3019 = vmatprep.mubr.f32.mxu0 0.0
    %3020 = vmatmul.mubr.f32.gmra.mxu0 %v2947
    %v3021 = vpop.f32.mrf.mxu0
    %v3022 = vadd.f32 0.0, %v3021
    %v3023 = vpop.f32.mrf.mxu0
    %3024 = vmatprep.mubr.f32.mxu0 0.0
    %3025 = vmatmul.mubr.f32.gmra.mxu0 %v2949
    %v3026 = vpop.f32.mrf.mxu0
    %v3027 = vadd.f32 0.0, %v3026
    %v3028 = vpop.f32.mrf.mxu0
    %3029 = vdwg.mxu0
    %3030 = vrot.lane.b32.xlu0 %v2501, 96
    %v3031 = vpop.permute.xlu0 %3030
    %3032 = vrot.lane.b32.xlu0 %v2503, 96
    %v3033 = vpop.permute.xlu0 %3032
    %v3034 = vsel %vm177, %v2501, 0
    %v3036 = vsel %vm177, %v2503, 0
    %v3038 = vsel %vm177, %v3031, 0
    %v3040 = vsel %vm177, %v3033, 0
    %3042 = vmatprep.subr.mxu0 0.0
    %3043 = vmatpush1.xpose.msra.mxu0 0.0
    %3044 = vmatprep.subr.mxu0 0.0
    %3045 = vmatpush1.xpose.msra.mxu0 0.0
    %3046 = vmatprep.subr.mxu0 0.0
    %3047 = vmatpush1.xpose.msra.mxu0 0.0
    %3048 = vmatprep.subr.mxu0 0.0
    %3049 = vmatpush1.xpose.msra.mxu0 0.0
    %3050 = vmatprep.subr.mxu0 0.0
    %3051 = vmatpush1.xpose.msra.mxu0 0.0
    %3052 = vmatprep.subr.mxu0 0.0
    %3053 = vmatpush1.xpose.msra.mxu0 0.0
    %3054 = vmatprep.subr.mxu0 0.0
    %3055 = vmatpush1.xpose.msra.mxu0 0.0
    %3056 = vmatprep.subr.mxu0 0.0
    %3057 = vmatpush1.xpose.msra.mxu0 0.0
    %3058 = vmatprep.subr.mxu0 0.0
    %3059 = vmatpush1.xpose.msra.mxu0 0.0
    %3060 = vmatprep.subr.mxu0 0.0
    %3061 = vmatpush1.xpose.msra.mxu0 0.0
    %3062 = vmatprep.subr.mxu0 0.0
    %3063 = vmatpush1.xpose.msra.mxu0 0.0
    %3064 = vmatprep.subr.mxu0 0.0
    %3065 = vmatpush1.xpose.msra.mxu0 0.0
    %3066 = vmatprep.subr.mxu0 0.0
    %3067 = vmatpush1.xpose.msra.mxu0 0.0
    %3068 = vmatprep.subr.mxu0 0.0
    %3069 = vmatpush1.xpose.msra.mxu0 0.0
    %3070 = vmatprep.subr.mxu0 0.0
    %3071 = vmatpush1.xpose.msra.mxu0 %v3040
    %3072 = vmatprep.subr.mxu0 0.0
    %3073 = vmatpush1.xpose.msra.mxu0 %v3038
    %3074 = vmatprep.subr.mxu0 0.0
    %3075 = vmatpush2.xpose.msra.mxu0 0.0
    %3076 = vmatprep.subr.mxu0 0.0
    %3077 = vmatpush2.xpose.msra.mxu0 0.0
    %3078 = vmatprep.subr.mxu0 0.0
    %3079 = vmatpush2.xpose.msra.mxu0 0.0
    %3080 = vmatprep.subr.mxu0 0.0
    %3081 = vmatpush2.xpose.msra.mxu0 0.0
    %3082 = vmatprep.subr.mxu0 0.0
    %3083 = vmatpush2.xpose.msra.mxu0 0.0
    %3084 = vmatprep.subr.mxu0 0.0
    %3085 = vmatpush2.xpose.msra.mxu0 0.0
    %3086 = vmatprep.subr.mxu0 0.0
    %3087 = vmatpush2.xpose.msra.mxu0 0.0
    %3088 = vmatprep.subr.mxu0 0.0
    %3089 = vmatpush2.xpose.msra.mxu0 0.0
    %3090 = vmatprep.subr.mxu0 0.0
    %3091 = vmatpush2.xpose.msra.mxu0 0.0
    %3092 = vmatprep.subr.mxu0 0.0
    %3093 = vmatpush2.xpose.msra.mxu0 0.0
    %3094 = vmatprep.subr.mxu0 0.0
    %3095 = vmatpush2.xpose.msra.mxu0 0.0
    %3096 = vmatprep.subr.mxu0 0.0
    %3097 = vmatpush2.xpose.msra.mxu0 0.0
    %3098 = vmatprep.subr.mxu0 0.0
    %3099 = vmatpush2.xpose.msra.mxu0 0.0
    %3100 = vmatprep.subr.mxu0 0.0
    %3101 = vmatpush2.xpose.msra.mxu0 0.0
    %3102 = vmatprep.subr.mxu0 0.0
    %3103 = vmatpush2.xpose.msra.mxu0 0.0
    %3104 = vmatprep.subr.mxu0 0.0
    %3105 = vmatpush2.xpose.msra.mxu0 0.0
    %3106 = vmatprep.mubr.f32.mxu0 0.0
    %3107 = vmatmul.mubr.f32.gmra.mxu0 %v3034
    %v3108 = vpop.f32.mrf.mxu0
    %v3109 = vadd.f32 0.0, %v3108
    %v3110 = vpop.f32.mrf.mxu0
    %3111 = vmatprep.mubr.f32.mxu0 0.0
    %3112 = vmatmul.mubr.f32.gmra.mxu0 %v3036
    %v3113 = vpop.f32.mrf.mxu0
    %v3114 = vadd.f32 0.0, %v3113
    %v3115 = vpop.f32.mrf.mxu0
    %3116 = vdwg.mxu0
    %3117 = vrot.lane.b32.xlu0 %v2505, 96
    %v3118 = vpop.permute.xlu0 %3117
    %3119 = vrot.lane.b32.xlu0 %v2507, 96
    %v3120 = vpop.permute.xlu0 %3119
    %v3121 = vsel %vm177, %v2505, 0
    %v3123 = vsel %vm177, %v2507, 0
    %v3125 = vsel %vm177, %v3118, 0
    %v3127 = vsel %vm177, %v3120, 0
    %3129 = vmatprep.subr.mxu0 0.0
    %3130 = vmatpush1.xpose.msra.mxu0 0.0
    %3131 = vmatprep.subr.mxu0 0.0
    %3132 = vmatpush1.xpose.msra.mxu0 0.0
    %3133 = vmatprep.subr.mxu0 0.0
    %3134 = vmatpush1.xpose.msra.mxu0 0.0
    %3135 = vmatprep.subr.mxu0 0.0
    %3136 = vmatpush1.xpose.msra.mxu0 0.0
    %3137 = vmatprep.subr.mxu0 0.0
    %3138 = vmatpush1.xpose.msra.mxu0 0.0
    %3139 = vmatprep.subr.mxu0 0.0
    %3140 = vmatpush1.xpose.msra.mxu0 0.0
    %3141 = vmatprep.subr.mxu0 0.0
    %3142 = vmatpush1.xpose.msra.mxu0 0.0
    %3143 = vmatprep.subr.mxu0 0.0
    %3144 = vmatpush1.xpose.msra.mxu0 0.0
    %3145 = vmatprep.subr.mxu0 0.0
    %3146 = vmatpush1.xpose.msra.mxu0 0.0
    %3147 = vmatprep.subr.mxu0 0.0
    %3148 = vmatpush1.xpose.msra.mxu0 0.0
    %3149 = vmatprep.subr.mxu0 0.0
    %3150 = vmatpush1.xpose.msra.mxu0 0.0
    %3151 = vmatprep.subr.mxu0 0.0
    %3152 = vmatpush1.xpose.msra.mxu0 0.0
    %3153 = vmatprep.subr.mxu0 0.0
    %3154 = vmatpush1.xpose.msra.mxu0 0.0
    %3155 = vmatprep.subr.mxu0 0.0
    %3156 = vmatpush1.xpose.msra.mxu0 0.0
    %3157 = vmatprep.subr.mxu0 0.0
    %3158 = vmatpush1.xpose.msra.mxu0 %v3127
    %3159 = vmatprep.subr.mxu0 0.0
    %3160 = vmatpush1.xpose.msra.mxu0 %v3125
    %3161 = vmatprep.subr.mxu0 0.0
    %3162 = vmatpush2.xpose.msra.mxu0 0.0
    %3163 = vmatprep.subr.mxu0 0.0
    %3164 = vmatpush2.xpose.msra.mxu0 0.0
    %3165 = vmatprep.subr.mxu0 0.0
    %3166 = vmatpush2.xpose.msra.mxu0 0.0
    %3167 = vmatprep.subr.mxu0 0.0
    %3168 = vmatpush2.xpose.msra.mxu0 0.0
    %3169 = vmatprep.subr.mxu0 0.0
    %3170 = vmatpush2.xpose.msra.mxu0 0.0
    %3171 = vmatprep.subr.mxu0 0.0
    %3172 = vmatpush2.xpose.msra.mxu0 0.0
    %3173 = vmatprep.subr.mxu0 0.0
    %3174 = vmatpush2.xpose.msra.mxu0 0.0
    %3175 = vmatprep.subr.mxu0 0.0
    %3176 = vmatpush2.xpose.msra.mxu0 0.0
    %3177 = vmatprep.subr.mxu0 0.0
    %3178 = vmatpush2.xpose.msra.mxu0 0.0
    %3179 = vmatprep.subr.mxu0 0.0
    %3180 = vmatpush2.xpose.msra.mxu0 0.0
    %3181 = vmatprep.subr.mxu0 0.0
    %3182 = vmatpush2.xpose.msra.mxu0 0.0
    %3183 = vmatprep.subr.mxu0 0.0
    %3184 = vmatpush2.xpose.msra.mxu0 0.0
    %3185 = vmatprep.subr.mxu0 0.0
    %3186 = vmatpush2.xpose.msra.mxu0 0.0
    %3187 = vmatprep.subr.mxu0 0.0
    %3188 = vmatpush2.xpose.msra.mxu0 0.0
    %3189 = vmatprep.subr.mxu0 0.0
    %3190 = vmatpush2.xpose.msra.mxu0 0.0
    %3191 = vmatprep.subr.mxu0 0.0
    %3192 = vmatpush2.xpose.msra.mxu0 0.0
    %3193 = vmatprep.mubr.f32.mxu0 0.0
    %3194 = vmatmul.mubr.f32.gmra.mxu0 %v3121
    %v3195 = vpop.f32.mrf.mxu0
    %v3196 = vadd.f32 0.0, %v3195
    %v3197 = vpop.f32.mrf.mxu0
    %3198 = vmatprep.mubr.f32.mxu0 0.0
    %3199 = vmatmul.mubr.f32.gmra.mxu0 %v3123
    %v3200 = vpop.f32.mrf.mxu0
    %v3201 = vadd.f32 0.0, %v3200
    %v3202 = vpop.f32.mrf.mxu0
    %3203 = vdwg.mxu0
    %v3204 = vsel %vm870, %v2587, -inf
    %3205 = vmax.xlane.f32.xlu0 %v3204
    %v3206 = vpop.xlane.xlu0 %3205
    %v3207 = vsel %vm870, %v2592, -inf
    %3208 = vmax.xlane.f32.xlu0 %v3207
    %v3209 = vpop.xlane.xlu0 %3208
    %v3210 = vsel %vm870, %v2674, -inf
    %3211 = vmax.xlane.f32.xlu0 %v3210
    %v3212 = vpop.xlane.xlu0 %3211
    %v3213 = vsel %vm870, %v2679, -inf
    %3214 = vmax.xlane.f32.xlu0 %v3213
    %v3215 = vpop.xlane.xlu0 %3214
    %v3216 = vsel %vm870, %v2761, -inf
    %3217 = vmax.xlane.f32.xlu0 %v3216
    %v3218 = vpop.xlane.xlu0 %3217
    %v3219 = vsel %vm870, %v2766, -inf
    %3220 = vmax.xlane.f32.xlu0 %v3219
    %v3221 = vpop.xlane.xlu0 %3220
    %v3222 = vsel %vm870, %v2848, -inf
    %3223 = vmax.xlane.f32.xlu0 %v3222
    %v3224 = vpop.xlane.xlu0 %3223
    %v3225 = vsel %vm870, %v2853, -inf
    %3226 = vmax.xlane.f32.xlu0 %v3225
    %v3227 = vpop.xlane.xlu0 %3226
    %v3228 = vsel %vm870, %v2935, -inf
    %3229 = vmax.xlane.f32.xlu0 %v3228
    %v3230 = vpop.xlane.xlu0 %3229
    %v3231 = vsel %vm870, %v2940, -inf
    %3232 = vmax.xlane.f32.xlu0 %v3231
    %v3233 = vpop.xlane.xlu0 %3232
    %v3234 = vsel %vm870, %v3022, -inf
    %3235 = vmax.xlane.f32.xlu0 %v3234
    %v3236 = vpop.xlane.xlu0 %3235
    %v3237 = vsel %vm870, %v3027, -inf
    %3238 = vmax.xlane.f32.xlu0 %v3237
    %v3239 = vpop.xlane.xlu0 %3238
    %v3240 = vsel %vm870, %v3109, -inf
    %3241 = vmax.xlane.f32.xlu0 %v3240
    %v3242 = vpop.xlane.xlu0 %3241
    %v3243 = vsel %vm870, %v3114, -inf
    %3244 = vmax.xlane.f32.xlu0 %v3243
    %v3245 = vpop.xlane.xlu0 %3244
    %v3246 = vsel %vm870, %v3196, -inf
    %3247 = vmax.xlane.f32.xlu0 %v3246
    %v3248 = vpop.xlane.xlu0 %3247
    %v3249 = vsel %vm870, %v3201, -inf
    %3250 = vmax.xlane.f32.xlu0 %v3249
    %v3251 = vpop.xlane.xlu0 %3250
    %v3252 = vsub.f32 %v2587, %v3206
    %v3253 = vsub.f32 %v2592, %v3209
    %v3254 = vsub.f32 %v2674, %v3212
    %v3255 = vsub.f32 %v2679, %v3215
    %v3256 = vsub.f32 %v2761, %v3218
    %v3257 = vsub.f32 %v2766, %v3221
    %v3258 = vsub.f32 %v2848, %v3224
    %v3259 = vsub.f32 %v2853, %v3227
    %v3260 = vsub.f32 %v2935, %v3230
    %v3261 = vsub.f32 %v2940, %v3233
    %v3262 = vsub.f32 %v3022, %v3236
    %v3263 = vsub.f32 %v3027, %v3239
    %v3264 = vsub.f32 %v3109, %v3242
    %v3265 = vsub.f32 %v3114, %v3245
    %v3266 = vsub.f32 %v3196, %v3248
    %v3267 = vsub.f32 %v3201, %v3251
    %v3268 = vmul.f32 %v3252, 1.442695
    %v3269 = vpow.pop %v3268
    %v3270 = vmul.f32 %v3253, 1.442695
    %v3271 = vpow.pop %v3270
    %v3272 = vmul.f32 %v3254, 1.442695
    %v3273 = vpow.pop %v3272
    %v3274 = vmul.f32 %v3255, 1.442695
    %v3275 = vpow.pop %v3274
    %v3276 = vmul.f32 %v3256, 1.442695
    %v3277 = vpow.pop %v3276
    %v3278 = vmul.f32 %v3257, 1.442695
    %v3279 = vpow.pop %v3278
    %v3280 = vmul.f32 %v3258, 1.442695
    %v3281 = vpow.pop %v3280
    %v3282 = vmul.f32 %v3259, 1.442695
    %v3283 = vpow.pop %v3282
    %v3284 = vmul.f32 %v3260, 1.442695
    %v3285 = vpow.pop %v3284
    %v3286 = vmul.f32 %v3261, 1.442695
    %v3287 = vpow.pop %v3286
    %v3288 = vmul.f32 %v3262, 1.442695
    %v3289 = vpow.pop %v3288
    %v3290 = vmul.f32 %v3263, 1.442695
    %v3291 = vpow.pop %v3290
    %v3292 = vmul.f32 %v3264, 1.442695
    %v3293 = vpow.pop %v3292
    %v3294 = vmul.f32 %v3265, 1.442695
    %v3295 = vpow.pop %v3294
    %v3296 = vmul.f32 %v3266, 1.442695
    %v3297 = vpow.pop %v3296
    %v3298 = vmul.f32 %v3267, 1.442695
    %v3299 = vpow.pop %v3298
    %v3300 = vsel %vm870, %v3269, 0.0
    %3301 = vadd.xlane.f32.xlu0 %v3300
    %v3302 = vpop.xlane.xlu0 %3301
    %v3303 = vsel %vm870, %v3271, 0.0
    %3304 = vadd.xlane.f32.xlu0 %v3303
    %v3305 = vpop.xlane.xlu0 %3304
    %v3306 = vsel %vm870, %v3273, 0.0
    %3307 = vadd.xlane.f32.xlu0 %v3306
    %v3308 = vpop.xlane.xlu0 %3307
    %v3309 = vsel %vm870, %v3275, 0.0
    %3310 = vadd.xlane.f32.xlu0 %v3309
    %v3311 = vpop.xlane.xlu0 %3310
    %v3312 = vsel %vm870, %v3277, 0.0
    %3313 = vadd.xlane.f32.xlu0 %v3312
    %v3314 = vpop.xlane.xlu0 %3313
    %v3315 = vsel %vm870, %v3279, 0.0
    %3316 = vadd.xlane.f32.xlu0 %v3315
    %v3317 = vpop.xlane.xlu0 %3316
    %v3318 = vsel %vm870, %v3281, 0.0
    %3319 = vadd.xlane.f32.xlu0 %v3318
    %v3320 = vpop.xlane.xlu0 %3319
    %v3321 = vsel %vm870, %v3283, 0.0
    %3322 = vadd.xlane.f32.xlu0 %v3321
    %v3323 = vpop.xlane.xlu0 %3322
    %v3324 = vsel %vm870, %v3285, 0.0
    %3325 = vadd.xlane.f32.xlu0 %v3324
    %v3326 = vpop.xlane.xlu0 %3325
    %v3327 = vsel %vm870, %v3287, 0.0
    %3328 = vadd.xlane.f32.xlu0 %v3327
    %v3329 = vpop.xlane.xlu0 %3328
    %v3330 = vsel %vm870, %v3289, 0.0
    %3331 = vadd.xlane.f32.xlu0 %v3330
    %v3332 = vpop.xlane.xlu0 %3331
    %v3333 = vsel %vm870, %v3291, 0.0
    %3334 = vadd.xlane.f32.xlu0 %v3333
    %v3335 = vpop.xlane.xlu0 %3334
    %v3336 = vsel %vm870, %v3293, 0.0
    %3337 = vadd.xlane.f32.xlu0 %v3336
    %v3338 = vpop.xlane.xlu0 %3337
    %v3339 = vsel %vm870, %v3295, 0.0
    %3340 = vadd.xlane.f32.xlu0 %v3339
    %v3341 = vpop.xlane.xlu0 %3340
    %v3342 = vsel %vm870, %v3297, 0.0
    %3343 = vadd.xlane.f32.xlu0 %v3342
    %v3344 = vpop.xlane.xlu0 %3343
    %v3345 = vsel %vm870, %v3299, 0.0
    %3346 = vadd.xlane.f32.xlu0 %v3345
    %v3347 = vpop.xlane.xlu0 %3346
    %v3348 = vrcp.pop %v3302
    %v3349 = vrcp.pop %v3305
    %v3350 = vrcp.pop %v3308
    %v3351 = vrcp.pop %v3311
    %v3352 = vrcp.pop %v3314
    %v3353 = vrcp.pop %v3317
    %v3354 = vrcp.pop %v3320
    %v3355 = vrcp.pop %v3323
    %v3356 = vrcp.pop %v3326
    %v3357 = vrcp.pop %v3329
    %v3358 = vrcp.pop %v3332
    %v3359 = vrcp.pop %v3335
    %v3360 = vrcp.pop %v3338
    %v3361 = vrcp.pop %v3341
    %v3362 = vrcp.pop %v3344
    %v3363 = vrcp.pop %v3347
    %v3364 = vmul.f32 %v3269, %v3348
    %v3365 = vmul.f32 %v3271, %v3349
    %v3366 = vmul.f32 %v3273, %v3350
    %v3367 = vmul.f32 %v3275, %v3351
    %v3368 = vmul.f32 %v3277, %v3352
    %v3369 = vmul.f32 %v3279, %v3353
    %v3370 = vmul.f32 %v3281, %v3354
    %v3371 = vmul.f32 %v3283, %v3355
    %v3372 = vmul.f32 %v3285, %v3356
    %v3373 = vmul.f32 %v3287, %v3357
    %v3374 = vmul.f32 %v3289, %v3358
    %v3375 = vmul.f32 %v3291, %v3359
    %v3376 = vmul.f32 %v3293, %v3360
    %v3377 = vmul.f32 %v3295, %v3361
    %v3378 = vmul.f32 %v3297, %v3362
    %v3379 = vmul.f32 %v3299, %v3363
    %3380 = vrot.lane.b32.xlu0 %v2466, 64
    %v3381 = vpop.permute.xlu0 %3380
    %3382 = vrot.lane.b32.xlu0 %v2469, 64
    %v3383 = vpop.permute.xlu0 %3382
    %v3387 = vsel %vm870, %v3364, 0
    %v3390 = vsel %vm870, %v3365, 0
    %3392 = vmatprep.subr.mxu0 0.0
    %3393 = vmatpush1.msra.mxu0 0.0
    %3394 = vmatprep.subr.mxu0 0.0
    %3395 = vmatpush1.msra.mxu0 0.0
    %3396 = vmatprep.subr.mxu0 0.0
    %3397 = vmatpush1.msra.mxu0 0.0
    %3398 = vmatprep.subr.mxu0 0.0
    %3399 = vmatpush1.msra.mxu0 0.0
    %3400 = vmatprep.subr.mxu0 0.0
    %3401 = vmatpush1.msra.mxu0 0.0
    %3402 = vmatprep.subr.mxu0 0.0
    %3403 = vmatpush1.msra.mxu0 0.0
    %3404 = vmatprep.subr.mxu0 0.0
    %3405 = vmatpush1.msra.mxu0 0.0
    %3406 = vmatprep.subr.mxu0 0.0
    %3407 = vmatpush1.msra.mxu0 0.0
    %3408 = vmatprep.subr.mxu0 0.0
    %3409 = vmatpush1.msra.mxu0 0.0
    %3410 = vmatprep.subr.mxu0 0.0
    %3411 = vmatpush1.msra.mxu0 0.0
    %3412 = vmatprep.subr.mxu0 0.0
    %3413 = vmatpush1.msra.mxu0 0.0
    %3414 = vmatprep.subr.mxu0 0.0
    %3415 = vmatpush1.msra.mxu0 0.0
    %3416 = vmatprep.subr.mxu0 0.0
    %3417 = vmatpush1.msra.mxu0 0.0
    %3418 = vmatprep.subr.mxu0 0.0
    %3419 = vmatpush1.msra.mxu0 0.0
    %3420 = vmatprep.subr.mxu0 0.0
    %3421 = vmatpush1.msra.mxu0 %v3383
    %3422 = vmatprep.subr.mxu0 0.0
    %3423 = vmatpush1.msra.mxu0 %v3381
    %3424 = vmatprep.subr.mxu0 0.0
    %3425 = vmatpush2.msra.mxu0 0.0
    %3426 = vmatprep.subr.mxu0 0.0
    %3427 = vmatpush2.msra.mxu0 0.0
    %3428 = vmatprep.subr.mxu0 0.0
    %3429 = vmatpush2.msra.mxu0 0.0
    %3430 = vmatprep.subr.mxu0 0.0
    %3431 = vmatpush2.msra.mxu0 0.0
    %3432 = vmatprep.subr.mxu0 0.0
    %3433 = vmatpush2.msra.mxu0 0.0
    %3434 = vmatprep.subr.mxu0 0.0
    %3435 = vmatpush2.msra.mxu0 0.0
    %3436 = vmatprep.subr.mxu0 0.0
    %3437 = vmatpush2.msra.mxu0 0.0
    %3438 = vmatprep.subr.mxu0 0.0
    %3439 = vmatpush2.msra.mxu0 0.0
    %3440 = vmatprep.subr.mxu0 0.0
    %3441 = vmatpush2.msra.mxu0 0.0
    %3442 = vmatprep.subr.mxu0 0.0
    %3443 = vmatpush2.msra.mxu0 0.0
    %3444 = vmatprep.subr.mxu0 0.0
    %3445 = vmatpush2.msra.mxu0 0.0
    %3446 = vmatprep.subr.mxu0 0.0
    %3447 = vmatpush2.msra.mxu0 0.0
    %3448 = vmatprep.subr.mxu0 0.0
    %3449 = vmatpush2.msra.mxu0 0.0
    %3450 = vmatprep.subr.mxu0 0.0
    %3451 = vmatpush2.msra.mxu0 0.0
    %3452 = vmatprep.subr.mxu0 0.0
    %3453 = vmatpush2.msra.mxu0 0.0
    %3454 = vmatprep.subr.mxu0 0.0
    %3455 = vmatpush2.msra.mxu0 0.0
    %3456 = vmatprep.mubr.f32.mxu0 0.0
    %3457 = vmatmul.mubr.f32.gmra.mxu0 %v3387
    %v3458 = vpop.f32.mrf.mxu0
    %v3459 = vadd.f32 0.0, %v3458
    %v3460 = vpop.f32.mrf.mxu0
    %3461 = vmatprep.mubr.f32.mxu0 0.0
    %3462 = vmatmul.mubr.f32.gmra.mxu0 %v3390
    %v3463 = vpop.f32.mrf.mxu0
    %v3464 = vadd.f32 0.0, %v3463
    %v3465 = vpop.f32.mrf.mxu0
    %3466 = vdwg.mxu0
    %3467 = vrot.lane.b32.xlu0 %v2474, 64
    %v3468 = vpop.permute.xlu0 %3467
    %3469 = vrot.lane.b32.xlu0 %v2477, 64
    %v3470 = vpop.permute.xlu0 %3469
    %v3474 = vsel %vm870, %v3366, 0
    %v3477 = vsel %vm870, %v3367, 0
    %3479 = vmatprep.subr.mxu0 0.0
    %3480 = vmatpush1.msra.mxu0 0.0
    %3481 = vmatprep.subr.mxu0 0.0
    %3482 = vmatpush1.msra.mxu0 0.0
    %3483 = vmatprep.subr.mxu0 0.0
    %3484 = vmatpush1.msra.mxu0 0.0
    %3485 = vmatprep.subr.mxu0 0.0
    %3486 = vmatpush1.msra.mxu0 0.0
    %3487 = vmatprep.subr.mxu0 0.0
    %3488 = vmatpush1.msra.mxu0 0.0
    %3489 = vmatprep.subr.mxu0 0.0
    %3490 = vmatpush1.msra.mxu0 0.0
    %3491 = vmatprep.subr.mxu0 0.0
    %3492 = vmatpush1.msra.mxu0 0.0
    %3493 = vmatprep.subr.mxu0 0.0
    %3494 = vmatpush1.msra.mxu0 0.0
    %3495 = vmatprep.subr.mxu0 0.0
    %3496 = vmatpush1.msra.mxu0 0.0
    %3497 = vmatprep.subr.mxu0 0.0
    %3498 = vmatpush1.msra.mxu0 0.0
    %3499 = vmatprep.subr.mxu0 0.0
    %3500 = vmatpush1.msra.mxu0 0.0
    %3501 = vmatprep.subr.mxu0 0.0
    %3502 = vmatpush1.msra.mxu0 0.0
    %3503 = vmatprep.subr.mxu0 0.0
    %3504 = vmatpush1.msra.mxu0 0.0
    %3505 = vmatprep.subr.mxu0 0.0
    %3506 = vmatpush1.msra.mxu0 0.0
    %3507 = vmatprep.subr.mxu0 0.0
    %3508 = vmatpush1.msra.mxu0 %v3470
    %3509 = vmatprep.subr.mxu0 0.0
    %3510 = vmatpush1.msra.mxu0 %v3468
    %3511 = vmatprep.subr.mxu0 0.0
    %3512 = vmatpush2.msra.mxu0 0.0
    %3513 = vmatprep.subr.mxu0 0.0
    %3514 = vmatpush2.msra.mxu0 0.0
    %3515 = vmatprep.subr.mxu0 0.0
    %3516 = vmatpush2.msra.mxu0 0.0
    %3517 = vmatprep.subr.mxu0 0.0
    %3518 = vmatpush2.msra.mxu0 0.0
    %3519 = vmatprep.subr.mxu0 0.0
    %3520 = vmatpush2.msra.mxu0 0.0
    %3521 = vmatprep.subr.mxu0 0.0
    %3522 = vmatpush2.msra.mxu0 0.0
    %3523 = vmatprep.subr.mxu0 0.0
    %3524 = vmatpush2.msra.mxu0 0.0
    %3525 = vmatprep.subr.mxu0 0.0
    %3526 = vmatpush2.msra.mxu0 0.0
    %3527 = vmatprep.subr.mxu0 0.0
    %3528 = vmatpush2.msra.mxu0 0.0
    %3529 = vmatprep.subr.mxu0 0.0
    %3530 = vmatpush2.msra.mxu0 0.0
    %3531 = vmatprep.subr.mxu0 0.0
    %3532 = vmatpush2.msra.mxu0 0.0
    %3533 = vmatprep.subr.mxu0 0.0
    %3534 = vmatpush2.msra.mxu0 0.0
    %3535 = vmatprep.subr.mxu0 0.0
    %3536 = vmatpush2.msra.mxu0 0.0
    %3537 = vmatprep.subr.mxu0 0.0
    %3538 = vmatpush2.msra.mxu0 0.0
    %3539 = vmatprep.subr.mxu0 0.0
    %3540 = vmatpush2.msra.mxu0 0.0
    %3541 = vmatprep.subr.mxu0 0.0
    %3542 = vmatpush2.msra.mxu0 0.0
    %3543 = vmatprep.mubr.f32.mxu0 0.0
    %3544 = vmatmul.mubr.f32.gmra.mxu0 %v3474
    %v3545 = vpop.f32.mrf.mxu0
    %v3546 = vadd.f32 0.0, %v3545
    %v3547 = vpop.f32.mrf.mxu0
    %3548 = vmatprep.mubr.f32.mxu0 0.0
    %3549 = vmatmul.mubr.f32.gmra.mxu0 %v3477
    %v3550 = vpop.f32.mrf.mxu0
    %v3551 = vadd.f32 0.0, %v3550
    %v3552 = vpop.f32.mrf.mxu0
    %3553 = vdwg.mxu0
    %3554 = vrot.lane.b32.xlu0 %v2485, 64
    %v3555 = vpop.permute.xlu0 %3554
    %3556 = vrot.lane.b32.xlu0 %v2487, 64
    %v3557 = vpop.permute.xlu0 %3556
    %v3561 = vsel %vm870, %v3368, 0
    %v3564 = vsel %vm870, %v3369, 0
    %3566 = vmatprep.subr.mxu0 0.0
    %3567 = vmatpush1.msra.mxu0 0.0
    %3568 = vmatprep.subr.mxu0 0.0
    %3569 = vmatpush1.msra.mxu0 0.0
    %3570 = vmatprep.subr.mxu0 0.0
    %3571 = vmatpush1.msra.mxu0 0.0
    %3572 = vmatprep.subr.mxu0 0.0
    %3573 = vmatpush1.msra.mxu0 0.0
    %3574 = vmatprep.subr.mxu0 0.0
    %3575 = vmatpush1.msra.mxu0 0.0
    %3576 = vmatprep.subr.mxu0 0.0
    %3577 = vmatpush1.msra.mxu0 0.0
    %3578 = vmatprep.subr.mxu0 0.0
    %3579 = vmatpush1.msra.mxu0 0.0
    %3580 = vmatprep.subr.mxu0 0.0
    %3581 = vmatpush1.msra.mxu0 0.0
    %3582 = vmatprep.subr.mxu0 0.0
    %3583 = vmatpush1.msra.mxu0 0.0
    %3584 = vmatprep.subr.mxu0 0.0
    %3585 = vmatpush1.msra.mxu0 0.0
    %3586 = vmatprep.subr.mxu0 0.0
    %3587 = vmatpush1.msra.mxu0 0.0
    %3588 = vmatprep.subr.mxu0 0.0
    %3589 = vmatpush1.msra.mxu0 0.0
    %3590 = vmatprep.subr.mxu0 0.0
    %3591 = vmatpush1.msra.mxu0 0.0
    %3592 = vmatprep.subr.mxu0 0.0
    %3593 = vmatpush1.msra.mxu0 0.0
    %3594 = vmatprep.subr.mxu0 0.0
    %3595 = vmatpush1.msra.mxu0 %v3557
    %3596 = vmatprep.subr.mxu0 0.0
    %3597 = vmatpush1.msra.mxu0 %v3555
    %3598 = vmatprep.subr.mxu0 0.0
    %3599 = vmatpush2.msra.mxu0 0.0
    %3600 = vmatprep.subr.mxu0 0.0
    %3601 = vmatpush2.msra.mxu0 0.0
    %3602 = vmatprep.subr.mxu0 0.0
    %3603 = vmatpush2.msra.mxu0 0.0
    %3604 = vmatprep.subr.mxu0 0.0
    %3605 = vmatpush2.msra.mxu0 0.0
    %3606 = vmatprep.subr.mxu0 0.0
    %3607 = vmatpush2.msra.mxu0 0.0
    %3608 = vmatprep.subr.mxu0 0.0
    %3609 = vmatpush2.msra.mxu0 0.0
    %3610 = vmatprep.subr.mxu0 0.0
    %3611 = vmatpush2.msra.mxu0 0.0
    %3612 = vmatprep.subr.mxu0 0.0
    %3613 = vmatpush2.msra.mxu0 0.0
    %3614 = vmatprep.subr.mxu0 0.0
    %3615 = vmatpush2.msra.mxu0 0.0
    %3616 = vmatprep.subr.mxu0 0.0
    %3617 = vmatpush2.msra.mxu0 0.0
    %3618 = vmatprep.subr.mxu0 0.0
    %3619 = vmatpush2.msra.mxu0 0.0
    %3620 = vmatprep.subr.mxu0 0.0
    %3621 = vmatpush2.msra.mxu0 0.0
    %3622 = vmatprep.subr.mxu0 0.0
    %3623 = vmatpush2.msra.mxu0 0.0
    %3624 = vmatprep.subr.mxu0 0.0
    %3625 = vmatpush2.msra.mxu0 0.0
    %3626 = vmatprep.subr.mxu0 0.0
    %3627 = vmatpush2.msra.mxu0 0.0
    %3628 = vmatprep.subr.mxu0 0.0
    %3629 = vmatpush2.msra.mxu0 0.0
    %3630 = vmatprep.mubr.f32.mxu0 0.0
    %3631 = vmatmul.mubr.f32.gmra.mxu0 %v3561
    %v3632 = vpop.f32.mrf.mxu0
    %v3633 = vadd.f32 0.0, %v3632
    %v3634 = vpop.f32.mrf.mxu0
    %3635 = vmatprep.mubr.f32.mxu0 0.0
    %3636 = vmatmul.mubr.f32.gmra.mxu0 %v3564
    %v3637 = vpop.f32.mrf.mxu0
    %v3638 = vadd.f32 0.0, %v3637
    %v3639 = vpop.f32.mrf.mxu0
    %3640 = vdwg.mxu0
    %3641 = vrot.lane.b32.xlu0 %v2489, 64
    %v3642 = vpop.permute.xlu0 %3641
    %3643 = vrot.lane.b32.xlu0 %v2491, 64
    %v3644 = vpop.permute.xlu0 %3643
    %v3648 = vsel %vm870, %v3370, 0
    %v3651 = vsel %vm870, %v3371, 0
    %3653 = vmatprep.subr.mxu0 0.0
    %3654 = vmatpush1.msra.mxu0 0.0
    %3655 = vmatprep.subr.mxu0 0.0
    %3656 = vmatpush1.msra.mxu0 0.0
    %3657 = vmatprep.subr.mxu0 0.0
    %3658 = vmatpush1.msra.mxu0 0.0
    %3659 = vmatprep.subr.mxu0 0.0
    %3660 = vmatpush1.msra.mxu0 0.0
    %3661 = vmatprep.subr.mxu0 0.0
    %3662 = vmatpush1.msra.mxu0 0.0
    %3663 = vmatprep.subr.mxu0 0.0
    %3664 = vmatpush1.msra.mxu0 0.0
    %3665 = vmatprep.subr.mxu0 0.0
    %3666 = vmatpush1.msra.mxu0 0.0
    %3667 = vmatprep.subr.mxu0 0.0
    %3668 = vmatpush1.msra.mxu0 0.0
    %3669 = vmatprep.subr.mxu0 0.0
    %3670 = vmatpush1.msra.mxu0 0.0
    %3671 = vmatprep.subr.mxu0 0.0
    %3672 = vmatpush1.msra.mxu0 0.0
    %3673 = vmatprep.subr.mxu0 0.0
    %3674 = vmatpush1.msra.mxu0 0.0
    %3675 = vmatprep.subr.mxu0 0.0
    %3676 = vmatpush1.msra.mxu0 0.0
    %3677 = vmatprep.subr.mxu0 0.0
    %3678 = vmatpush1.msra.mxu0 0.0
    %3679 = vmatprep.subr.mxu0 0.0
    %3680 = vmatpush1.msra.mxu0 0.0
    %3681 = vmatprep.subr.mxu0 0.0
    %3682 = vmatpush1.msra.mxu0 %v3644
    %3683 = vmatprep.subr.mxu0 0.0
    %3684 = vmatpush1.msra.mxu0 %v3642
    %3685 = vmatprep.subr.mxu0 0.0
    %3686 = vmatpush2.msra.mxu0 0.0
    %3687 = vmatprep.subr.mxu0 0.0
    %3688 = vmatpush2.msra.mxu0 0.0
    %3689 = vmatprep.subr.mxu0 0.0
    %3690 = vmatpush2.msra.mxu0 0.0
    %3691 = vmatprep.subr.mxu0 0.0
    %3692 = vmatpush2.msra.mxu0 0.0
    %3693 = vmatprep.subr.mxu0 0.0
    %3694 = vmatpush2.msra.mxu0 0.0
    %3695 = vmatprep.subr.mxu0 0.0
    %3696 = vmatpush2.msra.mxu0 0.0
    %3697 = vmatprep.subr.mxu0 0.0
    %3698 = vmatpush2.msra.mxu0 0.0
    %3699 = vmatprep.subr.mxu0 0.0
    %3700 = vmatpush2.msra.mxu0 0.0
    %3701 = vmatprep.subr.mxu0 0.0
    %3702 = vmatpush2.msra.mxu0 0.0
    %3703 = vmatprep.subr.mxu0 0.0
    %3704 = vmatpush2.msra.mxu0 0.0
    %3705 = vmatprep.subr.mxu0 0.0
    %3706 = vmatpush2.msra.mxu0 0.0
    %3707 = vmatprep.subr.mxu0 0.0
    %3708 = vmatpush2.msra.mxu0 0.0
    %3709 = vmatprep.subr.mxu0 0.0
    %3710 = vmatpush2.msra.mxu0 0.0
    %3711 = vmatprep.subr.mxu0 0.0
    %3712 = vmatpush2.msra.mxu0 0.0
    %3713 = vmatprep.subr.mxu0 0.0
    %3714 = vmatpush2.msra.mxu0 0.0
    %3715 = vmatprep.subr.mxu0 0.0
    %3716 = vmatpush2.msra.mxu0 0.0
    %3717 = vmatprep.mubr.f32.mxu0 0.0
    %3718 = vmatmul.mubr.f32.gmra.mxu0 %v3648
    %v3719 = vpop.f32.mrf.mxu0
    %v3720 = vadd.f32 0.0, %v3719
    %v3721 = vpop.f32.mrf.mxu0
    %3722 = vmatprep.mubr.f32.mxu0 0.0
    %3723 = vmatmul.mubr.f32.gmra.mxu0 %v3651
    %v3724 = vpop.f32.mrf.mxu0
    %v3725 = vadd.f32 0.0, %v3724
    %v3726 = vpop.f32.mrf.mxu0
    %3727 = vdwg.mxu0
    %3728 = vrot.lane.b32.xlu0 %v2493, 64
    %v3729 = vpop.permute.xlu0 %3728
    %3730 = vrot.lane.b32.xlu0 %v2495, 64
    %v3731 = vpop.permute.xlu0 %3730
    %v3735 = vsel %vm870, %v3372, 0
    %v3738 = vsel %vm870, %v3373, 0
    %3740 = vmatprep.subr.mxu0 0.0
    %3741 = vmatpush1.msra.mxu0 0.0
    %3742 = vmatprep.subr.mxu0 0.0
    %3743 = vmatpush1.msra.mxu0 0.0
    %3744 = vmatprep.subr.mxu0 0.0
    %3745 = vmatpush1.msra.mxu0 0.0
    %3746 = vmatprep.subr.mxu0 0.0
    %3747 = vmatpush1.msra.mxu0 0.0
    %3748 = vmatprep.subr.mxu0 0.0
    %3749 = vmatpush1.msra.mxu0 0.0
    %3750 = vmatprep.subr.mxu0 0.0
    %3751 = vmatpush1.msra.mxu0 0.0
    %3752 = vmatprep.subr.mxu0 0.0
    %3753 = vmatpush1.msra.mxu0 0.0
    %3754 = vmatprep.subr.mxu0 0.0
    %3755 = vmatpush1.msra.mxu0 0.0
    %3756 = vmatprep.subr.mxu0 0.0
    %3757 = vmatpush1.msra.mxu0 0.0
    %3758 = vmatprep.subr.mxu0 0.0
    %3759 = vmatpush1.msra.mxu0 0.0
    %3760 = vmatprep.subr.mxu0 0.0
    %3761 = vmatpush1.msra.mxu0 0.0
    %3762 = vmatprep.subr.mxu0 0.0
    %3763 = vmatpush1.msra.mxu0 0.0
    %3764 = vmatprep.subr.mxu0 0.0
    %3765 = vmatpush1.msra.mxu0 0.0
    %3766 = vmatprep.subr.mxu0 0.0
    %3767 = vmatpush1.msra.mxu0 0.0
    %3768 = vmatprep.subr.mxu0 0.0
    %3769 = vmatpush1.msra.mxu0 %v3731
    %3770 = vmatprep.subr.mxu0 0.0
    %3771 = vmatpush1.msra.mxu0 %v3729
    %3772 = vmatprep.subr.mxu0 0.0
    %3773 = vmatpush2.msra.mxu0 0.0
    %3774 = vmatprep.subr.mxu0 0.0
    %3775 = vmatpush2.msra.mxu0 0.0
    %3776 = vmatprep.subr.mxu0 0.0
    %3777 = vmatpush2.msra.mxu0 0.0
    %3778 = vmatprep.subr.mxu0 0.0
    %3779 = vmatpush2.msra.mxu0 0.0
    %3780 = vmatprep.subr.mxu0 0.0
    %3781 = vmatpush2.msra.mxu0 0.0
    %3782 = vmatprep.subr.mxu0 0.0
    %3783 = vmatpush2.msra.mxu0 0.0
    %3784 = vmatprep.subr.mxu0 0.0
    %3785 = vmatpush2.msra.mxu0 0.0
    %3786 = vmatprep.subr.mxu0 0.0
    %3787 = vmatpush2.msra.mxu0 0.0
    %3788 = vmatprep.subr.mxu0 0.0
    %3789 = vmatpush2.msra.mxu0 0.0
    %3790 = vmatprep.subr.mxu0 0.0
    %3791 = vmatpush2.msra.mxu0 0.0
    %3792 = vmatprep.subr.mxu0 0.0
    %3793 = vmatpush2.msra.mxu0 0.0
    %3794 = vmatprep.subr.mxu0 0.0
    %3795 = vmatpush2.msra.mxu0 0.0
    %3796 = vmatprep.subr.mxu0 0.0
    %3797 = vmatpush2.msra.mxu0 0.0
    %3798 = vmatprep.subr.mxu0 0.0
    %3799 = vmatpush2.msra.mxu0 0.0
    %3800 = vmatprep.subr.mxu0 0.0
    %3801 = vmatpush2.msra.mxu0 0.0
    %3802 = vmatprep.subr.mxu0 0.0
    %3803 = vmatpush2.msra.mxu0 0.0
    %3804 = vmatprep.mubr.f32.mxu0 0.0
    %3805 = vmatmul.mubr.f32.gmra.mxu0 %v3735
    %v3806 = vpop.f32.mrf.mxu0
    %v3807 = vadd.f32 0.0, %v3806
    %v3808 = vpop.f32.mrf.mxu0
    %3809 = vmatprep.mubr.f32.mxu0 0.0
    %3810 = vmatmul.mubr.f32.gmra.mxu0 %v3738
    %v3811 = vpop.f32.mrf.mxu0
    %v3812 = vadd.f32 0.0, %v3811
    %v3813 = vpop.f32.mrf.mxu0
    %3814 = vdwg.mxu0
    %3815 = vrot.lane.b32.xlu0 %v2497, 64
    %v3816 = vpop.permute.xlu0 %3815
    %3817 = vrot.lane.b32.xlu0 %v2499, 64
    %v3818 = vpop.permute.xlu0 %3817
    %v3822 = vsel %vm870, %v3374, 0
    %v3825 = vsel %vm870, %v3375, 0
    %3827 = vmatprep.subr.mxu0 0.0
    %3828 = vmatpush1.msra.mxu0 0.0
    %3829 = vmatprep.subr.mxu0 0.0
    %3830 = vmatpush1.msra.mxu0 0.0
    %3831 = vmatprep.subr.mxu0 0.0
    %3832 = vmatpush1.msra.mxu0 0.0
    %3833 = vmatprep.subr.mxu0 0.0
    %3834 = vmatpush1.msra.mxu0 0.0
    %3835 = vmatprep.subr.mxu0 0.0
    %3836 = vmatpush1.msra.mxu0 0.0
    %3837 = vmatprep.subr.mxu0 0.0
    %3838 = vmatpush1.msra.mxu0 0.0
    %3839 = vmatprep.subr.mxu0 0.0
    %3840 = vmatpush1.msra.mxu0 0.0
    %3841 = vmatprep.subr.mxu0 0.0
    %3842 = vmatpush1.msra.mxu0 0.0
    %3843 = vmatprep.subr.mxu0 0.0
    %3844 = vmatpush1.msra.mxu0 0.0
    %3845 = vmatprep.subr.mxu0 0.0
    %3846 = vmatpush1.msra.mxu0 0.0
    %3847 = vmatprep.subr.mxu0 0.0
    %3848 = vmatpush1.msra.mxu0 0.0
    %3849 = vmatprep.subr.mxu0 0.0
    %3850 = vmatpush1.msra.mxu0 0.0
    %3851 = vmatprep.subr.mxu0 0.0
    %3852 = vmatpush1.msra.mxu0 0.0
    %3853 = vmatprep.subr.mxu0 0.0
    %3854 = vmatpush1.msra.mxu0 0.0
    %3855 = vmatprep.subr.mxu0 0.0
    %3856 = vmatpush1.msra.mxu0 %v3818
    %3857 = vmatprep.subr.mxu0 0.0
    %3858 = vmatpush1.msra.mxu0 %v3816
    %3859 = vmatprep.subr.mxu0 0.0
    %3860 = vmatpush2.msra.mxu0 0.0
    %3861 = vmatprep.subr.mxu0 0.0
    %3862 = vmatpush2.msra.mxu0 0.0
    %3863 = vmatprep.subr.mxu0 0.0
    %3864 = vmatpush2.msra.mxu0 0.0
    %3865 = vmatprep.subr.mxu0 0.0
    %3866 = vmatpush2.msra.mxu0 0.0
    %3867 = vmatprep.subr.mxu0 0.0
    %3868 = vmatpush2.msra.mxu0 0.0
    %3869 = vmatprep.subr.mxu0 0.0
    %3870 = vmatpush2.msra.mxu0 0.0
    %3871 = vmatprep.subr.mxu0 0.0
    %3872 = vmatpush2.msra.mxu0 0.0
    %3873 = vmatprep.subr.mxu0 0.0
    %3874 = vmatpush2.msra.mxu0 0.0
    %3875 = vmatprep.subr.mxu0 0.0
    %3876 = vmatpush2.msra.mxu0 0.0
    %3877 = vmatprep.subr.mxu0 0.0
    %3878 = vmatpush2.msra.mxu0 0.0
    %3879 = vmatprep.subr.mxu0 0.0
    %3880 = vmatpush2.msra.mxu0 0.0
    %3881 = vmatprep.subr.mxu0 0.0
    %3882 = vmatpush2.msra.mxu0 0.0
    %3883 = vmatprep.subr.mxu0 0.0
    %3884 = vmatpush2.msra.mxu0 0.0
    %3885 = vmatprep.subr.mxu0 0.0
    %3886 = vmatpush2.msra.mxu0 0.0
    %3887 = vmatprep.subr.mxu0 0.0
    %3888 = vmatpush2.msra.mxu0 0.0
    %3889 = vmatprep.subr.mxu0 0.0
    %3890 = vmatpush2.msra.mxu0 0.0
    %3891 = vmatprep.mubr.f32.mxu0 0.0
    %3892 = vmatmul.mubr.f32.gmra.mxu0 %v3822
    %v3893 = vpop.f32.mrf.mxu0
    %v3894 = vadd.f32 0.0, %v3893
    %v3895 = vpop.f32.mrf.mxu0
    %3896 = vmatprep.mubr.f32.mxu0 0.0
    %3897 = vmatmul.mubr.f32.gmra.mxu0 %v3825
    %v3898 = vpop.f32.mrf.mxu0
    %v3899 = vadd.f32 0.0, %v3898
    %v3900 = vpop.f32.mrf.mxu0
    %3901 = vdwg.mxu0
    %3902 = vrot.lane.b32.xlu0 %v2501, 64
    %v3903 = vpop.permute.xlu0 %3902
    %3904 = vrot.lane.b32.xlu0 %v2503, 64
    %v3905 = vpop.permute.xlu0 %3904
    %v3909 = vsel %vm870, %v3376, 0
    %v3912 = vsel %vm870, %v3377, 0
    %3914 = vmatprep.subr.mxu0 0.0
    %3915 = vmatpush1.msra.mxu0 0.0
    %3916 = vmatprep.subr.mxu0 0.0
    %3917 = vmatpush1.msra.mxu0 0.0
    %3918 = vmatprep.subr.mxu0 0.0
    %3919 = vmatpush1.msra.mxu0 0.0
    %3920 = vmatprep.subr.mxu0 0.0
    %3921 = vmatpush1.msra.mxu0 0.0
    %3922 = vmatprep.subr.mxu0 0.0
    %3923 = vmatpush1.msra.mxu0 0.0
    %3924 = vmatprep.subr.mxu0 0.0
    %3925 = vmatpush1.msra.mxu0 0.0
    %3926 = vmatprep.subr.mxu0 0.0
    %3927 = vmatpush1.msra.mxu0 0.0
    %3928 = vmatprep.subr.mxu0 0.0
    %3929 = vmatpush1.msra.mxu0 0.0
    %3930 = vmatprep.subr.mxu0 0.0
    %3931 = vmatpush1.msra.mxu0 0.0
    %3932 = vmatprep.subr.mxu0 0.0
    %3933 = vmatpush1.msra.mxu0 0.0
    %3934 = vmatprep.subr.mxu0 0.0
    %3935 = vmatpush1.msra.mxu0 0.0
    %3936 = vmatprep.subr.mxu0 0.0
    %3937 = vmatpush1.msra.mxu0 0.0
    %3938 = vmatprep.subr.mxu0 0.0
    %3939 = vmatpush1.msra.mxu0 0.0
    %3940 = vmatprep.subr.mxu0 0.0
    %3941 = vmatpush1.msra.mxu0 0.0
    %3942 = vmatprep.subr.mxu0 0.0
    %3943 = vmatpush1.msra.mxu0 %v3905
    %3944 = vmatprep.subr.mxu0 0.0
    %3945 = vmatpush1.msra.mxu0 %v3903
    %3946 = vmatprep.subr.mxu0 0.0
    %3947 = vmatpush2.msra.mxu0 0.0
    %3948 = vmatprep.subr.mxu0 0.0
    %3949 = vmatpush2.msra.mxu0 0.0
    %3950 = vmatprep.subr.mxu0 0.0
    %3951 = vmatpush2.msra.mxu0 0.0
    %3952 = vmatprep.subr.mxu0 0.0
    %3953 = vmatpush2.msra.mxu0 0.0
    %3954 = vmatprep.subr.mxu0 0.0
    %3955 = vmatpush2.msra.mxu0 0.0
    %3956 = vmatprep.subr.mxu0 0.0
    %3957 = vmatpush2.msra.mxu0 0.0
    %3958 = vmatprep.subr.mxu0 0.0
    %3959 = vmatpush2.msra.mxu0 0.0
    %3960 = vmatprep.subr.mxu0 0.0
    %3961 = vmatpush2.msra.mxu0 0.0
    %3962 = vmatprep.subr.mxu0 0.0
    %3963 = vmatpush2.msra.mxu0 0.0
    %3964 = vmatprep.subr.mxu0 0.0
    %3965 = vmatpush2.msra.mxu0 0.0
    %3966 = vmatprep.subr.mxu0 0.0
    %3967 = vmatpush2.msra.mxu0 0.0
    %3968 = vmatprep.subr.mxu0 0.0
    %3969 = vmatpush2.msra.mxu0 0.0
    %3970 = vmatprep.subr.mxu0 0.0
    %3971 = vmatpush2.msra.mxu0 0.0
    %3972 = vmatprep.subr.mxu0 0.0
    %3973 = vmatpush2.msra.mxu0 0.0
    %3974 = vmatprep.subr.mxu0 0.0
    %3975 = vmatpush2.msra.mxu0 0.0
    %3976 = vmatprep.subr.mxu0 0.0
    %3977 = vmatpush2.msra.mxu0 0.0
    %3978 = vmatprep.mubr.f32.mxu0 0.0
    %3979 = vmatmul.mubr.f32.gmra.mxu0 %v3909
    %v3980 = vpop.f32.mrf.mxu0
    %v3981 = vadd.f32 0.0, %v3980
    %v3982 = vpop.f32.mrf.mxu0
    %3983 = vmatprep.mubr.f32.mxu0 0.0
    %3984 = vmatmul.mubr.f32.gmra.mxu0 %v3912
    %v3985 = vpop.f32.mrf.mxu0
    %v3986 = vadd.f32 0.0, %v3985
    %v3987 = vpop.f32.mrf.mxu0
    %3988 = vdwg.mxu0
    %3989 = vrot.lane.b32.xlu0 %v2505, 64
    %v3990 = vpop.permute.xlu0 %3989
    %3991 = vrot.lane.b32.xlu0 %v2507, 64
    %v3992 = vpop.permute.xlu0 %3991
    %v3996 = vsel %vm870, %v3378, 0
    %v3999 = vsel %vm870, %v3379, 0
    %4001 = vmatprep.subr.mxu0 0.0
    %4002 = vmatpush1.msra.mxu0 0.0
    %4003 = vmatprep.subr.mxu0 0.0
    %4004 = vmatpush1.msra.mxu0 0.0
    %4005 = vmatprep.subr.mxu0 0.0
    %4006 = vmatpush1.msra.mxu0 0.0
    %4007 = vmatprep.subr.mxu0 0.0
    %4008 = vmatpush1.msra.mxu0 0.0
    %4009 = vmatprep.subr.mxu0 0.0
    %4010 = vmatpush1.msra.mxu0 0.0
    %4011 = vmatprep.subr.mxu0 0.0
    %4012 = vmatpush1.msra.mxu0 0.0
    %4013 = vmatprep.subr.mxu0 0.0
    %4014 = vmatpush1.msra.mxu0 0.0
    %4015 = vmatprep.subr.mxu0 0.0
    %4016 = vmatpush1.msra.mxu0 0.0
    %4017 = vmatprep.subr.mxu0 0.0
    %4018 = vmatpush1.msra.mxu0 0.0
    %4019 = vmatprep.subr.mxu0 0.0
    %4020 = vmatpush1.msra.mxu0 0.0
    %4021 = vmatprep.subr.mxu0 0.0
    %4022 = vmatpush1.msra.mxu0 0.0
    %4023 = vmatprep.subr.mxu0 0.0
    %4024 = vmatpush1.msra.mxu0 0.0
    %4025 = vmatprep.subr.mxu0 0.0
    %4026 = vmatpush1.msra.mxu0 0.0
    %4027 = vmatprep.subr.mxu0 0.0
    %4028 = vmatpush1.msra.mxu0 0.0
    %4029 = vmatprep.subr.mxu0 0.0
    %4030 = vmatpush1.msra.mxu0 %v3992
    %4031 = vmatprep.subr.mxu0 0.0
    %4032 = vmatpush1.msra.mxu0 %v3990
    %4033 = vmatprep.subr.mxu0 0.0
    %4034 = vmatpush2.msra.mxu0 0.0
    %4035 = vmatprep.subr.mxu0 0.0
    %4036 = vmatpush2.msra.mxu0 0.0
    %4037 = vmatprep.subr.mxu0 0.0
    %4038 = vmatpush2.msra.mxu0 0.0
    %4039 = vmatprep.subr.mxu0 0.0
    %4040 = vmatpush2.msra.mxu0 0.0
    %4041 = vmatprep.subr.mxu0 0.0
    %4042 = vmatpush2.msra.mxu0 0.0
    %4043 = vmatprep.subr.mxu0 0.0
    %4044 = vmatpush2.msra.mxu0 0.0
    %4045 = vmatprep.subr.mxu0 0.0
    %4046 = vmatpush2.msra.mxu0 0.0
    %4047 = vmatprep.subr.mxu0 0.0
    %4048 = vmatpush2.msra.mxu0 0.0
    %4049 = vmatprep.subr.mxu0 0.0
    %4050 = vmatpush2.msra.mxu0 0.0
    %4051 = vmatprep.subr.mxu0 0.0
    %4052 = vmatpush2.msra.mxu0 0.0
    %4053 = vmatprep.subr.mxu0 0.0
    %4054 = vmatpush2.msra.mxu0 0.0
    %4055 = vmatprep.subr.mxu0 0.0
    %4056 = vmatpush2.msra.mxu0 0.0
    %4057 = vmatprep.subr.mxu0 0.0
    %4058 = vmatpush2.msra.mxu0 0.0
    %4059 = vmatprep.subr.mxu0 0.0
    %4060 = vmatpush2.msra.mxu0 0.0
    %4061 = vmatprep.subr.mxu0 0.0
    %4062 = vmatpush2.msra.mxu0 0.0
    %4063 = vmatprep.subr.mxu0 0.0
    %4064 = vmatpush2.msra.mxu0 0.0
    %4065 = vmatprep.mubr.f32.mxu0 0.0
    %4066 = vmatmul.mubr.f32.gmra.mxu0 %v3996
    %v4067 = vpop.f32.mrf.mxu0
    %v4068 = vadd.f32 0.0, %v4067
    %v4069 = vpop.f32.mrf.mxu0
    %4070 = vmatprep.mubr.f32.mxu0 0.0
    %4071 = vmatmul.mubr.f32.gmra.mxu0 %v3999
    %v4072 = vpop.f32.mrf.mxu0
    %v4073 = vadd.f32 0.0, %v4072
    %v4074 = vpop.f32.mrf.mxu0
    %4075 = vdwg.mxu0
    %4080 = vrot.lane.b32.xlu0 %v3633, 8
    %v4081 = vpop.permute.xlu0 %4080
    %4082 = vrot.lane.b32.xlu0 %v3638, 8
    %v4083 = vpop.permute.xlu0 %4082
    %4084 = vrot.lane.b32.xlu0 %v3720, 8
    %v4085 = vpop.permute.xlu0 %4084
    %4086 = vrot.lane.b32.xlu0 %v3725, 8
    %v4087 = vpop.permute.xlu0 %4086
    %4096 = vrot.lane.b32.xlu0 %v3807, 16
    %v4097 = vpop.permute.xlu0 %4096
    %4098 = vrot.lane.b32.xlu0 %v3812, 16
    %v4099 = vpop.permute.xlu0 %4098
    %4100 = vrot.lane.b32.xlu0 %v3894, 16
    %v4101 = vpop.permute.xlu0 %4100
    %4102 = vrot.lane.b32.xlu0 %v3899, 16
    %v4103 = vpop.permute.xlu0 %4102
    %4112 = vrot.lane.b32.xlu0 %v3981, 24
    %v4113 = vpop.permute.xlu0 %4112
    %4114 = vrot.lane.b32.xlu0 %v3986, 24
    %v4115 = vpop.permute.xlu0 %4114
    %4116 = vrot.lane.b32.xlu0 %v4068, 24
    %v4117 = vpop.permute.xlu0 %4116
    %4118 = vrot.lane.b32.xlu0 %v4073, 24
    %v4119 = vpop.permute.xlu0 %4118
    %v4124 = vsel %vm177, %v3459, %v4081
    %v4125 = vsel %vm177, %v3464, %v4083
    %v4126 = vsel %vm177, %v3546, %v4085
    %v4127 = vsel %vm177, %v3551, %v4087
    %v4128 = vsel %vm870, %v4124, %v4097
    %v4129 = vsel %vm870, %v4125, %v4099
    %v4130 = vsel %vm870, %v4126, %v4101
    %v4131 = vsel %vm870, %v4127, %v4103
    %v4132 = vsel %vm1799, %v4128, %v4113
    %v4133 = vsel %vm1799, %v4129, %v4115
    %v4134 = vsel %vm1799, %v4130, %v4117
    %v4135 = vsel %vm1799, %v4131, %v4119
    %v4136 = vpack.c.bf16 %v4133, %v4132
    %v4137 = vpack.c.bf16 %v4135, %v4134
    %s4138 = scalar_lea.vmem %s3, 16
    %v4139 = vld [vmem:[%s4138] sm:$0xf]
    %v4140 = vld [vmem:[%s4138 + $0x4] sm:$0xf]
    %v4141 = vld [vmem:[%s4138 + $0x8] sm:$0xf]
    %v4142 = vld [vmem:[%s4138 + $0xc] sm:$0xf]
    %s4143 = scalar_lea.vmem %s4, 1
    %v4144 = vld [vmem:[%s4143] sm:$0x1]
    %v4146 = vlaneseq
    %v4147 = vshrl.u32 %v4146, 7
    %v4148 = vsub.s32 0, %v4147
    %v4149 = vrot.slane %v4144, %v4148
    %v4155 = vunpack.c.l.b16 %v4139
    %v4156 = vunpack.c.l.b16 %v4140
    %v4157 = vunpack.c.l.b16 %v4141
    %v4158 = vunpack.c.l.b16 %v4142
    %v4159 = vpack.c.b16 %v4156, %v4155
    %v4160 = vpack.c.b16 %v4158, %v4157
    %v4164 = vsel %vm89, %v4136, 0
    %v4167 = vsel %vm89, %v4137, 0
    %4169 = vmatprep.subr.bf16.mxu0 0
    %4170 = vmatpush1.bf16.msra.mxu0 0
    %4171 = vmatprep.subr.bf16.mxu0 0
    %4172 = vmatpush1.bf16.msra.mxu0 0
    %4173 = vmatprep.subr.bf16.mxu0 0
    %4174 = vmatpush1.bf16.msra.mxu0 0
    %4175 = vmatprep.subr.bf16.mxu0 0
    %4176 = vmatpush1.bf16.msra.mxu0 0
    %4177 = vmatprep.subr.bf16.mxu0 0
    %4178 = vmatpush1.bf16.msra.mxu0 0
    %4179 = vmatprep.subr.bf16.mxu0 0
    %4180 = vmatpush1.bf16.msra.mxu0 0
    %4181 = vmatprep.subr.bf16.mxu0 0
    %4182 = vmatpush1.bf16.msra.mxu0 %v4160
    %4183 = vmatprep.subr.bf16.mxu0 0
    %4184 = vmatpush1.bf16.msra.mxu0 %v4159
    %4185 = vmatprep.subr.bf16.mxu0 0
    %4186 = vmatpush2.bf16.msra.mxu0 0
    %4187 = vmatprep.subr.bf16.mxu0 0
    %4188 = vmatpush2.bf16.msra.mxu0 0
    %4189 = vmatprep.subr.bf16.mxu0 0
    %4190 = vmatpush2.bf16.msra.mxu0 0
    %4191 = vmatprep.subr.bf16.mxu0 0
    %4192 = vmatpush2.bf16.msra.mxu0 0
    %4193 = vmatprep.subr.bf16.mxu0 0
    %4194 = vmatpush2.bf16.msra.mxu0 0
    %4195 = vmatprep.subr.bf16.mxu0 0
    %4196 = vmatpush2.bf16.msra.mxu0 0
    %4197 = vmatprep.subr.bf16.mxu0 0
    %4198 = vmatpush2.bf16.msra.mxu0 0
    %4199 = vmatprep.subr.bf16.mxu0 0
    %4200 = vmatpush2.bf16.msra.mxu0 0
    %4201 = vmatprep.mubr.bf16.mxu0 0
    %4202 = vmatmul.mubr.bf16.gmra.mxu0 %v4164
    %v4203 = vpop.f32.mrf.mxu0
    %v4204 = vadd.f32 %v4149, %v4203
    %v4205 = vpop.f32.mrf.mxu0
    %v4206 = vpop.f32.mrf.mxu0
    %v4207 = vadd.f32 %v4149, %v4206
    %v4208 = vpop.f32.mrf.mxu0
    %4209 = vmatprep.mubr.bf16.mxu0 0
    %4210 = vmatmul.mubr.bf16.gmra.mxu0 %v4167
    %v4211 = vpop.f32.mrf.mxu0
    %v4212 = vadd.f32 %v4149, %v4211
    %v4213 = vpop.f32.mrf.mxu0
    %v4214 = vpop.f32.mrf.mxu0
    %v4215 = vadd.f32 %v4149, %v4214
    %v4216 = vpop.f32.mrf.mxu0
    %4217 = vdwg.mxu0
    %v4218 = vadd.f32 %v2394, %v4204
    %v4219 = vadd.f32 %v2395, %v4207
    %v4220 = vadd.f32 %v2396, %v4212
    %v4221 = vadd.f32 %v2397, %v4215
    %s4222 = scalar_lea.vmem %s5, 1
    %v4223 = vld [vmem:[%s4222] sm:$0x1]
    %s4224 = scalar_lea.vmem %s6, 1
    %v4225 = vld [vmem:[%s4224] sm:$0x1]
    %v4226 = vmul.f32 %v4218, %v4218
    %v4227 = vmul.f32 %v4219, %v4219
    %v4228 = vmul.f32 %v4220, %v4220
    %v4229 = vmul.f32 %v4221, %v4221
    %4234 = vrot.lane.b32.xlu0 %v4226, 32
    %v4235 = vpop.permute.xlu0 %4234
    %4236 = vrot.lane.b32.xlu0 %v4227, 32
    %v4237 = vpop.permute.xlu0 %4236
    %4238 = vrot.lane.b32.xlu0 %v4228, 32
    %v4239 = vpop.permute.xlu0 %4238
    %4240 = vrot.lane.b32.xlu0 %v4229, 32
    %v4241 = vpop.permute.xlu0 %4240
    %v4246 = vsel %vm89, %v4218, %v4235
    %v4247 = vsel %vm89, %v4219, %v4237
    %v4248 = vsel %vm89, %v4220, %v4239
    %v4249 = vsel %vm89, %v4221, %v4241
    %4250 = vmatprep.subr.mxu0 0.0
    %4251 = vmatpush1.msra.mxu0 0.0
    %4252 = vmatprep.subr.mxu0 0.0
    %4253 = vmatpush1.msra.mxu0 0.0
    %4254 = vmatprep.subr.mxu0 0.0
    %4255 = vmatpush1.msra.mxu0 0.0
    %4256 = vmatprep.subr.mxu0 0.0
    %4257 = vmatpush1.msra.mxu0 0.0
    %4258 = vmatprep.subr.mxu0 0.0
    %4259 = vmatpush1.msra.mxu0 0.0
    %4260 = vmatprep.subr.mxu0 0.0
    %4261 = vmatpush1.msra.mxu0 0.0
    %4262 = vmatprep.subr.mxu0 0.0
    %4263 = vmatpush1.msra.mxu0 0.0
    %4264 = vmatprep.subr.mxu0 0.0
    %4265 = vmatpush1.msra.mxu0 0.0
    %4266 = vmatprep.subr.mxu0 0.0
    %4267 = vmatpush1.msra.mxu0 0.0
    %4268 = vmatprep.subr.mxu0 0.0
    %4269 = vmatpush1.msra.mxu0 0.0
    %4270 = vmatprep.subr.mxu0 0.0
    %4271 = vmatpush1.msra.mxu0 0.0
    %4272 = vmatprep.subr.mxu0 0.0
    %4273 = vmatpush1.msra.mxu0 0.0
    %4274 = vmatprep.subr.mxu0 0.0
    %4275 = vmatpush1.msra.mxu0 %v4249
    %4276 = vmatprep.subr.mxu0 0.0
    %4277 = vmatpush1.msra.mxu0 %v4248
    %4278 = vmatprep.subr.mxu0 0.0
    %4279 = vmatpush1.msra.mxu0 %v4247
    %4280 = vmatprep.subr.mxu0 0.0
    %4281 = vmatpush1.msra.mxu0 %v4246
    %4282 = vmatprep.subr.mxu0 0.0
    %4283 = vmatpush2.msra.mxu0 0.0
    %4284 = vmatprep.subr.mxu0 0.0
    %4285 = vmatpush2.msra.mxu0 0.0
    %4286 = vmatprep.subr.mxu0 0.0
    %4287 = vmatpush2.msra.mxu0 0.0
    %4288 = vmatprep.subr.mxu0 0.0
    %4289 = vmatpush2.msra.mxu0 0.0
    %4290 = vmatprep.subr.mxu0 0.0
    %4291 = vmatpush2.msra.mxu0 0.0
    %4292 = vmatprep.subr.mxu0 0.0
    %4293 = vmatpush2.msra.mxu0 0.0
    %4294 = vmatprep.subr.mxu0 0.0
    %4295 = vmatpush2.msra.mxu0 0.0
    %4296 = vmatprep.subr.mxu0 0.0
    %4297 = vmatpush2.msra.mxu0 0.0
    %4298 = vmatprep.subr.mxu0 0.0
    %4299 = vmatpush2.msra.mxu0 0.0
    %4300 = vmatprep.subr.mxu0 0.0
    %4301 = vmatpush2.msra.mxu0 0.0
    %4302 = vmatprep.subr.mxu0 0.0
    %4303 = vmatpush2.msra.mxu0 0.0
    %4304 = vmatprep.subr.mxu0 0.0
    %4305 = vmatpush2.msra.mxu0 0.0
    %4306 = vmatprep.subr.mxu0 0.0
    %4307 = vmatpush2.msra.mxu0 0.0
    %4308 = vmatprep.subr.mxu0 0.0
    %4309 = vmatpush2.msra.mxu0 0.0
    %4310 = vmatprep.subr.mxu0 0.0
    %4311 = vmatpush2.msra.mxu0 0.0
    %4312 = vmatprep.subr.mxu0 0.0
    %4313 = vmatpush2.msra.mxu0 0.0
    %4314 = vmatprep.mubr.f32.mxu0 0.0
    %4315 = vmatmul.mubr.f32.gmra.mxu0 %v1915
    %v4316 = vpop.f32.mrf.mxu0
    %v4317 = vadd.f32 0.0, %v4316
    %v4318 = vpop.f32.mrf.mxu0
    %4319 = vdwg.mxu0
    %v4320 = vmul.f32 %v4317, 0.03125
    %v4321 = vmul.f32 %v4320, %v4320
    %4323 = vrot.lane.b32.xlu0 %v4321, 32
    %v4324 = vpop.permute.xlu0 %4323
    %v4326 = vsub.f32 %v4320, %v4324
    %v4327 = vlaneseq
    %v4328 = vshrl.u32 %v4327, 7
    %v4329 = vsub.s32 0, %v4328
    %v4330 = vrot.slane %v4320, %v4329
    %v4331 = vsub.f32 %v4218, %v4330
    %v4332 = vsub.f32 %v4219, %v4330
    %v4333 = vsub.f32 %v4220, %v4330
    %v4334 = vsub.f32 %v4221, %v4330
    %v4335 = vadd.f32 %v4326, 1e-05
    %v4336 = vrsqrt.pop %v4335
    %v4337 = vlaneseq
    %v4338 = vshrl.u32 %v4337, 7
    %v4339 = vsub.s32 0, %v4338
    %v4340 = vrot.slane %v4336, %v4339
    %4342 = vrot.lane.b32.xlu0 %v4340, 96
    %v4343 = vpop.permute.xlu0 %4342
    %v4345 = vmul.f32 %v4331, %v4343
    %v4346 = vmul.f32 %v4332, %v4343
    %v4347 = vmul.f32 %v4333, %v4343
    %v4348 = vmul.f32 %v4334, %v4343
    %v4350 = vlaneseq
    %v4351 = vshrl.u32 %v4350, 7
    %v4352 = vsub.s32 0, %v4351
    %v4353 = vrot.slane %v4223, %v4352
    %v4355 = vmul.f32 %v4345, %v4353
    %v4356 = vmul.f32 %v4346, %v4353
    %v4357 = vmul.f32 %v4347, %v4353
    %v4358 = vmul.f32 %v4348, %v4353
    %v4360 = vlaneseq
    %v4361 = vshrl.u32 %v4360, 7
    %v4362 = vsub.s32 0, %v4361
    %v4363 = vrot.slane %v4225, %v4362
    %v4365 = vadd.f32 %v4355, %v4363
    %v4366 = vadd.f32 %v4356, %v4363
    %v4367 = vadd.f32 %v4357, %v4363
    %v4368 = vadd.f32 %v4358, %v4363
    %v4369 = vpack.c.bf16 %v4366, %v4365
    %v4370 = vpack.c.bf16 %v4368, %v4367
    %s4371 = scalar_lea.vmem [#allocation2], 16
    %v4372 = vld [vmem:[%s4371] sm:$0xf]
    %v4373 = vld [vmem:[%s4371 + $0x4] sm:$0xf]
    %v4374 = vld [vmem:[%s4371 + $0x8] sm:$0xf]
    %v4375 = vld [vmem:[%s4371 + $0xc] sm:$0xf]
    %s4376 = scalar_lea.vmem %s8, 1
    %v4377 = vld [vmem:[%s4376] sm:$0x1]
    %v4379 = vlaneseq
    %v4380 = vshrl.u32 %v4379, 7
    %v4381 = vsub.s32 0, %v4380
    %v4382 = vrot.slane %v4377, %v4381
    %v4388 = vunpack.c.l.b16 %v4372
    %v4389 = vunpack.c.l.b16 %v4373
    %v4390 = vunpack.c.l.b16 %v4374
    %v4391 = vunpack.c.l.b16 %v4375
    %v4392 = vpack.c.b16 %v4389, %v4388
    %v4393 = vpack.c.b16 %v4391, %v4390
    %v4397 = vsel %vm89, %v4369, 0
    %v4400 = vsel %vm89, %v4370, 0
    %4402 = vmatprep.subr.bf16.mxu0 0
    %4403 = vmatpush1.bf16.msra.mxu0 0
    %4404 = vmatprep.subr.bf16.mxu0 0
    %4405 = vmatpush1.bf16.msra.mxu0 0
    %4406 = vmatprep.subr.bf16.mxu0 0
    %4407 = vmatpush1.bf16.msra.mxu0 0
    %4408 = vmatprep.subr.bf16.mxu0 0
    %4409 = vmatpush1.bf16.msra.mxu0 0
    %4410 = vmatprep.subr.bf16.mxu0 0
    %4411 = vmatpush1.bf16.msra.mxu0 0
    %4412 = vmatprep.subr.bf16.mxu0 0
    %4413 = vmatpush1.bf16.msra.mxu0 0
    %4414 = vmatprep.subr.bf16.mxu0 0
    %4415 = vmatpush1.bf16.msra.mxu0 %v4393
    %4416 = vmatprep.subr.bf16.mxu0 0
    %4417 = vmatpush1.bf16.msra.mxu0 %v4392
    %4418 = vmatprep.subr.bf16.mxu0 0
    %4419 = vmatpush2.bf16.msra.mxu0 0
    %4420 = vmatprep.subr.bf16.mxu0 0
    %4421 = vmatpush2.bf16.msra.mxu0 0
    %4422 = vmatprep.subr.bf16.mxu0 0
    %4423 = vmatpush2.bf16.msra.mxu0 0
    %4424 = vmatprep.subr.bf16.mxu0 0
    %4425 = vmatpush2.bf16.msra.mxu0 0
    %4426 = vmatprep.subr.bf16.mxu0 0
    %4427 = vmatpush2.bf16.msra.mxu0 0
    %4428 = vmatprep.subr.bf16.mxu0 0
    %4429 = vmatpush2.bf16.msra.mxu0 0
    %4430 = vmatprep.subr.bf16.mxu0 0
    %4431 = vmatpush2.bf16.msra.mxu0 0
    %4432 = vmatprep.subr.bf16.mxu0 0
    %4433 = vmatpush2.bf16.msra.mxu0 0
    %4434 = vmatprep.mubr.bf16.mxu0 0
    %4435 = vmatmul.mubr.bf16.gmra.mxu0 %v4397
    %v4436 = vpop.f32.mrf.mxu0
    %v4437 = vadd.f32 %v4382, %v4436
    %v4438 = vpop.f32.mrf.mxu0
    %v4439 = vpop.f32.mrf.mxu0
    %v4440 = vadd.f32 %v4382, %v4439
    %v4441 = vpop.f32.mrf.mxu0
    %4442 = vmatprep.mubr.bf16.mxu0 0
    %4443 = vmatmul.mubr.bf16.gmra.mxu0 %v4400
    %v4444 = vpop.f32.mrf.mxu0
    %v4445 = vadd.f32 %v4382, %v4444
    %v4446 = vpop.f32.mrf.mxu0
    %v4447 = vpop.f32.mrf.mxu0
    %v4448 = vadd.f32 %v4382, %v4447
    %v4449 = vpop.f32.mrf.mxu0
    %4450 = vdwg.mxu0
    %v4451 = vmul.f32 %v4437, 0.5
    %v4452 = vmul.f32 %v4440, 0.5
    %v4453 = vmul.f32 %v4445, 0.5
    %v4454 = vmul.f32 %v4448, 0.5
    %v4455 = vmul.f32 %v4437, 0.044715
    %v4456 = vmul.f32 %v4440, 0.044715
    %v4457 = vmul.f32 %v4445, 0.044715
    %v4458 = vmul.f32 %v4448, 0.044715
    %v4459 = vmul.f32 %v4455, %v4437
    %v4460 = vmul.f32 %v4456, %v4440
    %v4461 = vmul.f32 %v4457, %v4445
    %v4462 = vmul.f32 %v4458, %v4448
    %v4463 = vmul.f32 %v4459, %v4437
    %v4464 = vmul.f32 %v4460, %v4440
    %v4465 = vmul.f32 %v4461, %v4445
    %v4466 = vmul.f32 %v4462, %v4448
    %v4467 = vadd.f32 %v4437, %v4463
    %v4468 = vadd.f32 %v4440, %v4464
    %v4469 = vadd.f32 %v4445, %v4465
    %v4470 = vadd.f32 %v4448, %v4466
    %v4471 = vmul.f32 %v4467, 0.7978846
    %v4472 = vmul.f32 %v4468, 0.7978846
    %v4473 = vmul.f32 %v4469, 0.7978846
    %v4474 = vmul.f32 %v4470, 0.7978846
    %v4475 = vtanh.pop %v4471
    %v4476 = vtanh.pop %v4472
    %v4477 = vtanh.pop %v4473
    %v4478 = vtanh.pop %v4474
    %v4479 = vadd.f32 %v4475, 1.0
    %v4480 = vadd.f32 %v4476, 1.0
    %v4481 = vadd.f32 %v4477, 1.0
    %v4482 = vadd.f32 %v4478, 1.0
    %v4483 = vmul.f32 %v4451, %v4479
    %v4484 = vmul.f32 %v4452, %v4480
    %v4485 = vmul.f32 %v4453, %v4481
    %v4486 = vmul.f32 %v4454, %v4482
    %v4487 = vpack.c.bf16 %v4484, %v4483
    %v4488 = vpack.c.bf16 %v4486, %v4485
    %s4489 = scalar_lea.vmem %s9, 32
    %v4490 = vld [vmem:[%s4489] sm:$0xf]
    %v4491 = vld [vmem:[%s4489 + $0x4] sm:$0xf]
    %v4492 = vld [vmem:[%s4489 + $0x8] sm:$0xf]
    %v4493 = vld [vmem:[%s4489 + $0xc] sm:$0xf]
    %v4494 = vld [vmem:[%s4489 + $0x10] sm:$0xf]
    %v4495 = vld [vmem:[%s4489 + $0x14] sm:$0xf]
    %v4496 = vld [vmem:[%s4489 + $0x18] sm:$0xf]
    %v4497 = vld [vmem:[%s4489 + $0x1c] sm:$0xf]
    %s4498 = scalar_lea.vmem %s10, 1
    %v4499 = vld [vmem:[%s4498] sm:$0x1]
    %v4501 = vlaneseq
    %v4502 = vshrl.u32 %v4501, 7
    %v4503 = vsub.s32 0, %v4502
    %v4504 = vrot.slane %v4499, %v4503
    %v4514 = vunpack.c.l.b16 %v4490
    %v4515 = vunpack.c.l.b16 %v4491
    %v4516 = vunpack.c.l.b16 %v4492
    %v4517 = vunpack.c.l.b16 %v4493
    %v4518 = vunpack.c.l.b16 %v4494
    %v4519 = vunpack.c.l.b16 %v4495
    %v4520 = vunpack.c.l.b16 %v4496
    %v4521 = vunpack.c.l.b16 %v4497
    %v4522 = vpack.c.b16 %v4515, %v4514
    %v4523 = vpack.c.b16 %v4517, %v4516
    %v4524 = vpack.c.b16 %v4519, %v4518
    %v4525 = vpack.c.b16 %v4521, %v4520
    %v4531 = vsel %vm2193, %v4487, 0
    %v4534 = vsel %vm2193, %v4488, 0
    %4536 = vmatprep.subr.bf16.mxu0 0
    %4537 = vmatpush1.bf16.msra.mxu0 0
    %4538 = vmatprep.subr.bf16.mxu0 0
    %4539 = vmatpush1.bf16.msra.mxu0 0
    %4540 = vmatprep.subr.bf16.mxu0 0
    %4541 = vmatpush1.bf16.msra.mxu0 0
    %4542 = vmatprep.subr.bf16.mxu0 0
    %4543 = vmatpush1.bf16.msra.mxu0 0
    %4544 = vmatprep.subr.bf16.mxu0 0
    %4545 = vmatpush1.bf16.msra.mxu0 %v4525
    %4546 = vmatprep.subr.bf16.mxu0 0
    %4547 = vmatpush1.bf16.msra.mxu0 %v4524
    %4548 = vmatprep.subr.bf16.mxu0 0
    %4549 = vmatpush1.bf16.msra.mxu0 %v4523
    %4550 = vmatprep.subr.bf16.mxu0 0
    %4551 = vmatpush1.bf16.msra.mxu0 %v4522
    %4552 = vmatprep.subr.bf16.mxu0 0
    %4553 = vmatpush2.bf16.msra.mxu0 0
    %4554 = vmatprep.subr.bf16.mxu0 0
    %4555 = vmatpush2.bf16.msra.mxu0 0
    %4556 = vmatprep.subr.bf16.mxu0 0
    %4557 = vmatpush2.bf16.msra.mxu0 0
    %4558 = vmatprep.subr.bf16.mxu0 0
    %4559 = vmatpush2.bf16.msra.mxu0 0
    %4560 = vmatprep.subr.bf16.mxu0 0
    %4561 = vmatpush2.bf16.msra.mxu0 0
    %4562 = vmatprep.subr.bf16.mxu0 0
    %4563 = vmatpush2.bf16.msra.mxu0 0
    %4564 = vmatprep.subr.bf16.mxu0 0
    %4565 = vmatpush2.bf16.msra.mxu0 0
    %4566 = vmatprep.subr.bf16.mxu0 0
    %4567 = vmatpush2.bf16.msra.mxu0 0
    %4568 = vmatprep.mubr.bf16.mxu0 0
    %4569 = vmatmul.mubr.bf16.gmra.mxu0 %v4531
    %v4570 = vpop.f32.mrf.mxu0
    %v4571 = vadd.f32 %v4504, %v4570
    %v4572 = vpop.f32.mrf.mxu0
    %v4573 = vpop.f32.mrf.mxu0
    %v4574 = vadd.f32 %v4504, %v4573
    %v4575 = vpop.f32.mrf.mxu0
    %4576 = vmatprep.mubr.bf16.mxu0 0
    %4577 = vmatmul.mubr.bf16.gmra.mxu0 %v4534
    %v4578 = vpop.f32.mrf.mxu0
    %v4579 = vadd.f32 %v4504, %v4578
    %v4580 = vpop.f32.mrf.mxu0
    %v4581 = vpop.f32.mrf.mxu0
    %v4582 = vadd.f32 %v4504, %v4581
    %v4583 = vpop.f32.mrf.mxu0
    %4584 = vdwg.mxu0
    %v4585 = vadd.f32 %v4365, %v4571
    %v4586 = vadd.f32 %v4366, %v4574
    %v4587 = vadd.f32 %v4367, %v4579
    %v4588 = vadd.f32 %v4368, %v4582
    %s4589 = scalar_lea.vmem %s11, 1
    %v4590 = vld [vmem:[%s4589] sm:$0x1]
    %s4591 = scalar_lea.vmem %s12, 1
    %v4592 = vld [vmem:[%s4591] sm:$0x1]
    %v4593 = vmul.f32 %v4585, %v4585
    %v4594 = vmul.f32 %v4586, %v4586
    %v4595 = vmul.f32 %v4587, %v4587
    %v4596 = vmul.f32 %v4588, %v4588
    %4601 = vrot.lane.b32.xlu0 %v4593, 32
    %v4602 = vpop.permute.xlu0 %4601
    %4603 = vrot.lane.b32.xlu0 %v4594, 32
    %v4604 = vpop.permute.xlu0 %4603
    %4605 = vrot.lane.b32.xlu0 %v4595, 32
    %v4606 = vpop.permute.xlu0 %4605
    %4607 = vrot.lane.b32.xlu0 %v4596, 32
    %v4608 = vpop.permute.xlu0 %4607
    %v4613 = vsel %vm89, %v4585, %v4602
    %v4614 = vsel %vm89, %v4586, %v4604
    %v4615 = vsel %vm89, %v4587, %v4606
    %v4616 = vsel %vm89, %v4588, %v4608
    %4617 = vmatprep.subr.mxu0 0.0
    %4618 = vmatpush1.msra.mxu0 0.0
    %4619 = vmatprep.subr.mxu0 0.0
    %4620 = vmatpush1.msra.mxu0 0.0
    %4621 = vmatprep.subr.mxu0 0.0
    %4622 = vmatpush1.msra.mxu0 0.0
    %4623 = vmatprep.subr.mxu0 0.0
    %4624 = vmatpush1.msra.mxu0 0.0
    %4625 = vmatprep.subr.mxu0 0.0
    %4626 = vmatpush1.msra.mxu0 0.0
    %4627 = vmatprep.subr.mxu0 0.0
    %4628 = vmatpush1.msra.mxu0 0.0
    %4629 = vmatprep.subr.mxu0 0.0
    %4630 = vmatpush1.msra.mxu0 0.0
    %4631 = vmatprep.subr.mxu0 0.0
    %4632 = vmatpush1.msra.mxu0 0.0
    %4633 = vmatprep.subr.mxu0 0.0
    %4634 = vmatpush1.msra.mxu0 0.0
    %4635 = vmatprep.subr.mxu0 0.0
    %4636 = vmatpush1.msra.mxu0 0.0
    %4637 = vmatprep.subr.mxu0 0.0
    %4638 = vmatpush1.msra.mxu0 0.0
    %4639 = vmatprep.subr.mxu0 0.0
    %4640 = vmatpush1.msra.mxu0 0.0
    %4641 = vmatprep.subr.mxu0 0.0
    %4642 = vmatpush1.msra.mxu0 %v4616
    %4643 = vmatprep.subr.mxu0 0.0
    %4644 = vmatpush1.msra.mxu0 %v4615
    %4645 = vmatprep.subr.mxu0 0.0
    %4646 = vmatpush1.msra.mxu0 %v4614
    %4647 = vmatprep.subr.mxu0 0.0
    %4648 = vmatpush1.msra.mxu0 %v4613
    %4649 = vmatprep.subr.mxu0 0.0
    %4650 = vmatpush2.msra.mxu0 0.0
    %4651 = vmatprep.subr.mxu0 0.0
    %4652 = vmatpush2.msra.mxu0 0.0
    %4653 = vmatprep.subr.mxu0 0.0
    %4654 = vmatpush2.msra.mxu0 0.0
    %4655 = vmatprep.subr.mxu0 0.0
    %4656 = vmatpush2.msra.mxu0 0.0
    %4657 = vmatprep.subr.mxu0 0.0
    %4658 = vmatpush2.msra.mxu0 0.0
    %4659 = vmatprep.subr.mxu0 0.0
    %4660 = vmatpush2.msra.mxu0 0.0
    %4661 = vmatprep.subr.mxu0 0.0
    %4662 = vmatpush2.msra.mxu0 0.0
    %4663 = vmatprep.subr.mxu0 0.0
    %4664 = vmatpush2.msra.mxu0 0.0
    %4665 = vmatprep.subr.mxu0 0.0
    %4666 = vmatpush2.msra.mxu0 0.0
    %4667 = vmatprep.subr.mxu0 0.0
    %4668 = vmatpush2.msra.mxu0 0.0
    %4669 = vmatprep.subr.mxu0 0.0
    %4670 = vmatpush2.msra.mxu0 0.0
    %4671 = vmatprep.subr.mxu0 0.0
    %4672 = vmatpush2.msra.mxu0 0.0
    %4673 = vmatprep.subr.mxu0 0.0
    %4674 = vmatpush2.msra.mxu0 0.0
    %4675 = vmatprep.subr.mxu0 0.0
    %4676 = vmatpush2.msra.mxu0 0.0
    %4677 = vmatprep.subr.mxu0 0.0
    %4678 = vmatpush2.msra.mxu0 0.0
    %4679 = vmatprep.subr.mxu0 0.0
    %4680 = vmatpush2.msra.mxu0 0.0
    %4681 = vmatprep.mubr.f32.mxu0 0.0
    %4682 = vmatmul.mubr.f32.gmra.mxu0 %v1915
    %v4683 = vpop.f32.mrf.mxu0
    %v4684 = vadd.f32 0.0, %v4683
    %v4685 = vpop.f32.mrf.mxu0
    %4686 = vdwg.mxu0
    %v4687 = vmul.f32 %v4684, 0.03125
    %v4688 = vmul.f32 %v4687, %v4687
    %4690 = vrot.lane.b32.xlu0 %v4688, 32
    %v4691 = vpop.permute.xlu0 %4690
    %v4693 = vsub.f32 %v4687, %v4691
    %v4694 = vlaneseq
    %v4695 = vshrl.u32 %v4694, 7
    %v4696 = vsub.s32 0, %v4695
    %v4697 = vrot.slane %v4687, %v4696
    %v4698 = vsub.f32 %v4585, %v4697
    %v4699 = vsub.f32 %v4586, %v4697
    %v4700 = vsub.f32 %v4587, %v4697
    %v4701 = vsub.f32 %v4588, %v4697
    %v4702 = vadd.f32 %v4693, 1e-05
    %v4703 = vrsqrt.pop %v4702
    %v4704 = vlaneseq
    %v4705 = vshrl.u32 %v4704, 7
    %v4706 = vsub.s32 0, %v4705
    %v4707 = vrot.slane %v4703, %v4706
    %4709 = vrot.lane.b32.xlu0 %v4707, 96
    %v4710 = vpop.permute.xlu0 %4709
    %v4712 = vmul.f32 %v4698, %v4710
    %v4713 = vmul.f32 %v4699, %v4710
    %v4714 = vmul.f32 %v4700, %v4710
    %v4715 = vmul.f32 %v4701, %v4710
    %v4717 = vlaneseq
    %v4718 = vshrl.u32 %v4717, 7
    %v4719 = vsub.s32 0, %v4718
    %v4720 = vrot.slane %v4590, %v4719
    %v4722 = vmul.f32 %v4712, %v4720
    %v4723 = vmul.f32 %v4713, %v4720
    %v4724 = vmul.f32 %v4714, %v4720
    %v4725 = vmul.f32 %v4715, %v4720
    %v4727 = vlaneseq
    %v4728 = vshrl.u32 %v4727, 7
    %v4729 = vsub.s32 0, %v4728
    %v4730 = vrot.slane %v4592, %v4729
    %v4732 = vadd.f32 %v4722, %v4730
    %v4733 = vadd.f32 %v4723, %v4730
    %v4734 = vadd.f32 %v4724, %v4730
    %v4735 = vadd.f32 %v4725, %v4730
    %4736 = vst.msk [vmem:[#allocation5] sm:$0xff] %vm89, %v4732
    %4737 = vst.msk [vmem:[#allocation5 + $0x8] sm:$0xff] %vm89, %v4733
    %4738 = vst.msk [vmem:[#allocation5 + $0x10] sm:$0xff] %vm89, %v4734
    %4739 = vst.msk [vmem:[#allocation5 + $0x18] sm:$0xff] %vm89, %v4735
    // Predicated region
    $region58: #{tst_encoder_pallas.1} parent=1 // pred_check
      _
    $region59: #{tst_encoder_pallas.1} parent=1 // pred_check_branch
      %4741 = sbr.rel (0) target = $region61
    $region60: #{tst_encoder_pallas.1} parent=1 // pred_region
      %s4743 = ssub.s32 512, 512
      %4744 = vsyncadd [#allocation4], %s4743
      %s4745 = sshll.u32 [#allocation5], 4
      %s4746 = int_to_ptr.vmem [resolvable:$true] %s4745
      %4751 = dma.vmem_to_hbm [thread:$0]  %s4746, 512, %s13, [#allocation4], 128, 128, 8
    $region61: #{tst_encoder_pallas.1} parent=1 // pred_fallthru
      _
    // Predicated region
    $region62: #{tst_encoder_pallas.1} parent=1 // pred_check
      _
    $region63: #{tst_encoder_pallas.1} parent=1 // pred_check_branch
      %4753 = sbr.rel (0) target = $region65
    $region64: #{tst_encoder_pallas.1} parent=1 // pred_region
      %4754 = dma.done [#allocation4], 512
    $region65: #{tst_encoder_pallas.1} parent=1 // pred_fallthru
      _
    %4755 = vsyncpa [#allocation3], 1
    %4756 = vsyncpa [#allocation4], 1

</llo_original>
